<compile_context>
chip_gen: v6e
topology: v6e:2x2x1
jax: 0.10.0
libtpu: 0.0.40
codegen_flags: <defaults>
</compile_context>

<pallas_src>
import functools
import math

import jax
import jax.numpy as jnp
from jax import lax
from jax.experimental import pallas as pl
from jax.experimental.pallas import tpu as pltpu


def _normalize_2(v):
    if isinstance(v, int):
        return (v, v)
    v = tuple(v)
    if len(v) == 1:
        return (v[0], v[0])
    return (v[0], v[1])


def _pick_plane_tile(p, in_plane_bytes, out_plane_bytes):
    """Planes (N*C) per grid step.

    Biggest block that fits a ~4 MiB per-buffer budget (Pallas double-buffers),
    then shrink to get >=4 pipeline steps as long as blocks stay >= ~512 KiB.
    """
    budget = 4 * 1024 * 1024
    per_plane = max(in_plane_bytes + out_plane_bytes, 1)
    tc = max(1, min(p, budget // per_plane))
    min_block = 512 * 1024
    while tc > 1 and ((p + tc - 1) // tc) < 4 and (tc // 2) * per_plane >= min_block:
        tc //= 2
    return tc


def _maxpool_plane_kernel(x_ref, o_ref, *, kh, kw, sh, sw,
                          top, bottom, left, right, h_out, w_out):
    # x_ref: (TC, H, W) VMEM block  (W on lanes, H on sublanes)
    # o_ref: (TC, H_out, W_out) VMEM block
    x = x_ref[...]                       # native dtype, no f32 upcast
    tc, h, w = x.shape
    dt = x.dtype

    # ---- zero padding (PyTorch F.pad semantics), done in registers ----------
    if left or right:
        parts = []
        if left:
            parts.append(jnp.zeros((tc, h, left), dt))
        parts.append(x)
        if right:
            parts.append(jnp.zeros((tc, h, right), dt))
        x = jnp.concatenate(parts, axis=2)
    w_pad = w + left + right
    if top or bottom:
        parts = []
        if top:
            parts.append(jnp.zeros((tc, top, w_pad), dt))
        parts.append(x)
        if bottom:
            parts.append(jnp.zeros((tc, bottom, w_pad), dt))
        x = jnp.concatenate(parts, axis=1)
    # x: (TC, H_pad, W_pad)

    # ---- horizontal sliding max: kw shifted, contiguous lane slices ---------
    w_sl = (w_out - 1) * sw + 1
    hs = x[:, :, 0:w_sl]
    for dw in range(1, kw):
        hs = jnp.maximum(hs, x[:, :, dw:dw + w_sl])       # (TC, H_pad, W_sl)

    # ---- constant lane-subsampling selector (hoisted out of the row loop) ---
    # ssub[wv, j] == 1 iff wv == j*sw.  A dot with it picks every sw-th lane;
    # it is a pure selection (exact at HIGHEST precision with f32 accumulation)
    # and runs on the MXU, which is otherwise idle in this kernel.
    if sw > 1:
        wi = lax.broadcasted_iota(jnp.int32, (w_sl, w_out), 0)
        wj = lax.broadcasted_iota(jnp.int32, (w_sl, w_out), 1)
        ssub = (wi == wj * sw).astype(dt)

    def pooled_row(i):
        v = hs[:, i * sh, :]
        for dh in range(1, kh):
            v = jnp.maximum(v, hs[:, i * sh + dh, :])      # (TC, W_sl)
        if sw > 1:
            v = jnp.dot(v, ssub, preferred_element_type=jnp.float32,
                        precision=lax.Precision.HIGHEST)   # (TC, W_out), exact
        return v.astype(o_ref.dtype)

    if h_out <= 64:
        # Moderate tile: static unroll, assemble whole block, one dense store.
        rows = [pooled_row(i)[:, None, :] for i in range(h_out)]
        o_ref[...] = jnp.concatenate(rows, axis=1)
    else:
        # Large tile: per-row static stores keep live ranges bounded without
        # dynamic-index control flow.
        for i in range(h_out):
            o_ref[:, i, :] = pooled_row(i)


def maxpool2d_static_same_padding(x_nchw, kernel_size=3, stride=2):
    """Matches MaxPool2dStaticSamePadding(kernel_size, stride).forward(x_nchw)."""
    n, c, h, w = x_nchw.shape
    kh, kw = _normalize_2(kernel_size)
    sh, sw = _normalize_2(stride)

    # Clamp at 0: for kernel < stride the formula can go negative (F.pad would crop).
    extra_h = max(0, (math.ceil(w / sw) - 1) * sw - w + kw)
    extra_v = max(0, (math.ceil(h / sh) - 1) * sh - h + kh)
    left = extra_h // 2
    right = extra_h - left
    top = extra_v // 2
    bottom = extra_v - top

    h_pad, w_pad = h + extra_v, w + extra_h
    h_out = (h_pad - kh) // sh + 1
    w_out = (w_pad - kw) // sw + 1

    p = n * c
    itemsize = jnp.dtype(x_nchw.dtype).itemsize
    tc = _pick_plane_tile(p, h * w * itemsize, h_out * w_out * itemsize)
    grid = (pl.cdiv(p, tc),)                   # partial last block handled by Pallas
    x_planes = x_nchw.reshape(p, h, w)         # free reshape, stays NCHW-native

    block_bytes = tc * (h * w + h_out * w_out) * itemsize
    vmem_limit = max(32 * 1024 * 1024, min(6 * block_bytes, 112 * 1024 * 1024))

    kernel = functools.partial(
        _maxpool_plane_kernel, kh=kh, kw=kw, sh=sh, sw=sw,
        top=top, bottom=bottom, left=left, right=right,
        h_out=h_out, w_out=w_out)

    out_planes = pl.pallas_call(
        kernel,
        out_shape=jax.ShapeDtypeStruct((p, h_out, w_out), x_nchw.dtype),
        grid=grid,
        in_specs=[pl.BlockSpec((tc, h, w), lambda b: (b, 0, 0))],
        out_specs=pl.BlockSpec((tc, h_out, w_out), lambda b: (b, 0, 0)),
        compiler_params=pltpu.CompilerParams(
            dimension_semantics=("parallel",),
            vmem_limit_bytes=int(vmem_limit),
        ),
    )(x_planes)

    return out_planes.reshape(n, c, h_out, w_out)


def _reference(x_nchw, kernel_size=3, stride=2):
    """Pure-JAX reference with identical semantics (zero pad, then max pool)."""
    n, c, h, w = x_nchw.shape
    kh, kw = _normalize_2(kernel_size)
    sh, sw = _normalize_2(stride)
    extra_h = max(0, (math.ceil(w / sw) - 1) * sw - w + kw)
    extra_v = max(0, (math.ceil(h / sh) - 1) * sh - h + kh)
    left = extra_h // 2
    right = extra_h - left
    top = extra_v // 2
    bottom = extra_v - top
    xp = jnp.pad(x_nchw, ((0, 0), (0, 0), (top, bottom), (left, right)))
    init = jnp.array(-jnp.inf, dtype=x_nchw.dtype)
    return lax.reduce_window(xp, init, lax.max,
                             (1, 1, kh, kw), (1, 1, sh, sw), "VALID")


if __name__ == "__main__":
    # MaxPool2dStaticSamePadding(3, 2): kernel_size=3, stride=2 (no learned params).
    key = jax.random.PRNGKey(0)
    x = jax.random.normal(key, (2, 4, 16, 16), dtype=jnp.float32)   # NCHW

    out = maxpool2d_static_same_padding(x, kernel_size=3, stride=2)
    out = jax.block_until_ready(out)

    ref = _reference(x, kernel_size=3, stride=2)
    assert out.shape == ref.shape == (2, 4, 8, 8), out.shape
    assert jnp.allclose(out, ref, atol=1e-6, rtol=1e-6), "mismatch vs reference"

    print("KERNEL_OK")
</pallas_src>

<mosaic_0001>
module attributes {stable_mosaic.version = 11 : i64} {
  func.func @_maxpool_plane_kernel(%arg0: i32, %arg1: memref<8x16x16xf32, #tpu.memory_space<vmem>>, %arg2: memref<8x8x8xf32, #tpu.memory_space<vmem>>) attributes {dimension_semantics = [#tpu.dimension_semantics<parallel>], iteration_bounds = array<i64: 1>, scalar_prefetch = 0 : i64, scratch_operands = 0 : i64, tpu.core_type = #tpu.core_type<tc>, window_params = [{transform_indices = @transform_0, window_bounds = array<i64: 8, 16, 16>}, {transform_indices = @transform_1, window_bounds = array<i64: 8, 8, 8>}]} {
    %c0 = arith.constant 0 : index
    %c0_0 = arith.constant 0 : index
    %c0_1 = arith.constant 0 : index
    %0 = vector.load %arg1[%c0, %c0_0, %c0_1] : memref<8x16x16xf32, #tpu.memory_space<vmem>>, vector<8x16x16xf32>
    %cst = arith.constant 0.000000e+00 : f32
    %1 = vector.broadcast %cst : f32 to vector<8x16x1xf32>
    %2 = tpu.concatenate %0, %1 in 2 : vector<8x16x16xf32>, vector<8x16x1xf32> -> vector<8x16x17xf32>
    %cst_2 = arith.constant 0.000000e+00 : f32
    %3 = vector.broadcast %cst_2 : f32 to vector<8x1x17xf32>
    %4 = tpu.concatenate %2, %3 in 1 : vector<8x16x17xf32>, vector<8x1x17xf32> -> vector<8x17x17xf32>
    %5 = vector.extract_strided_slice %4 {offsets = [0, 0, 0], sizes = [8, 17, 15], strides = [1, 1, 1]} : vector<8x17x17xf32> to vector<8x17x15xf32>
    %6 = vector.extract_strided_slice %4 {offsets = [0, 0, 1], sizes = [8, 17, 15], strides = [1, 1, 1]} : vector<8x17x17xf32> to vector<8x17x15xf32>
    %7 = arith.maximumf %5, %6 : vector<8x17x15xf32>
    %8 = vector.extract_strided_slice %4 {offsets = [0, 0, 2], sizes = [8, 17, 15], strides = [1, 1, 1]} : vector<8x17x17xf32> to vector<8x17x15xf32>
    %9 = arith.maximumf %7, %8 : vector<8x17x15xf32>
    %10 = tpu.iota {dimensions = array<i32: 0>} : vector<15x8xi32>
    %11 = tpu.iota {dimensions = array<i32: 1>} : vector<15x8xi32>
    %c2_i32 = arith.constant 2 : i32
    %12 = vector.broadcast %c2_i32 : i32 to vector<15x8xi32>
    %13 = arith.muli %11, %12 : vector<15x8xi32>
    %14 = arith.cmpi eq, %10, %13 : vector<15x8xi32>
    %15 = arith.extui %14 : vector<15x8xi1> to vector<15x8xi32>
    %16 = arith.sitofp %15 : vector<15x8xi32> to vector<15x8xf32>
    %17 = vector.extract_strided_slice %9 {offsets = [0, 0, 0], sizes = [8, 1, 15], strides = [1, 1, 1]} : vector<8x17x15xf32> to vector<8x1x15xf32>
    %18 = vector.shape_cast %17 : vector<8x1x15xf32> to vector<8x15xf32>
    %19 = vector.extract_strided_slice %9 {offsets = [0, 1, 0], sizes = [8, 1, 15], strides = [1, 1, 1]} : vector<8x17x15xf32> to vector<8x1x15xf32>
    %20 = vector.shape_cast %19 : vector<8x1x15xf32> to vector<8x15xf32>
    %21 = arith.maximumf %18, %20 : vector<8x15xf32>
    %22 = vector.extract_strided_slice %9 {offsets = [0, 2, 0], sizes = [8, 1, 15], strides = [1, 1, 1]} : vector<8x17x15xf32> to vector<8x1x15xf32>
    %23 = vector.shape_cast %22 : vector<8x1x15xf32> to vector<8x15xf32>
    %24 = arith.maximumf %21, %23 : vector<8x15xf32>
    %cst_3 = arith.constant dense<0.000000e+00> : vector<8x8xf32>
    %25 = tpu.matmul %24, %16, %cst_3 {dimension_numbers = #tpu.dot_dimension_numbers<[1], [0], [0], [1], [0, 0, 1, 1], [], []>, precision = #tpu.contract_precision<fp32>} : vector<8x15xf32>, vector<15x8xf32>, vector<8x8xf32> -> vector<8x8xf32>
    %26 = vector.shape_cast %25 : vector<8x8xf32> to vector<8x1x8xf32>
    %27 = vector.extract_strided_slice %9 {offsets = [0, 2, 0], sizes = [8, 1, 15], strides = [1, 1, 1]} : vector<8x17x15xf32> to vector<8x1x15xf32>
    %28 = vector.shape_cast %27 : vector<8x1x15xf32> to vector<8x15xf32>
    %29 = vector.extract_strided_slice %9 {offsets = [0, 3, 0], sizes = [8, 1, 15], strides = [1, 1, 1]} : vector<8x17x15xf32> to vector<8x1x15xf32>
    %30 = vector.shape_cast %29 : vector<8x1x15xf32> to vector<8x15xf32>
    %31 = arith.maximumf %28, %30 : vector<8x15xf32>
    %32 = vector.extract_strided_slice %9 {offsets = [0, 4, 0], sizes = [8, 1, 15], strides = [1, 1, 1]} : vector<8x17x15xf32> to vector<8x1x15xf32>
    %33 = vector.shape_cast %32 : vector<8x1x15xf32> to vector<8x15xf32>
    %34 = arith.maximumf %31, %33 : vector<8x15xf32>
    %cst_4 = arith.constant dense<0.000000e+00> : vector<8x8xf32>
    %35 = tpu.matmul %34, %16, %cst_4 {dimension_numbers = #tpu.dot_dimension_numbers<[1], [0], [0], [1], [0, 0, 1, 1], [], []>, precision = #tpu.contract_precision<fp32>} : vector<8x15xf32>, vector<15x8xf32>, vector<8x8xf32> -> vector<8x8xf32>
    %36 = vector.shape_cast %35 : vector<8x8xf32> to vector<8x1x8xf32>
    %37 = vector.extract_strided_slice %9 {offsets = [0, 4, 0], sizes = [8, 1, 15], strides = [1, 1, 1]} : vector<8x17x15xf32> to vector<8x1x15xf32>
    %38 = vector.shape_cast %37 : vector<8x1x15xf32> to vector<8x15xf32>
    %39 = vector.extract_strided_slice %9 {offsets = [0, 5, 0], sizes = [8, 1, 15], strides = [1, 1, 1]} : vector<8x17x15xf32> to vector<8x1x15xf32>
    %40 = vector.shape_cast %39 : vector<8x1x15xf32> to vector<8x15xf32>
    %41 = arith.maximumf %38, %40 : vector<8x15xf32>
    %42 = vector.extract_strided_slice %9 {offsets = [0, 6, 0], sizes = [8, 1, 15], strides = [1, 1, 1]} : vector<8x17x15xf32> to vector<8x1x15xf32>
    %43 = vector.shape_cast %42 : vector<8x1x15xf32> to vector<8x15xf32>
    %44 = arith.maximumf %41, %43 : vector<8x15xf32>
    %cst_5 = arith.constant dense<0.000000e+00> : vector<8x8xf32>
    %45 = tpu.matmul %44, %16, %cst_5 {dimension_numbers = #tpu.dot_dimension_numbers<[1], [0], [0], [1], [0, 0, 1, 1], [], []>, precision = #tpu.contract_precision<fp32>} : vector<8x15xf32>, vector<15x8xf32>, vector<8x8xf32> -> vector<8x8xf32>
    %46 = vector.shape_cast %45 : vector<8x8xf32> to vector<8x1x8xf32>
    %47 = vector.extract_strided_slice %9 {offsets = [0, 6, 0], sizes = [8, 1, 15], strides = [1, 1, 1]} : vector<8x17x15xf32> to vector<8x1x15xf32>
    %48 = vector.shape_cast %47 : vector<8x1x15xf32> to vector<8x15xf32>
    %49 = vector.extract_strided_slice %9 {offsets = [0, 7, 0], sizes = [8, 1, 15], strides = [1, 1, 1]} : vector<8x17x15xf32> to vector<8x1x15xf32>
    %50 = vector.shape_cast %49 : vector<8x1x15xf32> to vector<8x15xf32>
    %51 = arith.maximumf %48, %50 : vector<8x15xf32>
    %52 = vector.extract_strided_slice %9 {offsets = [0, 8, 0], sizes = [8, 1, 15], strides = [1, 1, 1]} : vector<8x17x15xf32> to vector<8x1x15xf32>
    %53 = vector.shape_cast %52 : vector<8x1x15xf32> to vector<8x15xf32>
    %54 = arith.maximumf %51, %53 : vector<8x15xf32>
    %cst_6 = arith.constant dense<0.000000e+00> : vector<8x8xf32>
    %55 = tpu.matmul %54, %16, %cst_6 {dimension_numbers = #tpu.dot_dimension_numbers<[1], [0], [0], [1], [0, 0, 1, 1], [], []>, precision = #tpu.contract_precision<fp32>} : vector<8x15xf32>, vector<15x8xf32>, vector<8x8xf32> -> vector<8x8xf32>
    %56 = vector.shape_cast %55 : vector<8x8xf32> to vector<8x1x8xf32>
    %57 = vector.extract_strided_slice %9 {offsets = [0, 8, 0], sizes = [8, 1, 15], strides = [1, 1, 1]} : vector<8x17x15xf32> to vector<8x1x15xf32>
    %58 = vector.shape_cast %57 : vector<8x1x15xf32> to vector<8x15xf32>
    %59 = vector.extract_strided_slice %9 {offsets = [0, 9, 0], sizes = [8, 1, 15], strides = [1, 1, 1]} : vector<8x17x15xf32> to vector<8x1x15xf32>
    %60 = vector.shape_cast %59 : vector<8x1x15xf32> to vector<8x15xf32>
    %61 = arith.maximumf %58, %60 : vector<8x15xf32>
    %62 = vector.extract_strided_slice %9 {offsets = [0, 10, 0], sizes = [8, 1, 15], strides = [1, 1, 1]} : vector<8x17x15xf32> to vector<8x1x15xf32>
    %63 = vector.shape_cast %62 : vector<8x1x15xf32> to vector<8x15xf32>
    %64 = arith.maximumf %61, %63 : vector<8x15xf32>
    %cst_7 = arith.constant dense<0.000000e+00> : vector<8x8xf32>
    %65 = tpu.matmul %64, %16, %cst_7 {dimension_numbers = #tpu.dot_dimension_numbers<[1], [0], [0], [1], [0, 0, 1, 1], [], []>, precision = #tpu.contract_precision<fp32>} : vector<8x15xf32>, vector<15x8xf32>, vector<8x8xf32> -> vector<8x8xf32>
    %66 = vector.shape_cast %65 : vector<8x8xf32> to vector<8x1x8xf32>
    %67 = vector.extract_strided_slice %9 {offsets = [0, 10, 0], sizes = [8, 1, 15], strides = [1, 1, 1]} : vector<8x17x15xf32> to vector<8x1x15xf32>
    %68 = vector.shape_cast %67 : vector<8x1x15xf32> to vector<8x15xf32>
    %69 = vector.extract_strided_slice %9 {offsets = [0, 11, 0], sizes = [8, 1, 15], strides = [1, 1, 1]} : vector<8x17x15xf32> to vector<8x1x15xf32>
    %70 = vector.shape_cast %69 : vector<8x1x15xf32> to vector<8x15xf32>
    %71 = arith.maximumf %68, %70 : vector<8x15xf32>
    %72 = vector.extract_strided_slice %9 {offsets = [0, 12, 0], sizes = [8, 1, 15], strides = [1, 1, 1]} : vector<8x17x15xf32> to vector<8x1x15xf32>
    %73 = vector.shape_cast %72 : vector<8x1x15xf32> to vector<8x15xf32>
    %74 = arith.maximumf %71, %73 : vector<8x15xf32>
    %cst_8 = arith.constant dense<0.000000e+00> : vector<8x8xf32>
    %75 = tpu.matmul %74, %16, %cst_8 {dimension_numbers = #tpu.dot_dimension_numbers<[1], [0], [0], [1], [0, 0, 1, 1], [], []>, precision = #tpu.contract_precision<fp32>} : vector<8x15xf32>, vector<15x8xf32>, vector<8x8xf32> -> vector<8x8xf32>
    %76 = vector.shape_cast %75 : vector<8x8xf32> to vector<8x1x8xf32>
    %77 = vector.extract_strided_slice %9 {offsets = [0, 12, 0], sizes = [8, 1, 15], strides = [1, 1, 1]} : vector<8x17x15xf32> to vector<8x1x15xf32>
    %78 = vector.shape_cast %77 : vector<8x1x15xf32> to vector<8x15xf32>
    %79 = vector.extract_strided_slice %9 {offsets = [0, 13, 0], sizes = [8, 1, 15], strides = [1, 1, 1]} : vector<8x17x15xf32> to vector<8x1x15xf32>
    %80 = vector.shape_cast %79 : vector<8x1x15xf32> to vector<8x15xf32>
    %81 = arith.maximumf %78, %80 : vector<8x15xf32>
    %82 = vector.extract_strided_slice %9 {offsets = [0, 14, 0], sizes = [8, 1, 15], strides = [1, 1, 1]} : vector<8x17x15xf32> to vector<8x1x15xf32>
    %83 = vector.shape_cast %82 : vector<8x1x15xf32> to vector<8x15xf32>
    %84 = arith.maximumf %81, %83 : vector<8x15xf32>
    %cst_9 = arith.constant dense<0.000000e+00> : vector<8x8xf32>
    %85 = tpu.matmul %84, %16, %cst_9 {dimension_numbers = #tpu.dot_dimension_numbers<[1], [0], [0], [1], [0, 0, 1, 1], [], []>, precision = #tpu.contract_precision<fp32>} : vector<8x15xf32>, vector<15x8xf32>, vector<8x8xf32> -> vector<8x8xf32>
    %86 = vector.shape_cast %85 : vector<8x8xf32> to vector<8x1x8xf32>
    %87 = vector.extract_strided_slice %9 {offsets = [0, 14, 0], sizes = [8, 1, 15], strides = [1, 1, 1]} : vector<8x17x15xf32> to vector<8x1x15xf32>
    %88 = vector.shape_cast %87 : vector<8x1x15xf32> to vector<8x15xf32>
    %89 = vector.extract_strided_slice %9 {offsets = [0, 15, 0], sizes = [8, 1, 15], strides = [1, 1, 1]} : vector<8x17x15xf32> to vector<8x1x15xf32>
    %90 = vector.shape_cast %89 : vector<8x1x15xf32> to vector<8x15xf32>
    %91 = arith.maximumf %88, %90 : vector<8x15xf32>
    %92 = vector.extract_strided_slice %9 {offsets = [0, 16, 0], sizes = [8, 1, 15], strides = [1, 1, 1]} : vector<8x17x15xf32> to vector<8x1x15xf32>
    %93 = vector.shape_cast %92 : vector<8x1x15xf32> to vector<8x15xf32>
    %94 = arith.maximumf %91, %93 : vector<8x15xf32>
    %cst_10 = arith.constant dense<0.000000e+00> : vector<8x8xf32>
    %95 = tpu.matmul %94, %16, %cst_10 {dimension_numbers = #tpu.dot_dimension_numbers<[1], [0], [0], [1], [0, 0, 1, 1], [], []>, precision = #tpu.contract_precision<fp32>} : vector<8x15xf32>, vector<15x8xf32>, vector<8x8xf32> -> vector<8x8xf32>
    %96 = vector.shape_cast %95 : vector<8x8xf32> to vector<8x1x8xf32>
    %97 = tpu.concatenate %26, %36, %46, %56, %66, %76, %86, %96 in 1 : vector<8x1x8xf32>, vector<8x1x8xf32>, vector<8x1x8xf32>, vector<8x1x8xf32>, vector<8x1x8xf32>, vector<8x1x8xf32>, vector<8x1x8xf32>, vector<8x1x8xf32> -> vector<8x8x8xf32>
    %c0_11 = arith.constant 0 : index
    %c0_12 = arith.constant 0 : index
    %c0_13 = arith.constant 0 : index
    %98 = vector.load %arg2[%c0_11, %c0_12, %c0_13] : memref<8x8x8xf32, #tpu.memory_space<vmem>>, vector<8x8x8xf32>
    tpu.vector_store %arg2[%c0_11, %c0_12, %c0_13], %97 {strides = array<i32>} : memref<8x8x8xf32, #tpu.memory_space<vmem>>, vector<8x8x8xf32>,
    return
  }
  func.func @transform_0(%arg0: i32) -> (i32, i32, i32) {
    %c0_i32 = arith.constant 0 : i32
    %c0_i32_0 = arith.constant 0 : i32
    %c0_i32_1 = arith.constant 0 : i32
    return %arg0, %c0_i32, %c0_i32_0 : i32, i32, i32
  }
  func.func @transform_1(%arg0: i32) -> (i32, i32, i32) {
    %c0_i32 = arith.constant 0 : i32
    %c0_i32_0 = arith.constant 0 : i32
    %c0_i32_1 = arith.constant 0 : i32
    return %arg0, %c0_i32, %c0_i32_0 : i32, i32, i32
  }
}

</mosaic_0001>

<llo_original>
// kernel: tpu_custom_call.1
$region0: #{tpu_custom_call.1}
  #allocation0 [shape = 'u32[]', space=smem, size = 0x4, offset = 0x4, fixed_abs, tag = 'smem constant byte address 0x4 - core index']
  #allocation1 [shape = 'u32[144,128]{1,0:T(1,128)}', space=vmem, size = 0x12000, scoped, tag = 'internal scratch']
  %s0 = inlined_call_operand.hbm [shape: f32[8,16,16], index: 0, kind: input, shape index: {}]
  %s1 = inlined_call_operand.hbm [shape: f32[8,8,8], index: 1, kind: output, shape index: {}]
  %s2 = sld [smem:[#allocation0]]
  $region18: #{tpu_custom_call.1} parent=0
    _
  %s4 = ssub.s32 1, %s2
  %s5 = scalar_select 0, %s4, %s2
  $region1: #{tpu_custom_call.1} parent=0
    #allocation2 [shape = 'u8[65536]{0}', space=vmem, size = 0x10000, scoped, tag = 'input window, operand 0, single buffered']
    #allocation3 [shape = 's32[1]{0}', space=sflag, size = 0x4, scoped, tag = 'scoped memory for tpu_custom_call.1']
    #allocation4 [shape = 's32[1]{0}', space=sflag, size = 0x4, scoped, tag = 'scoped memory for tpu_custom_call.1']
    #allocation5 [shape = 'u8[32768]{0}', space=vmem, size = 0x8000, scoped, tag = 'output window, operand 0, single buffered']
    %6 = vsyncpa [#allocation3], 0
    %7 = vsyncpa [#allocation4], 0
    // Predicated region
    $region2: #{tpu_custom_call.1} parent=1 // pred_check
      _
    $region3: #{tpu_custom_call.1} parent=1 // pred_check_branch
      %9 = sbr.rel (0) target = $region5
    $region4: #{tpu_custom_call.1} parent=1 // pred_region
      %s11 = ssub.s32 2048, 2048
      %12 = vsyncadd [#allocation3], %s11
      %s13 = sshll.u32 [#allocation2], 4
      %s14 = int_to_ptr.vmem [resolvable:$true] %s13
      %19 = dma.hbm_to_vmem [thread:$0]  %s0, 2048, %s14, [#allocation3], 128, 128, 8
    $region5: #{tpu_custom_call.1} parent=1 // pred_fallthru
      _
    // Predicated region
    $region6: #{tpu_custom_call.1} parent=1 // pred_check
      _
    $region7: #{tpu_custom_call.1} parent=1 // pred_check_branch
      %21 = sbr.rel (0) target = $region9
    $region8: #{tpu_custom_call.1} parent=1 // pred_region
      %22 = dma.done [#allocation3], 2048
    $region9: #{tpu_custom_call.1} parent=1 // pred_fallthru
      _
    %v23 = vld [vmem:[#allocation2] sm:$0xff]
    %v24 = vld [vmem:[#allocation2 + $0x8] sm:$0xff]
    %v25 = vld [vmem:[#allocation2 + $0x10] sm:$0xff]
    %v26 = vld [vmem:[#allocation2 + $0x18] sm:$0xff]
    %v27 = vld [vmem:[#allocation2 + $0x20] sm:$0xff]
    %v28 = vld [vmem:[#allocation2 + $0x28] sm:$0xff]
    %v29 = vld [vmem:[#allocation2 + $0x30] sm:$0xff]
    %v30 = vld [vmem:[#allocation2 + $0x38] sm:$0xff]
    %v31 = vld [vmem:[#allocation2 + $0x40] sm:$0xff]
    %v32 = vld [vmem:[#allocation2 + $0x48] sm:$0xff]
    %v33 = vld [vmem:[#allocation2 + $0x50] sm:$0xff]
    %v34 = vld [vmem:[#allocation2 + $0x58] sm:$0xff]
    %v35 = vld [vmem:[#allocation2 + $0x60] sm:$0xff]
    %v36 = vld [vmem:[#allocation2 + $0x68] sm:$0xff]
    %v37 = vld [vmem:[#allocation2 + $0x70] sm:$0xff]
    %v38 = vld [vmem:[#allocation2 + $0x78] sm:$0xff]
    %vm39 = vcmask 130048
    %v40 = vsel %vm39, %v23, 0.0
    %v41 = vsel %vm39, %v24, 0.0
    %v42 = vsel %vm39, %v25, 0.0
    %v43 = vsel %vm39, %v26, 0.0
    %v44 = vsel %vm39, %v27, 0.0
    %v45 = vsel %vm39, %v28, 0.0
    %v46 = vsel %vm39, %v29, 0.0
    %v47 = vsel %vm39, %v30, 0.0
    %v48 = vsel %vm39, %v31, 0.0
    %v49 = vsel %vm39, %v32, 0.0
    %v50 = vsel %vm39, %v33, 0.0
    %v51 = vsel %vm39, %v34, 0.0
    %v52 = vsel %vm39, %v35, 0.0
    %v53 = vsel %vm39, %v36, 0.0
    %v54 = vsel %vm39, %v37, 0.0
    %v55 = vsel %vm39, %v38, 0.0
    %73 = vrot.lane.b32.xlu0 %v40, 127
    %v74 = vpop.permute.xlu0 %73
    %75 = vrot.lane.b32.xlu0 %v41, 127
    %v76 = vpop.permute.xlu0 %75
    %77 = vrot.lane.b32.xlu0 0.0, 127
    %v78 = vpop.permute.xlu0 %77
    %79 = vrot.lane.b32.xlu0 %v42, 127
    %v80 = vpop.permute.xlu0 %79
    %81 = vrot.lane.b32.xlu0 %v43, 127
    %v82 = vpop.permute.xlu0 %81
    %83 = vrot.lane.b32.xlu0 %v44, 127
    %v84 = vpop.permute.xlu0 %83
    %85 = vrot.lane.b32.xlu0 %v45, 127
    %v86 = vpop.permute.xlu0 %85
    %87 = vrot.lane.b32.xlu0 %v46, 127
    %v88 = vpop.permute.xlu0 %87
    %89 = vrot.lane.b32.xlu0 %v47, 127
    %v90 = vpop.permute.xlu0 %89
    %91 = vrot.lane.b32.xlu0 %v48, 127
    %v92 = vpop.permute.xlu0 %91
    %93 = vrot.lane.b32.xlu0 %v49, 127
    %v94 = vpop.permute.xlu0 %93
    %95 = vrot.lane.b32.xlu0 %v50, 127
    %v96 = vpop.permute.xlu0 %95
    %97 = vrot.lane.b32.xlu0 %v51, 127
    %v98 = vpop.permute.xlu0 %97
    %99 = vrot.lane.b32.xlu0 %v52, 127
    %v100 = vpop.permute.xlu0 %99
    %101 = vrot.lane.b32.xlu0 %v53, 127
    %v102 = vpop.permute.xlu0 %101
    %103 = vrot.lane.b32.xlu0 %v54, 127
    %v104 = vpop.permute.xlu0 %103
    %105 = vrot.lane.b32.xlu0 %v55, 127
    %v106 = vpop.permute.xlu0 %105
    %v124 = vmax.f32 %v40, %v74
    %v125 = vmax.f32 %v41, %v76
    %v126 = vmax.f32 %v78, 0.0
    %v127 = vmax.f32 %v42, %v80
    %v128 = vmax.f32 %v43, %v82
    %v129 = vmax.f32 %v44, %v84
    %v130 = vmax.f32 %v45, %v86
    %v131 = vmax.f32 %v46, %v88
    %v132 = vmax.f32 %v47, %v90
    %v133 = vmax.f32 %v48, %v92
    %v134 = vmax.f32 %v49, %v94
    %v135 = vmax.f32 %v50, %v96
    %v136 = vmax.f32 %v51, %v98
    %v137 = vmax.f32 %v52, %v100
    %v138 = vmax.f32 %v53, %v102
    %v139 = vmax.f32 %v54, %v104
    %v140 = vmax.f32 %v55, %v106
    %141 = vrot.lane.b32.xlu0 %v40, 126
    %v142 = vpop.permute.xlu0 %141
    %143 = vrot.lane.b32.xlu0 %v41, 126
    %v144 = vpop.permute.xlu0 %143
    %145 = vrot.lane.b32.xlu0 0.0, 126
    %v146 = vpop.permute.xlu0 %145
    %147 = vrot.lane.b32.xlu0 %v42, 126
    %v148 = vpop.permute.xlu0 %147
    %149 = vrot.lane.b32.xlu0 %v43, 126
    %v150 = vpop.permute.xlu0 %149
    %151 = vrot.lane.b32.xlu0 %v44, 126
    %v152 = vpop.permute.xlu0 %151
    %153 = vrot.lane.b32.xlu0 %v45, 126
    %v154 = vpop.permute.xlu0 %153
    %155 = vrot.lane.b32.xlu0 %v46, 126
    %v156 = vpop.permute.xlu0 %155
    %157 = vrot.lane.b32.xlu0 %v47, 126
    %v158 = vpop.permute.xlu0 %157
    %159 = vrot.lane.b32.xlu0 %v48, 126
    %v160 = vpop.permute.xlu0 %159
    %161 = vrot.lane.b32.xlu0 %v49, 126
    %v162 = vpop.permute.xlu0 %161
    %163 = vrot.lane.b32.xlu0 %v50, 126
    %v164 = vpop.permute.xlu0 %163
    %165 = vrot.lane.b32.xlu0 %v51, 126
    %v166 = vpop.permute.xlu0 %165
    %167 = vrot.lane.b32.xlu0 %v52, 126
    %v168 = vpop.permute.xlu0 %167
    %169 = vrot.lane.b32.xlu0 %v53, 126
    %v170 = vpop.permute.xlu0 %169
    %171 = vrot.lane.b32.xlu0 %v54, 126
    %v172 = vpop.permute.xlu0 %171
    %173 = vrot.lane.b32.xlu0 %v55, 126
    %v174 = vpop.permute.xlu0 %173
    %v192 = vmax.f32 %v124, %v142
    %v193 = vmax.f32 %v125, %v144
    %v194 = vmax.f32 %v126, %v146
    %v195 = vmax.f32 %v127, %v148
    %v196 = vmax.f32 %v128, %v150
    %v197 = vmax.f32 %v129, %v152
    %v198 = vmax.f32 %v130, %v154
    %v199 = vmax.f32 %v131, %v156
    %v200 = vmax.f32 %v132, %v158
    %v201 = vmax.f32 %v133, %v160
    %v202 = vmax.f32 %v134, %v162
    %v203 = vmax.f32 %v135, %v164
    %v204 = vmax.f32 %v136, %v166
    %v205 = vmax.f32 %v137, %v168
    %v206 = vmax.f32 %v138, %v170
    %v207 = vmax.f32 %v139, %v172
    %v208 = vmax.f32 %v140, %v174
    %v209 = vlaneseq
    %v210 = vshrl.u32 %v209, 7
    %v211 = vadd.s32 %v210, 8
    %v212 = vlaneseq
    %v213 = vand.u32 %v212, 127
    %v214 = vmul.u32 %v213, 2
    %vm215 = vcmp.eq.s32.totalorder %v210, %v214
    %vm216 = vcmp.eq.s32.totalorder %v211, %v214
    %v217 = vsel %vm215, 1, 0
    %v218 = vsel %vm216, 1, 0
    %v219 = vcvt.s32.f32 %v217
    %v220 = vcvt.s32.f32 %v218
    %v229 = vrot.slane %v192, 1
    %v230 = vrot.slane %v195, 1
    %v231 = vrot.slane %v197, 1
    %v232 = vrot.slane %v199, 1
    %v233 = vrot.slane %v201, 1
    %v234 = vrot.slane %v203, 1
    %v235 = vrot.slane %v205, 1
    %v236 = vrot.slane %v207, 1
    %v245 = vmax.f32 %v192, %v229
    %v246 = vmax.f32 %v195, %v230
    %v247 = vmax.f32 %v197, %v231
    %v248 = vmax.f32 %v199, %v232
    %v249 = vmax.f32 %v201, %v233
    %v250 = vmax.f32 %v203, %v234
    %v251 = vmax.f32 %v205, %v235
    %v252 = vmax.f32 %v207, %v236
    %v253 = vrot.slane %v192, 2
    %v254 = vrot.slane %v195, 2
    %v255 = vrot.slane %v197, 2
    %v256 = vrot.slane %v199, 2
    %v257 = vrot.slane %v201, 2
    %v258 = vrot.slane %v203, 2
    %v259 = vrot.slane %v205, 2
    %v260 = vrot.slane %v207, 2
    %v269 = vmax.f32 %v245, %v253
    %v270 = vmax.f32 %v246, %v254
    %v271 = vmax.f32 %v247, %v255
    %v272 = vmax.f32 %v248, %v256
    %v273 = vmax.f32 %v249, %v257
    %v274 = vmax.f32 %v250, %v258
    %v275 = vmax.f32 %v251, %v259
    %v276 = vmax.f32 %v252, %v260
    %v285 = vrot.slane %v270, 7
    %vm286 = vcmask 1041409
    %v287 = vsel %vm286, %v285, %v269
    %v288 = vrot.slane %v271, 6
    %vm289 = vcmask 1042434
    %v290 = vsel %vm289, %v288, %v287
    %v291 = vrot.slane %v272, 5
    %vm292 = vcmask 1043459
    %v293 = vsel %vm292, %v291, %v290
    %v294 = vrot.slane %v273, 4
    %vm295 = vcmask 1044484
    %v296 = vsel %vm295, %v294, %v293
    %v297 = vrot.slane %v274, 3
    %vm298 = vcmask 1045509
    %v299 = vsel %vm298, %v297, %v296
    %v300 = vrot.slane %v275, 2
    %vm301 = vcmask 1046534
    %v302 = vsel %vm301, %v300, %v299
    %v303 = vrot.slane %v276, 1
    %vm304 = vcmask 1047559
    %v305 = vsel %vm304, %v303, %v302
    %vm306 = vcmask 121856
    %v307 = vsel %vm306, %v305, 0
    %vm309 = vcmask 1046528
    %v311 = vsel %vm309, %v220, 0
    %313 = vmatprep.subr.mxu0 0.0
    %314 = vmatpush1.msra.mxu0 0.0
    %315 = vmatprep.subr.mxu0 0.0
    %316 = vmatpush1.msra.mxu0 0.0
    %317 = vmatprep.subr.mxu0 0.0
    %318 = vmatpush1.msra.mxu0 0.0
    %319 = vmatprep.subr.mxu0 0.0
    %320 = vmatpush1.msra.mxu0 0.0
    %321 = vmatprep.subr.mxu0 0.0
    %322 = vmatpush1.msra.mxu0 0.0
    %323 = vmatprep.subr.mxu0 0.0
    %324 = vmatpush1.msra.mxu0 0.0
    %325 = vmatprep.subr.mxu0 0.0
    %326 = vmatpush1.msra.mxu0 0.0
    %327 = vmatprep.subr.mxu0 0.0
    %328 = vmatpush1.msra.mxu0 0.0
    %329 = vmatprep.subr.mxu0 0.0
    %330 = vmatpush1.msra.mxu0 0.0
    %331 = vmatprep.subr.mxu0 0.0
    %332 = vmatpush1.msra.mxu0 0.0
    %333 = vmatprep.subr.mxu0 0.0
    %334 = vmatpush1.msra.mxu0 0.0
    %335 = vmatprep.subr.mxu0 0.0
    %336 = vmatpush1.msra.mxu0 0.0
    %337 = vmatprep.subr.mxu0 0.0
    %338 = vmatpush1.msra.mxu0 0.0
    %339 = vmatprep.subr.mxu0 0.0
    %340 = vmatpush1.msra.mxu0 0.0
    %341 = vmatprep.subr.mxu0 0.0
    %v342 = vand.u32 %v311, 4294901760
    %343 = vmatpush1.msra.mxu0 %v342
    %344 = vmatprep.subr.mxu0 0.0
    %v345 = vand.u32 %v219, 4294901760
    %346 = vmatpush1.msra.mxu0 %v345
    %347 = vmatprep.subr.mxu0 0.0
    %348 = vmatpush2.msra.mxu0 0.0
    %349 = vmatprep.subr.mxu0 0.0
    %350 = vmatpush2.msra.mxu0 0.0
    %351 = vmatprep.subr.mxu0 0.0
    %352 = vmatpush2.msra.mxu0 0.0
    %353 = vmatprep.subr.mxu0 0.0
    %354 = vmatpush2.msra.mxu0 0.0
    %355 = vmatprep.subr.mxu0 0.0
    %356 = vmatpush2.msra.mxu0 0.0
    %357 = vmatprep.subr.mxu0 0.0
    %358 = vmatpush2.msra.mxu0 0.0
    %359 = vmatprep.subr.mxu0 0.0
    %360 = vmatpush2.msra.mxu0 0.0
    %361 = vmatprep.subr.mxu0 0.0
    %362 = vmatpush2.msra.mxu0 0.0
    %363 = vmatprep.subr.mxu0 0.0
    %364 = vmatpush2.msra.mxu0 0.0
    %365 = vmatprep.subr.mxu0 0.0
    %366 = vmatpush2.msra.mxu0 0.0
    %367 = vmatprep.subr.mxu0 0.0
    %368 = vmatpush2.msra.mxu0 0.0
    %369 = vmatprep.subr.mxu0 0.0
    %370 = vmatpush2.msra.mxu0 0.0
    %371 = vmatprep.subr.mxu0 0.0
    %372 = vmatpush2.msra.mxu0 0.0
    %373 = vmatprep.subr.mxu0 0.0
    %374 = vmatpush2.msra.mxu0 0.0
    %375 = vmatprep.subr.mxu0 0.0
    %376 = vmatpush2.msra.mxu0 0.0
    %377 = vmatprep.subr.mxu0 0.0
    %378 = vmatpush2.msra.mxu0 0.0
    %379 = vmatprep.mubr.f32.mxu0 0.0
    %v380 = vand.u32 %v307, 4294901760
    %v381 = vsub.f32 %v307, %v380
    %v382 = vand.u32 %v381, 4294901760
    %v383 = vsub.f32 %v381, %v382
    %v384 = vand.u32 %v383, 4294901760
    %385 = vmatmul.mubr.f32.gmra.mxu0 %v384
    %v386 = vpop.f32.mrf.mxu0
    %v387 = vadd.f32 0.0, %v386
    %v388 = vpop.f32.mrf.mxu0
    %389 = vdwg.mxu0
    %390 = vmatprep.subr.mxu0 0.0
    %391 = vmatpush1.msra.mxu0 0.0
    %392 = vmatprep.subr.mxu0 0.0
    %393 = vmatpush1.msra.mxu0 0.0
    %394 = vmatprep.subr.mxu0 0.0
    %395 = vmatpush1.msra.mxu0 0.0
    %396 = vmatprep.subr.mxu0 0.0
    %397 = vmatpush1.msra.mxu0 0.0
    %398 = vmatprep.subr.mxu0 0.0
    %399 = vmatpush1.msra.mxu0 0.0
    %400 = vmatprep.subr.mxu0 0.0
    %401 = vmatpush1.msra.mxu0 0.0
    %402 = vmatprep.subr.mxu0 0.0
    %403 = vmatpush1.msra.mxu0 0.0
    %404 = vmatprep.subr.mxu0 0.0
    %405 = vmatpush1.msra.mxu0 0.0
    %406 = vmatprep.subr.mxu0 0.0
    %407 = vmatpush1.msra.mxu0 0.0
    %408 = vmatprep.subr.mxu0 0.0
    %409 = vmatpush1.msra.mxu0 0.0
    %410 = vmatprep.subr.mxu0 0.0
    %411 = vmatpush1.msra.mxu0 0.0
    %412 = vmatprep.subr.mxu0 0.0
    %413 = vmatpush1.msra.mxu0 0.0
    %414 = vmatprep.subr.mxu0 0.0
    %415 = vmatpush1.msra.mxu0 0.0
    %416 = vmatprep.subr.mxu0 0.0
    %417 = vmatpush1.msra.mxu0 0.0
    %418 = vmatprep.subr.mxu0 0.0
    %v419 = vand.u32 %v311, 4294901760
    %v420 = vsub.f32 %v311, %v419
    %v421 = vand.u32 %v420, 4294901760
    %v422 = vsub.f32 %v420, %v421
    %v423 = vand.u32 %v422, 4294901760
    %424 = vmatpush1.msra.mxu0 %v423
    %425 = vmatprep.subr.mxu0 0.0
    %v426 = vand.u32 %v219, 4294901760
    %v427 = vsub.f32 %v219, %v426
    %v428 = vand.u32 %v427, 4294901760
    %v429 = vsub.f32 %v427, %v428
    %v430 = vand.u32 %v429, 4294901760
    %431 = vmatpush1.msra.mxu0 %v430
    %432 = vmatprep.subr.mxu0 0.0
    %433 = vmatpush2.msra.mxu0 0.0
    %434 = vmatprep.subr.mxu0 0.0
    %435 = vmatpush2.msra.mxu0 0.0
    %436 = vmatprep.subr.mxu0 0.0
    %437 = vmatpush2.msra.mxu0 0.0
    %438 = vmatprep.subr.mxu0 0.0
    %439 = vmatpush2.msra.mxu0 0.0
    %440 = vmatprep.subr.mxu0 0.0
    %441 = vmatpush2.msra.mxu0 0.0
    %442 = vmatprep.subr.mxu0 0.0
    %443 = vmatpush2.msra.mxu0 0.0
    %444 = vmatprep.subr.mxu0 0.0
    %445 = vmatpush2.msra.mxu0 0.0
    %446 = vmatprep.subr.mxu0 0.0
    %447 = vmatpush2.msra.mxu0 0.0
    %448 = vmatprep.subr.mxu0 0.0
    %449 = vmatpush2.msra.mxu0 0.0
    %450 = vmatprep.subr.mxu0 0.0
    %451 = vmatpush2.msra.mxu0 0.0
    %452 = vmatprep.subr.mxu0 0.0
    %453 = vmatpush2.msra.mxu0 0.0
    %454 = vmatprep.subr.mxu0 0.0
    %455 = vmatpush2.msra.mxu0 0.0
    %456 = vmatprep.subr.mxu0 0.0
    %457 = vmatpush2.msra.mxu0 0.0
    %458 = vmatprep.subr.mxu0 0.0
    %459 = vmatpush2.msra.mxu0 0.0
    %460 = vmatprep.subr.mxu0 0.0
    %461 = vmatpush2.msra.mxu0 0.0
    %462 = vmatprep.subr.mxu0 0.0
    %463 = vmatpush2.msra.mxu0 0.0
    %464 = vmatprep.mubr.f32.mxu0 0.0
    %v465 = vand.u32 %v307, 4294901760
    %466 = vmatmul.mubr.f32.gmra.mxu0 %v465
    %v467 = vpop.f32.mrf.mxu0
    %v468 = vadd.f32 %v387, %v467
    %v469 = vpop.f32.mrf.mxu0
    %470 = vdwg.mxu0
    %471 = vmatprep.subr.mxu0 0.0
    %472 = vmatpush1.msra.mxu0 0.0
    %473 = vmatprep.subr.mxu0 0.0
    %474 = vmatpush1.msra.mxu0 0.0
    %475 = vmatprep.subr.mxu0 0.0
    %476 = vmatpush1.msra.mxu0 0.0
    %477 = vmatprep.subr.mxu0 0.0
    %478 = vmatpush1.msra.mxu0 0.0
    %479 = vmatprep.subr.mxu0 0.0
    %480 = vmatpush1.msra.mxu0 0.0
    %481 = vmatprep.subr.mxu0 0.0
    %482 = vmatpush1.msra.mxu0 0.0
    %483 = vmatprep.subr.mxu0 0.0
    %484 = vmatpush1.msra.mxu0 0.0
    %485 = vmatprep.subr.mxu0 0.0
    %486 = vmatpush1.msra.mxu0 0.0
    %487 = vmatprep.subr.mxu0 0.0
    %488 = vmatpush1.msra.mxu0 0.0
    %489 = vmatprep.subr.mxu0 0.0
    %490 = vmatpush1.msra.mxu0 0.0
    %491 = vmatprep.subr.mxu0 0.0
    %492 = vmatpush1.msra.mxu0 0.0
    %493 = vmatprep.subr.mxu0 0.0
    %494 = vmatpush1.msra.mxu0 0.0
    %495 = vmatprep.subr.mxu0 0.0
    %496 = vmatpush1.msra.mxu0 0.0
    %497 = vmatprep.subr.mxu0 0.0
    %498 = vmatpush1.msra.mxu0 0.0
    %499 = vmatprep.subr.mxu0 0.0
    %v500 = vand.u32 %v311, 4294901760
    %v501 = vsub.f32 %v311, %v500
    %502 = vmatpush1.msra.mxu0 %v501
    %503 = vmatprep.subr.mxu0 0.0
    %v504 = vand.u32 %v219, 4294901760
    %v505 = vsub.f32 %v219, %v504
    %506 = vmatpush1.msra.mxu0 %v505
    %507 = vmatprep.subr.mxu0 0.0
    %508 = vmatpush2.msra.mxu0 0.0
    %509 = vmatprep.subr.mxu0 0.0
    %510 = vmatpush2.msra.mxu0 0.0
    %511 = vmatprep.subr.mxu0 0.0
    %512 = vmatpush2.msra.mxu0 0.0
    %513 = vmatprep.subr.mxu0 0.0
    %514 = vmatpush2.msra.mxu0 0.0
    %515 = vmatprep.subr.mxu0 0.0
    %516 = vmatpush2.msra.mxu0 0.0
    %517 = vmatprep.subr.mxu0 0.0
    %518 = vmatpush2.msra.mxu0 0.0
    %519 = vmatprep.subr.mxu0 0.0
    %520 = vmatpush2.msra.mxu0 0.0
    %521 = vmatprep.subr.mxu0 0.0
    %522 = vmatpush2.msra.mxu0 0.0
    %523 = vmatprep.subr.mxu0 0.0
    %524 = vmatpush2.msra.mxu0 0.0
    %525 = vmatprep.subr.mxu0 0.0
    %526 = vmatpush2.msra.mxu0 0.0
    %527 = vmatprep.subr.mxu0 0.0
    %528 = vmatpush2.msra.mxu0 0.0
    %529 = vmatprep.subr.mxu0 0.0
    %530 = vmatpush2.msra.mxu0 0.0
    %531 = vmatprep.subr.mxu0 0.0
    %532 = vmatpush2.msra.mxu0 0.0
    %533 = vmatprep.subr.mxu0 0.0
    %534 = vmatpush2.msra.mxu0 0.0
    %535 = vmatprep.subr.mxu0 0.0
    %536 = vmatpush2.msra.mxu0 0.0
    %537 = vmatprep.subr.mxu0 0.0
    %538 = vmatpush2.msra.mxu0 0.0
    %539 = vmatprep.mubr.f32.mxu0 0.0
    %v540 = vand.u32 %v307, 4294901760
    %v541 = vsub.f32 %v307, %v540
    %542 = vmatmul.mubr.f32.gmra.mxu0 %v541
    %v543 = vpop.f32.mrf.mxu0
    %v544 = vadd.f32 %v468, %v543
    %v545 = vpop.f32.mrf.mxu0
    %546 = vdwg.mxu0
    %547 = vmatprep.subr.mxu0 0.0
    %548 = vmatpush1.msra.mxu0 0.0
    %549 = vmatprep.subr.mxu0 0.0
    %550 = vmatpush1.msra.mxu0 0.0
    %551 = vmatprep.subr.mxu0 0.0
    %552 = vmatpush1.msra.mxu0 0.0
    %553 = vmatprep.subr.mxu0 0.0
    %554 = vmatpush1.msra.mxu0 0.0
    %555 = vmatprep.subr.mxu0 0.0
    %556 = vmatpush1.msra.mxu0 0.0
    %557 = vmatprep.subr.mxu0 0.0
    %558 = vmatpush1.msra.mxu0 0.0
    %559 = vmatprep.subr.mxu0 0.0
    %560 = vmatpush1.msra.mxu0 0.0
    %561 = vmatprep.subr.mxu0 0.0
    %562 = vmatpush1.msra.mxu0 0.0
    %563 = vmatprep.subr.mxu0 0.0
    %564 = vmatpush1.msra.mxu0 0.0
    %565 = vmatprep.subr.mxu0 0.0
    %566 = vmatpush1.msra.mxu0 0.0
    %567 = vmatprep.subr.mxu0 0.0
    %568 = vmatpush1.msra.mxu0 0.0
    %569 = vmatprep.subr.mxu0 0.0
    %570 = vmatpush1.msra.mxu0 0.0
    %571 = vmatprep.subr.mxu0 0.0
    %572 = vmatpush1.msra.mxu0 0.0
    %573 = vmatprep.subr.mxu0 0.0
    %574 = vmatpush1.msra.mxu0 0.0
    %575 = vmatprep.subr.mxu0 0.0
    %v576 = vand.u32 %v311, 4294901760
    %577 = vmatpush1.msra.mxu0 %v576
    %578 = vmatprep.subr.mxu0 0.0
    %v579 = vand.u32 %v219, 4294901760
    %580 = vmatpush1.msra.mxu0 %v579
    %581 = vmatprep.subr.mxu0 0.0
    %582 = vmatpush2.msra.mxu0 0.0
    %583 = vmatprep.subr.mxu0 0.0
    %584 = vmatpush2.msra.mxu0 0.0
    %585 = vmatprep.subr.mxu0 0.0
    %586 = vmatpush2.msra.mxu0 0.0
    %587 = vmatprep.subr.mxu0 0.0
    %588 = vmatpush2.msra.mxu0 0.0
    %589 = vmatprep.subr.mxu0 0.0
    %590 = vmatpush2.msra.mxu0 0.0
    %591 = vmatprep.subr.mxu0 0.0
    %592 = vmatpush2.msra.mxu0 0.0
    %593 = vmatprep.subr.mxu0 0.0
    %594 = vmatpush2.msra.mxu0 0.0
    %595 = vmatprep.subr.mxu0 0.0
    %596 = vmatpush2.msra.mxu0 0.0
    %597 = vmatprep.subr.mxu0 0.0
    %598 = vmatpush2.msra.mxu0 0.0
    %599 = vmatprep.subr.mxu0 0.0
    %600 = vmatpush2.msra.mxu0 0.0
    %601 = vmatprep.subr.mxu0 0.0
    %602 = vmatpush2.msra.mxu0 0.0
    %603 = vmatprep.subr.mxu0 0.0
    %604 = vmatpush2.msra.mxu0 0.0
    %605 = vmatprep.subr.mxu0 0.0
    %606 = vmatpush2.msra.mxu0 0.0
    %607 = vmatprep.subr.mxu0 0.0
    %608 = vmatpush2.msra.mxu0 0.0
    %609 = vmatprep.subr.mxu0 0.0
    %610 = vmatpush2.msra.mxu0 0.0
    %611 = vmatprep.subr.mxu0 0.0
    %612 = vmatpush2.msra.mxu0 0.0
    %613 = vmatprep.mubr.f32.mxu0 0.0
    %v614 = vand.u32 %v307, 4294901760
    %v615 = vsub.f32 %v307, %v614
    %v616 = vand.u32 %v615, 4294901760
    %617 = vmatmul.mubr.f32.gmra.mxu0 %v616
    %v618 = vpop.f32.mrf.mxu0
    %v619 = vadd.f32 %v544, %v618
    %v620 = vpop.f32.mrf.mxu0
    %621 = vdwg.mxu0
    %622 = vmatprep.subr.mxu0 0.0
    %623 = vmatpush1.msra.mxu0 0.0
    %624 = vmatprep.subr.mxu0 0.0
    %625 = vmatpush1.msra.mxu0 0.0
    %626 = vmatprep.subr.mxu0 0.0
    %627 = vmatpush1.msra.mxu0 0.0
    %628 = vmatprep.subr.mxu0 0.0
    %629 = vmatpush1.msra.mxu0 0.0
    %630 = vmatprep.subr.mxu0 0.0
    %631 = vmatpush1.msra.mxu0 0.0
    %632 = vmatprep.subr.mxu0 0.0
    %633 = vmatpush1.msra.mxu0 0.0
    %634 = vmatprep.subr.mxu0 0.0
    %635 = vmatpush1.msra.mxu0 0.0
    %636 = vmatprep.subr.mxu0 0.0
    %637 = vmatpush1.msra.mxu0 0.0
    %638 = vmatprep.subr.mxu0 0.0
    %639 = vmatpush1.msra.mxu0 0.0
    %640 = vmatprep.subr.mxu0 0.0
    %641 = vmatpush1.msra.mxu0 0.0
    %642 = vmatprep.subr.mxu0 0.0
    %643 = vmatpush1.msra.mxu0 0.0
    %644 = vmatprep.subr.mxu0 0.0
    %645 = vmatpush1.msra.mxu0 0.0
    %646 = vmatprep.subr.mxu0 0.0
    %647 = vmatpush1.msra.mxu0 0.0
    %648 = vmatprep.subr.mxu0 0.0
    %649 = vmatpush1.msra.mxu0 0.0
    %650 = vmatprep.subr.mxu0 0.0
    %v651 = vand.u32 %v311, 4294901760
    %v652 = vsub.f32 %v311, %v651
    %v653 = vand.u32 %v652, 4294901760
    %654 = vmatpush1.msra.mxu0 %v653
    %655 = vmatprep.subr.mxu0 0.0
    %v656 = vand.u32 %v219, 4294901760
    %v657 = vsub.f32 %v219, %v656
    %v658 = vand.u32 %v657, 4294901760
    %659 = vmatpush1.msra.mxu0 %v658
    %660 = vmatprep.subr.mxu0 0.0
    %661 = vmatpush2.msra.mxu0 0.0
    %662 = vmatprep.subr.mxu0 0.0
    %663 = vmatpush2.msra.mxu0 0.0
    %664 = vmatprep.subr.mxu0 0.0
    %665 = vmatpush2.msra.mxu0 0.0
    %666 = vmatprep.subr.mxu0 0.0
    %667 = vmatpush2.msra.mxu0 0.0
    %668 = vmatprep.subr.mxu0 0.0
    %669 = vmatpush2.msra.mxu0 0.0
    %670 = vmatprep.subr.mxu0 0.0
    %671 = vmatpush2.msra.mxu0 0.0
    %672 = vmatprep.subr.mxu0 0.0
    %673 = vmatpush2.msra.mxu0 0.0
    %674 = vmatprep.subr.mxu0 0.0
    %675 = vmatpush2.msra.mxu0 0.0
    %676 = vmatprep.subr.mxu0 0.0
    %677 = vmatpush2.msra.mxu0 0.0
    %678 = vmatprep.subr.mxu0 0.0
    %679 = vmatpush2.msra.mxu0 0.0
    %680 = vmatprep.subr.mxu0 0.0
    %681 = vmatpush2.msra.mxu0 0.0
    %682 = vmatprep.subr.mxu0 0.0
    %683 = vmatpush2.msra.mxu0 0.0
    %684 = vmatprep.subr.mxu0 0.0
    %685 = vmatpush2.msra.mxu0 0.0
    %686 = vmatprep.subr.mxu0 0.0
    %687 = vmatpush2.msra.mxu0 0.0
    %688 = vmatprep.subr.mxu0 0.0
    %689 = vmatpush2.msra.mxu0 0.0
    %690 = vmatprep.subr.mxu0 0.0
    %691 = vmatpush2.msra.mxu0 0.0
    %692 = vmatprep.mubr.f32.mxu0 0.0
    %v693 = vand.u32 %v307, 4294901760
    %694 = vmatmul.mubr.f32.gmra.mxu0 %v693
    %v695 = vpop.f32.mrf.mxu0
    %v696 = vadd.f32 %v619, %v695
    %v697 = vpop.f32.mrf.mxu0
    %698 = vdwg.mxu0
    %699 = vmatprep.subr.mxu0 0.0
    %700 = vmatpush1.msra.mxu0 0.0
    %701 = vmatprep.subr.mxu0 0.0
    %702 = vmatpush1.msra.mxu0 0.0
    %703 = vmatprep.subr.mxu0 0.0
    %704 = vmatpush1.msra.mxu0 0.0
    %705 = vmatprep.subr.mxu0 0.0
    %706 = vmatpush1.msra.mxu0 0.0
    %707 = vmatprep.subr.mxu0 0.0
    %708 = vmatpush1.msra.mxu0 0.0
    %709 = vmatprep.subr.mxu0 0.0
    %710 = vmatpush1.msra.mxu0 0.0
    %711 = vmatprep.subr.mxu0 0.0
    %712 = vmatpush1.msra.mxu0 0.0
    %713 = vmatprep.subr.mxu0 0.0
    %714 = vmatpush1.msra.mxu0 0.0
    %715 = vmatprep.subr.mxu0 0.0
    %716 = vmatpush1.msra.mxu0 0.0
    %717 = vmatprep.subr.mxu0 0.0
    %718 = vmatpush1.msra.mxu0 0.0
    %719 = vmatprep.subr.mxu0 0.0
    %720 = vmatpush1.msra.mxu0 0.0
    %721 = vmatprep.subr.mxu0 0.0
    %722 = vmatpush1.msra.mxu0 0.0
    %723 = vmatprep.subr.mxu0 0.0
    %724 = vmatpush1.msra.mxu0 0.0
    %725 = vmatprep.subr.mxu0 0.0
    %726 = vmatpush1.msra.mxu0 0.0
    %727 = vmatprep.subr.mxu0 0.0
    %v728 = vand.u32 %v311, 4294901760
    %729 = vmatpush1.msra.mxu0 %v728
    %730 = vmatprep.subr.mxu0 0.0
    %v731 = vand.u32 %v219, 4294901760
    %732 = vmatpush1.msra.mxu0 %v731
    %733 = vmatprep.subr.mxu0 0.0
    %734 = vmatpush2.msra.mxu0 0.0
    %735 = vmatprep.subr.mxu0 0.0
    %736 = vmatpush2.msra.mxu0 0.0
    %737 = vmatprep.subr.mxu0 0.0
    %738 = vmatpush2.msra.mxu0 0.0
    %739 = vmatprep.subr.mxu0 0.0
    %740 = vmatpush2.msra.mxu0 0.0
    %741 = vmatprep.subr.mxu0 0.0
    %742 = vmatpush2.msra.mxu0 0.0
    %743 = vmatprep.subr.mxu0 0.0
    %744 = vmatpush2.msra.mxu0 0.0
    %745 = vmatprep.subr.mxu0 0.0
    %746 = vmatpush2.msra.mxu0 0.0
    %747 = vmatprep.subr.mxu0 0.0
    %748 = vmatpush2.msra.mxu0 0.0
    %749 = vmatprep.subr.mxu0 0.0
    %750 = vmatpush2.msra.mxu0 0.0
    %751 = vmatprep.subr.mxu0 0.0
    %752 = vmatpush2.msra.mxu0 0.0
    %753 = vmatprep.subr.mxu0 0.0
    %754 = vmatpush2.msra.mxu0 0.0
    %755 = vmatprep.subr.mxu0 0.0
    %756 = vmatpush2.msra.mxu0 0.0
    %757 = vmatprep.subr.mxu0 0.0
    %758 = vmatpush2.msra.mxu0 0.0
    %759 = vmatprep.subr.mxu0 0.0
    %760 = vmatpush2.msra.mxu0 0.0
    %761 = vmatprep.subr.mxu0 0.0
    %762 = vmatpush2.msra.mxu0 0.0
    %763 = vmatprep.subr.mxu0 0.0
    %764 = vmatpush2.msra.mxu0 0.0
    %765 = vmatprep.mubr.f32.mxu0 0.0
    %v766 = vand.u32 %v307, 4294901760
    %767 = vmatmul.mubr.f32.gmra.mxu0 %v766
    %v768 = vpop.f32.mrf.mxu0
    %v769 = vadd.f32 %v696, %v768
    %v770 = vpop.f32.mrf.mxu0
    %771 = vdwg.mxu0
    %v773 = vcombine.high %v769, %v769
    %v775 = vunpack.c.l.s4 1966171168
    %v776 = vunpack.c.0.s8 %v775
    %v777 = vlaneseq
    %v778 = vshrl.u32 %v777, 7
    %v779 = vsub.s32 %v776, %v778
    %v780 = vrot.slane %v769, %v779
    %v782 = vunpack.c.l.s4 1966171168
    %v783 = vunpack.c.0.s8 %v782
    %v784 = vlaneseq
    %v785 = vshrl.u32 %v784, 7
    %v786 = vsub.s32 %v783, %v785
    %v787 = vrot.slane %v773, %v786
    %v788 = vcombine.high %v780, %v780
    %v789 = vcombine.high %v787, %v787
    %v791 = vunpack.c.l.s4 1966171168
    %v792 = vunpack.c.0.s8 %v791
    %v793 = vlaneseq
    %v794 = vshrl.u32 %v793, 7
    %v795 = vsub.s32 %v792, %v794
    %v796 = vrot.slane %v780, %v795
    %v798 = vunpack.c.l.s4 1966171168
    %v799 = vunpack.c.0.s8 %v798
    %v800 = vlaneseq
    %v801 = vshrl.u32 %v800, 7
    %v802 = vsub.s32 %v799, %v801
    %v803 = vrot.slane %v787, %v802
    %v805 = vunpack.c.l.s4 1966171168
    %v806 = vunpack.c.0.s8 %v805
    %v807 = vlaneseq
    %v808 = vshrl.u32 %v807, 7
    %v809 = vsub.s32 %v806, %v808
    %v810 = vrot.slane %v788, %v809
    %v812 = vunpack.c.l.s4 1966171168
    %v813 = vunpack.c.0.s8 %v812
    %v814 = vlaneseq
    %v815 = vshrl.u32 %v814, 7
    %v816 = vsub.s32 %v813, %v815
    %v817 = vrot.slane %v789, %v816
    %v818 = vcombine.high %v796, %v796
    %v819 = vcombine.high %v803, %v803
    %v820 = vcombine.high %v810, %v810
    %v821 = vcombine.high %v817, %v817
    %v830 = vrot.slane %v269, 2
    %v831 = vrot.slane %v270, 1
    %v832 = vsel %vm286, %v831, %v830
    %v833 = vsel %vm289, %v271, %v832
    %v834 = vrot.slane %v272, 7
    %v835 = vsel %vm292, %v834, %v833
    %v836 = vrot.slane %v273, 6
    %v837 = vsel %vm295, %v836, %v835
    %v838 = vrot.slane %v274, 5
    %v839 = vsel %vm298, %v838, %v837
    %v840 = vrot.slane %v275, 4
    %v841 = vsel %vm301, %v840, %v839
    %v842 = vrot.slane %v276, 3
    %v843 = vsel %vm304, %v842, %v841
    %v844 = vsel %vm306, %v843, 0
    %846 = vmatprep.subr.mxu0 0.0
    %847 = vmatpush1.msra.mxu0 0.0
    %848 = vmatprep.subr.mxu0 0.0
    %849 = vmatpush1.msra.mxu0 0.0
    %850 = vmatprep.subr.mxu0 0.0
    %851 = vmatpush1.msra.mxu0 0.0
    %852 = vmatprep.subr.mxu0 0.0
    %853 = vmatpush1.msra.mxu0 0.0
    %854 = vmatprep.subr.mxu0 0.0
    %855 = vmatpush1.msra.mxu0 0.0
    %856 = vmatprep.subr.mxu0 0.0
    %857 = vmatpush1.msra.mxu0 0.0
    %858 = vmatprep.subr.mxu0 0.0
    %859 = vmatpush1.msra.mxu0 0.0
    %860 = vmatprep.subr.mxu0 0.0
    %861 = vmatpush1.msra.mxu0 0.0
    %862 = vmatprep.subr.mxu0 0.0
    %863 = vmatpush1.msra.mxu0 0.0
    %864 = vmatprep.subr.mxu0 0.0
    %865 = vmatpush1.msra.mxu0 0.0
    %866 = vmatprep.subr.mxu0 0.0
    %867 = vmatpush1.msra.mxu0 0.0
    %868 = vmatprep.subr.mxu0 0.0
    %869 = vmatpush1.msra.mxu0 0.0
    %870 = vmatprep.subr.mxu0 0.0
    %871 = vmatpush1.msra.mxu0 0.0
    %872 = vmatprep.subr.mxu0 0.0
    %873 = vmatpush1.msra.mxu0 0.0
    %874 = vmatprep.subr.mxu0 0.0
    %v875 = vand.u32 %v311, 4294901760
    %876 = vmatpush1.msra.mxu0 %v875
    %877 = vmatprep.subr.mxu0 0.0
    %v878 = vand.u32 %v219, 4294901760
    %879 = vmatpush1.msra.mxu0 %v878
    %880 = vmatprep.subr.mxu0 0.0
    %881 = vmatpush2.msra.mxu0 0.0
    %882 = vmatprep.subr.mxu0 0.0
    %883 = vmatpush2.msra.mxu0 0.0
    %884 = vmatprep.subr.mxu0 0.0
    %885 = vmatpush2.msra.mxu0 0.0
    %886 = vmatprep.subr.mxu0 0.0
    %887 = vmatpush2.msra.mxu0 0.0
    %888 = vmatprep.subr.mxu0 0.0
    %889 = vmatpush2.msra.mxu0 0.0
    %890 = vmatprep.subr.mxu0 0.0
    %891 = vmatpush2.msra.mxu0 0.0
    %892 = vmatprep.subr.mxu0 0.0
    %893 = vmatpush2.msra.mxu0 0.0
    %894 = vmatprep.subr.mxu0 0.0
    %895 = vmatpush2.msra.mxu0 0.0
    %896 = vmatprep.subr.mxu0 0.0
    %897 = vmatpush2.msra.mxu0 0.0
    %898 = vmatprep.subr.mxu0 0.0
    %899 = vmatpush2.msra.mxu0 0.0
    %900 = vmatprep.subr.mxu0 0.0
    %901 = vmatpush2.msra.mxu0 0.0
    %902 = vmatprep.subr.mxu0 0.0
    %903 = vmatpush2.msra.mxu0 0.0
    %904 = vmatprep.subr.mxu0 0.0
    %905 = vmatpush2.msra.mxu0 0.0
    %906 = vmatprep.subr.mxu0 0.0
    %907 = vmatpush2.msra.mxu0 0.0
    %908 = vmatprep.subr.mxu0 0.0
    %909 = vmatpush2.msra.mxu0 0.0
    %910 = vmatprep.subr.mxu0 0.0
    %911 = vmatpush2.msra.mxu0 0.0
    %912 = vmatprep.mubr.f32.mxu0 0.0
    %v913 = vand.u32 %v844, 4294901760
    %v914 = vsub.f32 %v844, %v913
    %v915 = vand.u32 %v914, 4294901760
    %v916 = vsub.f32 %v914, %v915
    %v917 = vand.u32 %v916, 4294901760
    %918 = vmatmul.mubr.f32.gmra.mxu0 %v917
    %v919 = vpop.f32.mrf.mxu0
    %v920 = vadd.f32 0.0, %v919
    %v921 = vpop.f32.mrf.mxu0
    %922 = vdwg.mxu0
    %923 = vmatprep.subr.mxu0 0.0
    %924 = vmatpush1.msra.mxu0 0.0
    %925 = vmatprep.subr.mxu0 0.0
    %926 = vmatpush1.msra.mxu0 0.0
    %927 = vmatprep.subr.mxu0 0.0
    %928 = vmatpush1.msra.mxu0 0.0
    %929 = vmatprep.subr.mxu0 0.0
    %930 = vmatpush1.msra.mxu0 0.0
    %931 = vmatprep.subr.mxu0 0.0
    %932 = vmatpush1.msra.mxu0 0.0
    %933 = vmatprep.subr.mxu0 0.0
    %934 = vmatpush1.msra.mxu0 0.0
    %935 = vmatprep.subr.mxu0 0.0
    %936 = vmatpush1.msra.mxu0 0.0
    %937 = vmatprep.subr.mxu0 0.0
    %938 = vmatpush1.msra.mxu0 0.0
    %939 = vmatprep.subr.mxu0 0.0
    %940 = vmatpush1.msra.mxu0 0.0
    %941 = vmatprep.subr.mxu0 0.0
    %942 = vmatpush1.msra.mxu0 0.0
    %943 = vmatprep.subr.mxu0 0.0
    %944 = vmatpush1.msra.mxu0 0.0
    %945 = vmatprep.subr.mxu0 0.0
    %946 = vmatpush1.msra.mxu0 0.0
    %947 = vmatprep.subr.mxu0 0.0
    %948 = vmatpush1.msra.mxu0 0.0
    %949 = vmatprep.subr.mxu0 0.0
    %950 = vmatpush1.msra.mxu0 0.0
    %951 = vmatprep.subr.mxu0 0.0
    %v952 = vand.u32 %v311, 4294901760
    %v953 = vsub.f32 %v311, %v952
    %v954 = vand.u32 %v953, 4294901760
    %v955 = vsub.f32 %v953, %v954
    %v956 = vand.u32 %v955, 4294901760
    %957 = vmatpush1.msra.mxu0 %v956
    %958 = vmatprep.subr.mxu0 0.0
    %v959 = vand.u32 %v219, 4294901760
    %v960 = vsub.f32 %v219, %v959
    %v961 = vand.u32 %v960, 4294901760
    %v962 = vsub.f32 %v960, %v961
    %v963 = vand.u32 %v962, 4294901760
    %964 = vmatpush1.msra.mxu0 %v963
    %965 = vmatprep.subr.mxu0 0.0
    %966 = vmatpush2.msra.mxu0 0.0
    %967 = vmatprep.subr.mxu0 0.0
    %968 = vmatpush2.msra.mxu0 0.0
    %969 = vmatprep.subr.mxu0 0.0
    %970 = vmatpush2.msra.mxu0 0.0
    %971 = vmatprep.subr.mxu0 0.0
    %972 = vmatpush2.msra.mxu0 0.0
    %973 = vmatprep.subr.mxu0 0.0
    %974 = vmatpush2.msra.mxu0 0.0
    %975 = vmatprep.subr.mxu0 0.0
    %976 = vmatpush2.msra.mxu0 0.0
    %977 = vmatprep.subr.mxu0 0.0
    %978 = vmatpush2.msra.mxu0 0.0
    %979 = vmatprep.subr.mxu0 0.0
    %980 = vmatpush2.msra.mxu0 0.0
    %981 = vmatprep.subr.mxu0 0.0
    %982 = vmatpush2.msra.mxu0 0.0
    %983 = vmatprep.subr.mxu0 0.0
    %984 = vmatpush2.msra.mxu0 0.0
    %985 = vmatprep.subr.mxu0 0.0
    %986 = vmatpush2.msra.mxu0 0.0
    %987 = vmatprep.subr.mxu0 0.0
    %988 = vmatpush2.msra.mxu0 0.0
    %989 = vmatprep.subr.mxu0 0.0
    %990 = vmatpush2.msra.mxu0 0.0
    %991 = vmatprep.subr.mxu0 0.0
    %992 = vmatpush2.msra.mxu0 0.0
    %993 = vmatprep.subr.mxu0 0.0
    %994 = vmatpush2.msra.mxu0 0.0
    %995 = vmatprep.subr.mxu0 0.0
    %996 = vmatpush2.msra.mxu0 0.0
    %997 = vmatprep.mubr.f32.mxu0 0.0
    %v998 = vand.u32 %v844, 4294901760
    %999 = vmatmul.mubr.f32.gmra.mxu0 %v998
    %v1000 = vpop.f32.mrf.mxu0
    %v1001 = vadd.f32 %v920, %v1000
    %v1002 = vpop.f32.mrf.mxu0
    %1003 = vdwg.mxu0
    %1004 = vmatprep.subr.mxu0 0.0
    %1005 = vmatpush1.msra.mxu0 0.0
    %1006 = vmatprep.subr.mxu0 0.0
    %1007 = vmatpush1.msra.mxu0 0.0
    %1008 = vmatprep.subr.mxu0 0.0
    %1009 = vmatpush1.msra.mxu0 0.0
    %1010 = vmatprep.subr.mxu0 0.0
    %1011 = vmatpush1.msra.mxu0 0.0
    %1012 = vmatprep.subr.mxu0 0.0
    %1013 = vmatpush1.msra.mxu0 0.0
    %1014 = vmatprep.subr.mxu0 0.0
    %1015 = vmatpush1.msra.mxu0 0.0
    %1016 = vmatprep.subr.mxu0 0.0
    %1017 = vmatpush1.msra.mxu0 0.0
    %1018 = vmatprep.subr.mxu0 0.0
    %1019 = vmatpush1.msra.mxu0 0.0
    %1020 = vmatprep.subr.mxu0 0.0
    %1021 = vmatpush1.msra.mxu0 0.0
    %1022 = vmatprep.subr.mxu0 0.0
    %1023 = vmatpush1.msra.mxu0 0.0
    %1024 = vmatprep.subr.mxu0 0.0
    %1025 = vmatpush1.msra.mxu0 0.0
    %1026 = vmatprep.subr.mxu0 0.0
    %1027 = vmatpush1.msra.mxu0 0.0
    %1028 = vmatprep.subr.mxu0 0.0
    %1029 = vmatpush1.msra.mxu0 0.0
    %1030 = vmatprep.subr.mxu0 0.0
    %1031 = vmatpush1.msra.mxu0 0.0
    %1032 = vmatprep.subr.mxu0 0.0
    %v1033 = vand.u32 %v311, 4294901760
    %v1034 = vsub.f32 %v311, %v1033
    %1035 = vmatpush1.msra.mxu0 %v1034
    %1036 = vmatprep.subr.mxu0 0.0
    %v1037 = vand.u32 %v219, 4294901760
    %v1038 = vsub.f32 %v219, %v1037
    %1039 = vmatpush1.msra.mxu0 %v1038
    %1040 = vmatprep.subr.mxu0 0.0
    %1041 = vmatpush2.msra.mxu0 0.0
    %1042 = vmatprep.subr.mxu0 0.0
    %1043 = vmatpush2.msra.mxu0 0.0
    %1044 = vmatprep.subr.mxu0 0.0
    %1045 = vmatpush2.msra.mxu0 0.0
    %1046 = vmatprep.subr.mxu0 0.0
    %1047 = vmatpush2.msra.mxu0 0.0
    %1048 = vmatprep.subr.mxu0 0.0
    %1049 = vmatpush2.msra.mxu0 0.0
    %1050 = vmatprep.subr.mxu0 0.0
    %1051 = vmatpush2.msra.mxu0 0.0
    %1052 = vmatprep.subr.mxu0 0.0
    %1053 = vmatpush2.msra.mxu0 0.0
    %1054 = vmatprep.subr.mxu0 0.0
    %1055 = vmatpush2.msra.mxu0 0.0
    %1056 = vmatprep.subr.mxu0 0.0
    %1057 = vmatpush2.msra.mxu0 0.0
    %1058 = vmatprep.subr.mxu0 0.0
    %1059 = vmatpush2.msra.mxu0 0.0
    %1060 = vmatprep.subr.mxu0 0.0
    %1061 = vmatpush2.msra.mxu0 0.0
    %1062 = vmatprep.subr.mxu0 0.0
    %1063 = vmatpush2.msra.mxu0 0.0
    %1064 = vmatprep.subr.mxu0 0.0
    %1065 = vmatpush2.msra.mxu0 0.0
    %1066 = vmatprep.subr.mxu0 0.0
    %1067 = vmatpush2.msra.mxu0 0.0
    %1068 = vmatprep.subr.mxu0 0.0
    %1069 = vmatpush2.msra.mxu0 0.0
    %1070 = vmatprep.subr.mxu0 0.0
    %1071 = vmatpush2.msra.mxu0 0.0
    %1072 = vmatprep.mubr.f32.mxu0 0.0
    %v1073 = vand.u32 %v844, 4294901760
    %v1074 = vsub.f32 %v844, %v1073
    %1075 = vmatmul.mubr.f32.gmra.mxu0 %v1074
    %v1076 = vpop.f32.mrf.mxu0
    %v1077 = vadd.f32 %v1001, %v1076
    %v1078 = vpop.f32.mrf.mxu0
    %1079 = vdwg.mxu0
    %1080 = vmatprep.subr.mxu0 0.0
    %1081 = vmatpush1.msra.mxu0 0.0
    %1082 = vmatprep.subr.mxu0 0.0
    %1083 = vmatpush1.msra.mxu0 0.0
    %1084 = vmatprep.subr.mxu0 0.0
    %1085 = vmatpush1.msra.mxu0 0.0
    %1086 = vmatprep.subr.mxu0 0.0
    %1087 = vmatpush1.msra.mxu0 0.0
    %1088 = vmatprep.subr.mxu0 0.0
    %1089 = vmatpush1.msra.mxu0 0.0
    %1090 = vmatprep.subr.mxu0 0.0
    %1091 = vmatpush1.msra.mxu0 0.0
    %1092 = vmatprep.subr.mxu0 0.0
    %1093 = vmatpush1.msra.mxu0 0.0
    %1094 = vmatprep.subr.mxu0 0.0
    %1095 = vmatpush1.msra.mxu0 0.0
    %1096 = vmatprep.subr.mxu0 0.0
    %1097 = vmatpush1.msra.mxu0 0.0
    %1098 = vmatprep.subr.mxu0 0.0
    %1099 = vmatpush1.msra.mxu0 0.0
    %1100 = vmatprep.subr.mxu0 0.0
    %1101 = vmatpush1.msra.mxu0 0.0
    %1102 = vmatprep.subr.mxu0 0.0
    %1103 = vmatpush1.msra.mxu0 0.0
    %1104 = vmatprep.subr.mxu0 0.0
    %1105 = vmatpush1.msra.mxu0 0.0
    %1106 = vmatprep.subr.mxu0 0.0
    %1107 = vmatpush1.msra.mxu0 0.0
    %1108 = vmatprep.subr.mxu0 0.0
    %v1109 = vand.u32 %v311, 4294901760
    %1110 = vmatpush1.msra.mxu0 %v1109
    %1111 = vmatprep.subr.mxu0 0.0
    %v1112 = vand.u32 %v219, 4294901760
    %1113 = vmatpush1.msra.mxu0 %v1112
    %1114 = vmatprep.subr.mxu0 0.0
    %1115 = vmatpush2.msra.mxu0 0.0
    %1116 = vmatprep.subr.mxu0 0.0
    %1117 = vmatpush2.msra.mxu0 0.0
    %1118 = vmatprep.subr.mxu0 0.0
    %1119 = vmatpush2.msra.mxu0 0.0
    %1120 = vmatprep.subr.mxu0 0.0
    %1121 = vmatpush2.msra.mxu0 0.0
    %1122 = vmatprep.subr.mxu0 0.0
    %1123 = vmatpush2.msra.mxu0 0.0
    %1124 = vmatprep.subr.mxu0 0.0
    %1125 = vmatpush2.msra.mxu0 0.0
    %1126 = vmatprep.subr.mxu0 0.0
    %1127 = vmatpush2.msra.mxu0 0.0
    %1128 = vmatprep.subr.mxu0 0.0
    %1129 = vmatpush2.msra.mxu0 0.0
    %1130 = vmatprep.subr.mxu0 0.0
    %1131 = vmatpush2.msra.mxu0 0.0
    %1132 = vmatprep.subr.mxu0 0.0
    %1133 = vmatpush2.msra.mxu0 0.0
    %1134 = vmatprep.subr.mxu0 0.0
    %1135 = vmatpush2.msra.mxu0 0.0
    %1136 = vmatprep.subr.mxu0 0.0
    %1137 = vmatpush2.msra.mxu0 0.0
    %1138 = vmatprep.subr.mxu0 0.0
    %1139 = vmatpush2.msra.mxu0 0.0
    %1140 = vmatprep.subr.mxu0 0.0
    %1141 = vmatpush2.msra.mxu0 0.0
    %1142 = vmatprep.subr.mxu0 0.0
    %1143 = vmatpush2.msra.mxu0 0.0
    %1144 = vmatprep.subr.mxu0 0.0
    %1145 = vmatpush2.msra.mxu0 0.0
    %1146 = vmatprep.mubr.f32.mxu0 0.0
    %v1147 = vand.u32 %v844, 4294901760
    %v1148 = vsub.f32 %v844, %v1147
    %v1149 = vand.u32 %v1148, 4294901760
    %1150 = vmatmul.mubr.f32.gmra.mxu0 %v1149
    %v1151 = vpop.f32.mrf.mxu0
    %v1152 = vadd.f32 %v1077, %v1151
    %v1153 = vpop.f32.mrf.mxu0
    %1154 = vdwg.mxu0
    %1155 = vmatprep.subr.mxu0 0.0
    %1156 = vmatpush1.msra.mxu0 0.0
    %1157 = vmatprep.subr.mxu0 0.0
    %1158 = vmatpush1.msra.mxu0 0.0
    %1159 = vmatprep.subr.mxu0 0.0
    %1160 = vmatpush1.msra.mxu0 0.0
    %1161 = vmatprep.subr.mxu0 0.0
    %1162 = vmatpush1.msra.mxu0 0.0
    %1163 = vmatprep.subr.mxu0 0.0
    %1164 = vmatpush1.msra.mxu0 0.0
    %1165 = vmatprep.subr.mxu0 0.0
    %1166 = vmatpush1.msra.mxu0 0.0
    %1167 = vmatprep.subr.mxu0 0.0
    %1168 = vmatpush1.msra.mxu0 0.0
    %1169 = vmatprep.subr.mxu0 0.0
    %1170 = vmatpush1.msra.mxu0 0.0
    %1171 = vmatprep.subr.mxu0 0.0
    %1172 = vmatpush1.msra.mxu0 0.0
    %1173 = vmatprep.subr.mxu0 0.0
    %1174 = vmatpush1.msra.mxu0 0.0
    %1175 = vmatprep.subr.mxu0 0.0
    %1176 = vmatpush1.msra.mxu0 0.0
    %1177 = vmatprep.subr.mxu0 0.0
    %1178 = vmatpush1.msra.mxu0 0.0
    %1179 = vmatprep.subr.mxu0 0.0
    %1180 = vmatpush1.msra.mxu0 0.0
    %1181 = vmatprep.subr.mxu0 0.0
    %1182 = vmatpush1.msra.mxu0 0.0
    %1183 = vmatprep.subr.mxu0 0.0
    %v1184 = vand.u32 %v311, 4294901760
    %v1185 = vsub.f32 %v311, %v1184
    %v1186 = vand.u32 %v1185, 4294901760
    %1187 = vmatpush1.msra.mxu0 %v1186
    %1188 = vmatprep.subr.mxu0 0.0
    %v1189 = vand.u32 %v219, 4294901760
    %v1190 = vsub.f32 %v219, %v1189
    %v1191 = vand.u32 %v1190, 4294901760
    %1192 = vmatpush1.msra.mxu0 %v1191
    %1193 = vmatprep.subr.mxu0 0.0
    %1194 = vmatpush2.msra.mxu0 0.0
    %1195 = vmatprep.subr.mxu0 0.0
    %1196 = vmatpush2.msra.mxu0 0.0
    %1197 = vmatprep.subr.mxu0 0.0
    %1198 = vmatpush2.msra.mxu0 0.0
    %1199 = vmatprep.subr.mxu0 0.0
    %1200 = vmatpush2.msra.mxu0 0.0
    %1201 = vmatprep.subr.mxu0 0.0
    %1202 = vmatpush2.msra.mxu0 0.0
    %1203 = vmatprep.subr.mxu0 0.0
    %1204 = vmatpush2.msra.mxu0 0.0
    %1205 = vmatprep.subr.mxu0 0.0
    %1206 = vmatpush2.msra.mxu0 0.0
    %1207 = vmatprep.subr.mxu0 0.0
    %1208 = vmatpush2.msra.mxu0 0.0
    %1209 = vmatprep.subr.mxu0 0.0
    %1210 = vmatpush2.msra.mxu0 0.0
    %1211 = vmatprep.subr.mxu0 0.0
    %1212 = vmatpush2.msra.mxu0 0.0
    %1213 = vmatprep.subr.mxu0 0.0
    %1214 = vmatpush2.msra.mxu0 0.0
    %1215 = vmatprep.subr.mxu0 0.0
    %1216 = vmatpush2.msra.mxu0 0.0
    %1217 = vmatprep.subr.mxu0 0.0
    %1218 = vmatpush2.msra.mxu0 0.0
    %1219 = vmatprep.subr.mxu0 0.0
    %1220 = vmatpush2.msra.mxu0 0.0
    %1221 = vmatprep.subr.mxu0 0.0
    %1222 = vmatpush2.msra.mxu0 0.0
    %1223 = vmatprep.subr.mxu0 0.0
    %1224 = vmatpush2.msra.mxu0 0.0
    %1225 = vmatprep.mubr.f32.mxu0 0.0
    %v1226 = vand.u32 %v844, 4294901760
    %1227 = vmatmul.mubr.f32.gmra.mxu0 %v1226
    %v1228 = vpop.f32.mrf.mxu0
    %v1229 = vadd.f32 %v1152, %v1228
    %v1230 = vpop.f32.mrf.mxu0
    %1231 = vdwg.mxu0
    %1232 = vmatprep.subr.mxu0 0.0
    %1233 = vmatpush1.msra.mxu0 0.0
    %1234 = vmatprep.subr.mxu0 0.0
    %1235 = vmatpush1.msra.mxu0 0.0
    %1236 = vmatprep.subr.mxu0 0.0
    %1237 = vmatpush1.msra.mxu0 0.0
    %1238 = vmatprep.subr.mxu0 0.0
    %1239 = vmatpush1.msra.mxu0 0.0
    %1240 = vmatprep.subr.mxu0 0.0
    %1241 = vmatpush1.msra.mxu0 0.0
    %1242 = vmatprep.subr.mxu0 0.0
    %1243 = vmatpush1.msra.mxu0 0.0
    %1244 = vmatprep.subr.mxu0 0.0
    %1245 = vmatpush1.msra.mxu0 0.0
    %1246 = vmatprep.subr.mxu0 0.0
    %1247 = vmatpush1.msra.mxu0 0.0
    %1248 = vmatprep.subr.mxu0 0.0
    %1249 = vmatpush1.msra.mxu0 0.0
    %1250 = vmatprep.subr.mxu0 0.0
    %1251 = vmatpush1.msra.mxu0 0.0
    %1252 = vmatprep.subr.mxu0 0.0
    %1253 = vmatpush1.msra.mxu0 0.0
    %1254 = vmatprep.subr.mxu0 0.0
    %1255 = vmatpush1.msra.mxu0 0.0
    %1256 = vmatprep.subr.mxu0 0.0
    %1257 = vmatpush1.msra.mxu0 0.0
    %1258 = vmatprep.subr.mxu0 0.0
    %1259 = vmatpush1.msra.mxu0 0.0
    %1260 = vmatprep.subr.mxu0 0.0
    %v1261 = vand.u32 %v311, 4294901760
    %1262 = vmatpush1.msra.mxu0 %v1261
    %1263 = vmatprep.subr.mxu0 0.0
    %v1264 = vand.u32 %v219, 4294901760
    %1265 = vmatpush1.msra.mxu0 %v1264
    %1266 = vmatprep.subr.mxu0 0.0
    %1267 = vmatpush2.msra.mxu0 0.0
    %1268 = vmatprep.subr.mxu0 0.0
    %1269 = vmatpush2.msra.mxu0 0.0
    %1270 = vmatprep.subr.mxu0 0.0
    %1271 = vmatpush2.msra.mxu0 0.0
    %1272 = vmatprep.subr.mxu0 0.0
    %1273 = vmatpush2.msra.mxu0 0.0
    %1274 = vmatprep.subr.mxu0 0.0
    %1275 = vmatpush2.msra.mxu0 0.0
    %1276 = vmatprep.subr.mxu0 0.0
    %1277 = vmatpush2.msra.mxu0 0.0
    %1278 = vmatprep.subr.mxu0 0.0
    %1279 = vmatpush2.msra.mxu0 0.0
    %1280 = vmatprep.subr.mxu0 0.0
    %1281 = vmatpush2.msra.mxu0 0.0
    %1282 = vmatprep.subr.mxu0 0.0
    %1283 = vmatpush2.msra.mxu0 0.0
    %1284 = vmatprep.subr.mxu0 0.0
    %1285 = vmatpush2.msra.mxu0 0.0
    %1286 = vmatprep.subr.mxu0 0.0
    %1287 = vmatpush2.msra.mxu0 0.0
    %1288 = vmatprep.subr.mxu0 0.0
    %1289 = vmatpush2.msra.mxu0 0.0
    %1290 = vmatprep.subr.mxu0 0.0
    %1291 = vmatpush2.msra.mxu0 0.0
    %1292 = vmatprep.subr.mxu0 0.0
    %1293 = vmatpush2.msra.mxu0 0.0
    %1294 = vmatprep.subr.mxu0 0.0
    %1295 = vmatpush2.msra.mxu0 0.0
    %1296 = vmatprep.subr.mxu0 0.0
    %1297 = vmatpush2.msra.mxu0 0.0
    %1298 = vmatprep.mubr.f32.mxu0 0.0
    %v1299 = vand.u32 %v844, 4294901760
    %1300 = vmatmul.mubr.f32.gmra.mxu0 %v1299
    %v1301 = vpop.f32.mrf.mxu0
    %v1302 = vadd.f32 %v1229, %v1301
    %v1303 = vpop.f32.mrf.mxu0
    %1304 = vdwg.mxu0
    %v1306 = vcombine.high %v1302, %v1302
    %v1308 = vunpack.c.l.s4 1966171168
    %v1309 = vunpack.c.0.s8 %v1308
    %v1310 = vlaneseq
    %v1311 = vshrl.u32 %v1310, 7
    %v1312 = vsub.s32 %v1309, %v1311
    %v1313 = vrot.slane %v1302, %v1312
    %v1315 = vunpack.c.l.s4 1966171168
    %v1316 = vunpack.c.0.s8 %v1315
    %v1317 = vlaneseq
    %v1318 = vshrl.u32 %v1317, 7
    %v1319 = vsub.s32 %v1316, %v1318
    %v1320 = vrot.slane %v1306, %v1319
    %v1321 = vcombine.high %v1313, %v1313
    %v1322 = vcombine.high %v1320, %v1320
    %v1324 = vunpack.c.l.s4 1966171168
    %v1325 = vunpack.c.0.s8 %v1324
    %v1326 = vlaneseq
    %v1327 = vshrl.u32 %v1326, 7
    %v1328 = vsub.s32 %v1325, %v1327
    %v1329 = vrot.slane %v1313, %v1328
    %v1331 = vunpack.c.l.s4 1966171168
    %v1332 = vunpack.c.0.s8 %v1331
    %v1333 = vlaneseq
    %v1334 = vshrl.u32 %v1333, 7
    %v1335 = vsub.s32 %v1332, %v1334
    %v1336 = vrot.slane %v1320, %v1335
    %v1338 = vunpack.c.l.s4 1966171168
    %v1339 = vunpack.c.0.s8 %v1338
    %v1340 = vlaneseq
    %v1341 = vshrl.u32 %v1340, 7
    %v1342 = vsub.s32 %v1339, %v1341
    %v1343 = vrot.slane %v1321, %v1342
    %v1345 = vunpack.c.l.s4 1966171168
    %v1346 = vunpack.c.0.s8 %v1345
    %v1347 = vlaneseq
    %v1348 = vshrl.u32 %v1347, 7
    %v1349 = vsub.s32 %v1346, %v1348
    %v1350 = vrot.slane %v1322, %v1349
    %v1351 = vcombine.high %v1329, %v1329
    %v1352 = vcombine.high %v1336, %v1336
    %v1353 = vcombine.high %v1343, %v1343
    %v1354 = vcombine.high %v1350, %v1350
    %v1355 = vrot.slane %v269, 4
    %v1356 = vrot.slane %v270, 3
    %v1357 = vsel %vm286, %v1356, %v1355
    %v1358 = vrot.slane %v271, 2
    %v1359 = vsel %vm289, %v1358, %v1357
    %v1360 = vrot.slane %v272, 1
    %v1361 = vsel %vm292, %v1360, %v1359
    %v1362 = vsel %vm295, %v273, %v1361
    %v1363 = vrot.slane %v274, 7
    %v1364 = vsel %vm298, %v1363, %v1362
    %v1365 = vrot.slane %v275, 6
    %v1366 = vsel %vm301, %v1365, %v1364
    %v1367 = vrot.slane %v276, 5
    %v1368 = vsel %vm304, %v1367, %v1366
    %v1369 = vsel %vm306, %v1368, 0
    %1371 = vmatprep.subr.mxu0 0.0
    %1372 = vmatpush1.msra.mxu0 0.0
    %1373 = vmatprep.subr.mxu0 0.0
    %1374 = vmatpush1.msra.mxu0 0.0
    %1375 = vmatprep.subr.mxu0 0.0
    %1376 = vmatpush1.msra.mxu0 0.0
    %1377 = vmatprep.subr.mxu0 0.0
    %1378 = vmatpush1.msra.mxu0 0.0
    %1379 = vmatprep.subr.mxu0 0.0
    %1380 = vmatpush1.msra.mxu0 0.0
    %1381 = vmatprep.subr.mxu0 0.0
    %1382 = vmatpush1.msra.mxu0 0.0
    %1383 = vmatprep.subr.mxu0 0.0
    %1384 = vmatpush1.msra.mxu0 0.0
    %1385 = vmatprep.subr.mxu0 0.0
    %1386 = vmatpush1.msra.mxu0 0.0
    %1387 = vmatprep.subr.mxu0 0.0
    %1388 = vmatpush1.msra.mxu0 0.0
    %1389 = vmatprep.subr.mxu0 0.0
    %1390 = vmatpush1.msra.mxu0 0.0
    %1391 = vmatprep.subr.mxu0 0.0
    %1392 = vmatpush1.msra.mxu0 0.0
    %1393 = vmatprep.subr.mxu0 0.0
    %1394 = vmatpush1.msra.mxu0 0.0
    %1395 = vmatprep.subr.mxu0 0.0
    %1396 = vmatpush1.msra.mxu0 0.0
    %1397 = vmatprep.subr.mxu0 0.0
    %1398 = vmatpush1.msra.mxu0 0.0
    %1399 = vmatprep.subr.mxu0 0.0
    %v1400 = vand.u32 %v311, 4294901760
    %1401 = vmatpush1.msra.mxu0 %v1400
    %1402 = vmatprep.subr.mxu0 0.0
    %v1403 = vand.u32 %v219, 4294901760
    %1404 = vmatpush1.msra.mxu0 %v1403
    %1405 = vmatprep.subr.mxu0 0.0
    %1406 = vmatpush2.msra.mxu0 0.0
    %1407 = vmatprep.subr.mxu0 0.0
    %1408 = vmatpush2.msra.mxu0 0.0
    %1409 = vmatprep.subr.mxu0 0.0
    %1410 = vmatpush2.msra.mxu0 0.0
    %1411 = vmatprep.subr.mxu0 0.0
    %1412 = vmatpush2.msra.mxu0 0.0
    %1413 = vmatprep.subr.mxu0 0.0
    %1414 = vmatpush2.msra.mxu0 0.0
    %1415 = vmatprep.subr.mxu0 0.0
    %1416 = vmatpush2.msra.mxu0 0.0
    %1417 = vmatprep.subr.mxu0 0.0
    %1418 = vmatpush2.msra.mxu0 0.0
    %1419 = vmatprep.subr.mxu0 0.0
    %1420 = vmatpush2.msra.mxu0 0.0
    %1421 = vmatprep.subr.mxu0 0.0
    %1422 = vmatpush2.msra.mxu0 0.0
    %1423 = vmatprep.subr.mxu0 0.0
    %1424 = vmatpush2.msra.mxu0 0.0
    %1425 = vmatprep.subr.mxu0 0.0
    %1426 = vmatpush2.msra.mxu0 0.0
    %1427 = vmatprep.subr.mxu0 0.0
    %1428 = vmatpush2.msra.mxu0 0.0
    %1429 = vmatprep.subr.mxu0 0.0
    %1430 = vmatpush2.msra.mxu0 0.0
    %1431 = vmatprep.subr.mxu0 0.0
    %1432 = vmatpush2.msra.mxu0 0.0
    %1433 = vmatprep.subr.mxu0 0.0
    %1434 = vmatpush2.msra.mxu0 0.0
    %1435 = vmatprep.subr.mxu0 0.0
    %1436 = vmatpush2.msra.mxu0 0.0
    %1437 = vmatprep.mubr.f32.mxu0 0.0
    %v1438 = vand.u32 %v1369, 4294901760
    %v1439 = vsub.f32 %v1369, %v1438
    %v1440 = vand.u32 %v1439, 4294901760
    %v1441 = vsub.f32 %v1439, %v1440
    %v1442 = vand.u32 %v1441, 4294901760
    %1443 = vmatmul.mubr.f32.gmra.mxu0 %v1442
    %v1444 = vpop.f32.mrf.mxu0
    %v1445 = vadd.f32 0.0, %v1444
    %v1446 = vpop.f32.mrf.mxu0
    %1447 = vdwg.mxu0
    %1448 = vmatprep.subr.mxu0 0.0
    %1449 = vmatpush1.msra.mxu0 0.0
    %1450 = vmatprep.subr.mxu0 0.0
    %1451 = vmatpush1.msra.mxu0 0.0
    %1452 = vmatprep.subr.mxu0 0.0
    %1453 = vmatpush1.msra.mxu0 0.0
    %1454 = vmatprep.subr.mxu0 0.0
    %1455 = vmatpush1.msra.mxu0 0.0
    %1456 = vmatprep.subr.mxu0 0.0
    %1457 = vmatpush1.msra.mxu0 0.0
    %1458 = vmatprep.subr.mxu0 0.0
    %1459 = vmatpush1.msra.mxu0 0.0
    %1460 = vmatprep.subr.mxu0 0.0
    %1461 = vmatpush1.msra.mxu0 0.0
    %1462 = vmatprep.subr.mxu0 0.0
    %1463 = vmatpush1.msra.mxu0 0.0
    %1464 = vmatprep.subr.mxu0 0.0
    %1465 = vmatpush1.msra.mxu0 0.0
    %1466 = vmatprep.subr.mxu0 0.0
    %1467 = vmatpush1.msra.mxu0 0.0
    %1468 = vmatprep.subr.mxu0 0.0
    %1469 = vmatpush1.msra.mxu0 0.0
    %1470 = vmatprep.subr.mxu0 0.0
    %1471 = vmatpush1.msra.mxu0 0.0
    %1472 = vmatprep.subr.mxu0 0.0
    %1473 = vmatpush1.msra.mxu0 0.0
    %1474 = vmatprep.subr.mxu0 0.0
    %1475 = vmatpush1.msra.mxu0 0.0
    %1476 = vmatprep.subr.mxu0 0.0
    %v1477 = vand.u32 %v311, 4294901760
    %v1478 = vsub.f32 %v311, %v1477
    %v1479 = vand.u32 %v1478, 4294901760
    %v1480 = vsub.f32 %v1478, %v1479
    %v1481 = vand.u32 %v1480, 4294901760
    %1482 = vmatpush1.msra.mxu0 %v1481
    %1483 = vmatprep.subr.mxu0 0.0
    %v1484 = vand.u32 %v219, 4294901760
    %v1485 = vsub.f32 %v219, %v1484
    %v1486 = vand.u32 %v1485, 4294901760
    %v1487 = vsub.f32 %v1485, %v1486
    %v1488 = vand.u32 %v1487, 4294901760
    %1489 = vmatpush1.msra.mxu0 %v1488
    %1490 = vmatprep.subr.mxu0 0.0
    %1491 = vmatpush2.msra.mxu0 0.0
    %1492 = vmatprep.subr.mxu0 0.0
    %1493 = vmatpush2.msra.mxu0 0.0
    %1494 = vmatprep.subr.mxu0 0.0
    %1495 = vmatpush2.msra.mxu0 0.0
    %1496 = vmatprep.subr.mxu0 0.0
    %1497 = vmatpush2.msra.mxu0 0.0
    %1498 = vmatprep.subr.mxu0 0.0
    %1499 = vmatpush2.msra.mxu0 0.0
    %1500 = vmatprep.subr.mxu0 0.0
    %1501 = vmatpush2.msra.mxu0 0.0
    %1502 = vmatprep.subr.mxu0 0.0
    %1503 = vmatpush2.msra.mxu0 0.0
    %1504 = vmatprep.subr.mxu0 0.0
    %1505 = vmatpush2.msra.mxu0 0.0
    %1506 = vmatprep.subr.mxu0 0.0
    %1507 = vmatpush2.msra.mxu0 0.0
    %1508 = vmatprep.subr.mxu0 0.0
    %1509 = vmatpush2.msra.mxu0 0.0
    %1510 = vmatprep.subr.mxu0 0.0
    %1511 = vmatpush2.msra.mxu0 0.0
    %1512 = vmatprep.subr.mxu0 0.0
    %1513 = vmatpush2.msra.mxu0 0.0
    %1514 = vmatprep.subr.mxu0 0.0
    %1515 = vmatpush2.msra.mxu0 0.0
    %1516 = vmatprep.subr.mxu0 0.0
    %1517 = vmatpush2.msra.mxu0 0.0
    %1518 = vmatprep.subr.mxu0 0.0
    %1519 = vmatpush2.msra.mxu0 0.0
    %1520 = vmatprep.subr.mxu0 0.0
    %1521 = vmatpush2.msra.mxu0 0.0
    %1522 = vmatprep.mubr.f32.mxu0 0.0
    %v1523 = vand.u32 %v1369, 4294901760
    %1524 = vmatmul.mubr.f32.gmra.mxu0 %v1523
    %v1525 = vpop.f32.mrf.mxu0
    %v1526 = vadd.f32 %v1445, %v1525
    %v1527 = vpop.f32.mrf.mxu0
    %1528 = vdwg.mxu0
    %1529 = vmatprep.subr.mxu0 0.0
    %1530 = vmatpush1.msra.mxu0 0.0
    %1531 = vmatprep.subr.mxu0 0.0
    %1532 = vmatpush1.msra.mxu0 0.0
    %1533 = vmatprep.subr.mxu0 0.0
    %1534 = vmatpush1.msra.mxu0 0.0
    %1535 = vmatprep.subr.mxu0 0.0
    %1536 = vmatpush1.msra.mxu0 0.0
    %1537 = vmatprep.subr.mxu0 0.0
    %1538 = vmatpush1.msra.mxu0 0.0
    %1539 = vmatprep.subr.mxu0 0.0
    %1540 = vmatpush1.msra.mxu0 0.0
    %1541 = vmatprep.subr.mxu0 0.0
    %1542 = vmatpush1.msra.mxu0 0.0
    %1543 = vmatprep.subr.mxu0 0.0
    %1544 = vmatpush1.msra.mxu0 0.0
    %1545 = vmatprep.subr.mxu0 0.0
    %1546 = vmatpush1.msra.mxu0 0.0
    %1547 = vmatprep.subr.mxu0 0.0
    %1548 = vmatpush1.msra.mxu0 0.0
    %1549 = vmatprep.subr.mxu0 0.0
    %1550 = vmatpush1.msra.mxu0 0.0
    %1551 = vmatprep.subr.mxu0 0.0
    %1552 = vmatpush1.msra.mxu0 0.0
    %1553 = vmatprep.subr.mxu0 0.0
    %1554 = vmatpush1.msra.mxu0 0.0
    %1555 = vmatprep.subr.mxu0 0.0
    %1556 = vmatpush1.msra.mxu0 0.0
    %1557 = vmatprep.subr.mxu0 0.0
    %v1558 = vand.u32 %v311, 4294901760
    %v1559 = vsub.f32 %v311, %v1558
    %1560 = vmatpush1.msra.mxu0 %v1559
    %1561 = vmatprep.subr.mxu0 0.0
    %v1562 = vand.u32 %v219, 4294901760
    %v1563 = vsub.f32 %v219, %v1562
    %1564 = vmatpush1.msra.mxu0 %v1563
    %1565 = vmatprep.subr.mxu0 0.0
    %1566 = vmatpush2.msra.mxu0 0.0
    %1567 = vmatprep.subr.mxu0 0.0
    %1568 = vmatpush2.msra.mxu0 0.0
    %1569 = vmatprep.subr.mxu0 0.0
    %1570 = vmatpush2.msra.mxu0 0.0
    %1571 = vmatprep.subr.mxu0 0.0
    %1572 = vmatpush2.msra.mxu0 0.0
    %1573 = vmatprep.subr.mxu0 0.0
    %1574 = vmatpush2.msra.mxu0 0.0
    %1575 = vmatprep.subr.mxu0 0.0
    %1576 = vmatpush2.msra.mxu0 0.0
    %1577 = vmatprep.subr.mxu0 0.0
    %1578 = vmatpush2.msra.mxu0 0.0
    %1579 = vmatprep.subr.mxu0 0.0
    %1580 = vmatpush2.msra.mxu0 0.0
    %1581 = vmatprep.subr.mxu0 0.0
    %1582 = vmatpush2.msra.mxu0 0.0
    %1583 = vmatprep.subr.mxu0 0.0
    %1584 = vmatpush2.msra.mxu0 0.0
    %1585 = vmatprep.subr.mxu0 0.0
    %1586 = vmatpush2.msra.mxu0 0.0
    %1587 = vmatprep.subr.mxu0 0.0
    %1588 = vmatpush2.msra.mxu0 0.0
    %1589 = vmatprep.subr.mxu0 0.0
    %1590 = vmatpush2.msra.mxu0 0.0
    %1591 = vmatprep.subr.mxu0 0.0
    %1592 = vmatpush2.msra.mxu0 0.0
    %1593 = vmatprep.subr.mxu0 0.0
    %1594 = vmatpush2.msra.mxu0 0.0
    %1595 = vmatprep.subr.mxu0 0.0
    %1596 = vmatpush2.msra.mxu0 0.0
    %1597 = vmatprep.mubr.f32.mxu0 0.0
    %v1598 = vand.u32 %v1369, 4294901760
    %v1599 = vsub.f32 %v1369, %v1598
    %1600 = vmatmul.mubr.f32.gmra.mxu0 %v1599
    %v1601 = vpop.f32.mrf.mxu0
    %v1602 = vadd.f32 %v1526, %v1601
    %v1603 = vpop.f32.mrf.mxu0
    %1604 = vdwg.mxu0
    %1605 = vmatprep.subr.mxu0 0.0
    %1606 = vmatpush1.msra.mxu0 0.0
    %1607 = vmatprep.subr.mxu0 0.0
    %1608 = vmatpush1.msra.mxu0 0.0
    %1609 = vmatprep.subr.mxu0 0.0
    %1610 = vmatpush1.msra.mxu0 0.0
    %1611 = vmatprep.subr.mxu0 0.0
    %1612 = vmatpush1.msra.mxu0 0.0
    %1613 = vmatprep.subr.mxu0 0.0
    %1614 = vmatpush1.msra.mxu0 0.0
    %1615 = vmatprep.subr.mxu0 0.0
    %1616 = vmatpush1.msra.mxu0 0.0
    %1617 = vmatprep.subr.mxu0 0.0
    %1618 = vmatpush1.msra.mxu0 0.0
    %1619 = vmatprep.subr.mxu0 0.0
    %1620 = vmatpush1.msra.mxu0 0.0
    %1621 = vmatprep.subr.mxu0 0.0
    %1622 = vmatpush1.msra.mxu0 0.0
    %1623 = vmatprep.subr.mxu0 0.0
    %1624 = vmatpush1.msra.mxu0 0.0
    %1625 = vmatprep.subr.mxu0 0.0
    %1626 = vmatpush1.msra.mxu0 0.0
    %1627 = vmatprep.subr.mxu0 0.0
    %1628 = vmatpush1.msra.mxu0 0.0
    %1629 = vmatprep.subr.mxu0 0.0
    %1630 = vmatpush1.msra.mxu0 0.0
    %1631 = vmatprep.subr.mxu0 0.0
    %1632 = vmatpush1.msra.mxu0 0.0
    %1633 = vmatprep.subr.mxu0 0.0
    %v1634 = vand.u32 %v311, 4294901760
    %1635 = vmatpush1.msra.mxu0 %v1634
    %1636 = vmatprep.subr.mxu0 0.0
    %v1637 = vand.u32 %v219, 4294901760
    %1638 = vmatpush1.msra.mxu0 %v1637
    %1639 = vmatprep.subr.mxu0 0.0
    %1640 = vmatpush2.msra.mxu0 0.0
    %1641 = vmatprep.subr.mxu0 0.0
    %1642 = vmatpush2.msra.mxu0 0.0
    %1643 = vmatprep.subr.mxu0 0.0
    %1644 = vmatpush2.msra.mxu0 0.0
    %1645 = vmatprep.subr.mxu0 0.0
    %1646 = vmatpush2.msra.mxu0 0.0
    %1647 = vmatprep.subr.mxu0 0.0
    %1648 = vmatpush2.msra.mxu0 0.0
    %1649 = vmatprep.subr.mxu0 0.0
    %1650 = vmatpush2.msra.mxu0 0.0
    %1651 = vmatprep.subr.mxu0 0.0
    %1652 = vmatpush2.msra.mxu0 0.0
    %1653 = vmatprep.subr.mxu0 0.0
    %1654 = vmatpush2.msra.mxu0 0.0
    %1655 = vmatprep.subr.mxu0 0.0
    %1656 = vmatpush2.msra.mxu0 0.0
    %1657 = vmatprep.subr.mxu0 0.0
    %1658 = vmatpush2.msra.mxu0 0.0
    %1659 = vmatprep.subr.mxu0 0.0
    %1660 = vmatpush2.msra.mxu0 0.0
    %1661 = vmatprep.subr.mxu0 0.0
    %1662 = vmatpush2.msra.mxu0 0.0
    %1663 = vmatprep.subr.mxu0 0.0
    %1664 = vmatpush2.msra.mxu0 0.0
    %1665 = vmatprep.subr.mxu0 0.0
    %1666 = vmatpush2.msra.mxu0 0.0
    %1667 = vmatprep.subr.mxu0 0.0
    %1668 = vmatpush2.msra.mxu0 0.0
    %1669 = vmatprep.subr.mxu0 0.0
    %1670 = vmatpush2.msra.mxu0 0.0
    %1671 = vmatprep.mubr.f32.mxu0 0.0
    %v1672 = vand.u32 %v1369, 4294901760
    %v1673 = vsub.f32 %v1369, %v1672
    %v1674 = vand.u32 %v1673, 4294901760
    %1675 = vmatmul.mubr.f32.gmra.mxu0 %v1674
    %v1676 = vpop.f32.mrf.mxu0
    %v1677 = vadd.f32 %v1602, %v1676
    %v1678 = vpop.f32.mrf.mxu0
    %1679 = vdwg.mxu0
    %1680 = vmatprep.subr.mxu0 0.0
    %1681 = vmatpush1.msra.mxu0 0.0
    %1682 = vmatprep.subr.mxu0 0.0
    %1683 = vmatpush1.msra.mxu0 0.0
    %1684 = vmatprep.subr.mxu0 0.0
    %1685 = vmatpush1.msra.mxu0 0.0
    %1686 = vmatprep.subr.mxu0 0.0
    %1687 = vmatpush1.msra.mxu0 0.0
    %1688 = vmatprep.subr.mxu0 0.0
    %1689 = vmatpush1.msra.mxu0 0.0
    %1690 = vmatprep.subr.mxu0 0.0
    %1691 = vmatpush1.msra.mxu0 0.0
    %1692 = vmatprep.subr.mxu0 0.0
    %1693 = vmatpush1.msra.mxu0 0.0
    %1694 = vmatprep.subr.mxu0 0.0
    %1695 = vmatpush1.msra.mxu0 0.0
    %1696 = vmatprep.subr.mxu0 0.0
    %1697 = vmatpush1.msra.mxu0 0.0
    %1698 = vmatprep.subr.mxu0 0.0
    %1699 = vmatpush1.msra.mxu0 0.0
    %1700 = vmatprep.subr.mxu0 0.0
    %1701 = vmatpush1.msra.mxu0 0.0
    %1702 = vmatprep.subr.mxu0 0.0
    %1703 = vmatpush1.msra.mxu0 0.0
    %1704 = vmatprep.subr.mxu0 0.0
    %1705 = vmatpush1.msra.mxu0 0.0
    %1706 = vmatprep.subr.mxu0 0.0
    %1707 = vmatpush1.msra.mxu0 0.0
    %1708 = vmatprep.subr.mxu0 0.0
    %v1709 = vand.u32 %v311, 4294901760
    %v1710 = vsub.f32 %v311, %v1709
    %v1711 = vand.u32 %v1710, 4294901760
    %1712 = vmatpush1.msra.mxu0 %v1711
    %1713 = vmatprep.subr.mxu0 0.0
    %v1714 = vand.u32 %v219, 4294901760
    %v1715 = vsub.f32 %v219, %v1714
    %v1716 = vand.u32 %v1715, 4294901760
    %1717 = vmatpush1.msra.mxu0 %v1716
    %1718 = vmatprep.subr.mxu0 0.0
    %1719 = vmatpush2.msra.mxu0 0.0
    %1720 = vmatprep.subr.mxu0 0.0
    %1721 = vmatpush2.msra.mxu0 0.0
    %1722 = vmatprep.subr.mxu0 0.0
    %1723 = vmatpush2.msra.mxu0 0.0
    %1724 = vmatprep.subr.mxu0 0.0
    %1725 = vmatpush2.msra.mxu0 0.0
    %1726 = vmatprep.subr.mxu0 0.0
    %1727 = vmatpush2.msra.mxu0 0.0
    %1728 = vmatprep.subr.mxu0 0.0
    %1729 = vmatpush2.msra.mxu0 0.0
    %1730 = vmatprep.subr.mxu0 0.0
    %1731 = vmatpush2.msra.mxu0 0.0
    %1732 = vmatprep.subr.mxu0 0.0
    %1733 = vmatpush2.msra.mxu0 0.0
    %1734 = vmatprep.subr.mxu0 0.0
    %1735 = vmatpush2.msra.mxu0 0.0
    %1736 = vmatprep.subr.mxu0 0.0
    %1737 = vmatpush2.msra.mxu0 0.0
    %1738 = vmatprep.subr.mxu0 0.0
    %1739 = vmatpush2.msra.mxu0 0.0
    %1740 = vmatprep.subr.mxu0 0.0
    %1741 = vmatpush2.msra.mxu0 0.0
    %1742 = vmatprep.subr.mxu0 0.0
    %1743 = vmatpush2.msra.mxu0 0.0
    %1744 = vmatprep.subr.mxu0 0.0
    %1745 = vmatpush2.msra.mxu0 0.0
    %1746 = vmatprep.subr.mxu0 0.0
    %1747 = vmatpush2.msra.mxu0 0.0
    %1748 = vmatprep.subr.mxu0 0.0
    %1749 = vmatpush2.msra.mxu0 0.0
    %1750 = vmatprep.mubr.f32.mxu0 0.0
    %v1751 = vand.u32 %v1369, 4294901760
    %1752 = vmatmul.mubr.f32.gmra.mxu0 %v1751
    %v1753 = vpop.f32.mrf.mxu0
    %v1754 = vadd.f32 %v1677, %v1753
    %v1755 = vpop.f32.mrf.mxu0
    %1756 = vdwg.mxu0
    %1757 = vmatprep.subr.mxu0 0.0
    %1758 = vmatpush1.msra.mxu0 0.0
    %1759 = vmatprep.subr.mxu0 0.0
    %1760 = vmatpush1.msra.mxu0 0.0
    %1761 = vmatprep.subr.mxu0 0.0
    %1762 = vmatpush1.msra.mxu0 0.0
    %1763 = vmatprep.subr.mxu0 0.0
    %1764 = vmatpush1.msra.mxu0 0.0
    %1765 = vmatprep.subr.mxu0 0.0
    %1766 = vmatpush1.msra.mxu0 0.0
    %1767 = vmatprep.subr.mxu0 0.0
    %1768 = vmatpush1.msra.mxu0 0.0
    %1769 = vmatprep.subr.mxu0 0.0
    %1770 = vmatpush1.msra.mxu0 0.0
    %1771 = vmatprep.subr.mxu0 0.0
    %1772 = vmatpush1.msra.mxu0 0.0
    %1773 = vmatprep.subr.mxu0 0.0
    %1774 = vmatpush1.msra.mxu0 0.0
    %1775 = vmatprep.subr.mxu0 0.0
    %1776 = vmatpush1.msra.mxu0 0.0
    %1777 = vmatprep.subr.mxu0 0.0
    %1778 = vmatpush1.msra.mxu0 0.0
    %1779 = vmatprep.subr.mxu0 0.0
    %1780 = vmatpush1.msra.mxu0 0.0
    %1781 = vmatprep.subr.mxu0 0.0
    %1782 = vmatpush1.msra.mxu0 0.0
    %1783 = vmatprep.subr.mxu0 0.0
    %1784 = vmatpush1.msra.mxu0 0.0
    %1785 = vmatprep.subr.mxu0 0.0
    %v1786 = vand.u32 %v311, 4294901760
    %1787 = vmatpush1.msra.mxu0 %v1786
    %1788 = vmatprep.subr.mxu0 0.0
    %v1789 = vand.u32 %v219, 4294901760
    %1790 = vmatpush1.msra.mxu0 %v1789
    %1791 = vmatprep.subr.mxu0 0.0
    %1792 = vmatpush2.msra.mxu0 0.0
    %1793 = vmatprep.subr.mxu0 0.0
    %1794 = vmatpush2.msra.mxu0 0.0
    %1795 = vmatprep.subr.mxu0 0.0
    %1796 = vmatpush2.msra.mxu0 0.0
    %1797 = vmatprep.subr.mxu0 0.0
    %1798 = vmatpush2.msra.mxu0 0.0
    %1799 = vmatprep.subr.mxu0 0.0
    %1800 = vmatpush2.msra.mxu0 0.0
    %1801 = vmatprep.subr.mxu0 0.0
    %1802 = vmatpush2.msra.mxu0 0.0
    %1803 = vmatprep.subr.mxu0 0.0
    %1804 = vmatpush2.msra.mxu0 0.0
    %1805 = vmatprep.subr.mxu0 0.0
    %1806 = vmatpush2.msra.mxu0 0.0
    %1807 = vmatprep.subr.mxu0 0.0
    %1808 = vmatpush2.msra.mxu0 0.0
    %1809 = vmatprep.subr.mxu0 0.0
    %1810 = vmatpush2.msra.mxu0 0.0
    %1811 = vmatprep.subr.mxu0 0.0
    %1812 = vmatpush2.msra.mxu0 0.0
    %1813 = vmatprep.subr.mxu0 0.0
    %1814 = vmatpush2.msra.mxu0 0.0
    %1815 = vmatprep.subr.mxu0 0.0
    %1816 = vmatpush2.msra.mxu0 0.0
    %1817 = vmatprep.subr.mxu0 0.0
    %1818 = vmatpush2.msra.mxu0 0.0
    %1819 = vmatprep.subr.mxu0 0.0
    %1820 = vmatpush2.msra.mxu0 0.0
    %1821 = vmatprep.subr.mxu0 0.0
    %1822 = vmatpush2.msra.mxu0 0.0
    %1823 = vmatprep.mubr.f32.mxu0 0.0
    %v1824 = vand.u32 %v1369, 4294901760
    %1825 = vmatmul.mubr.f32.gmra.mxu0 %v1824
    %v1826 = vpop.f32.mrf.mxu0
    %v1827 = vadd.f32 %v1754, %v1826
    %v1828 = vpop.f32.mrf.mxu0
    %1829 = vdwg.mxu0
    %v1831 = vcombine.high %v1827, %v1827
    %v1833 = vunpack.c.l.s4 1966171168
    %v1834 = vunpack.c.0.s8 %v1833
    %v1835 = vlaneseq
    %v1836 = vshrl.u32 %v1835, 7
    %v1837 = vsub.s32 %v1834, %v1836
    %v1838 = vrot.slane %v1827, %v1837
    %v1840 = vunpack.c.l.s4 1966171168
    %v1841 = vunpack.c.0.s8 %v1840
    %v1842 = vlaneseq
    %v1843 = vshrl.u32 %v1842, 7
    %v1844 = vsub.s32 %v1841, %v1843
    %v1845 = vrot.slane %v1831, %v1844
    %v1846 = vcombine.high %v1838, %v1838
    %v1847 = vcombine.high %v1845, %v1845
    %v1849 = vunpack.c.l.s4 1966171168
    %v1850 = vunpack.c.0.s8 %v1849
    %v1851 = vlaneseq
    %v1852 = vshrl.u32 %v1851, 7
    %v1853 = vsub.s32 %v1850, %v1852
    %v1854 = vrot.slane %v1838, %v1853
    %v1856 = vunpack.c.l.s4 1966171168
    %v1857 = vunpack.c.0.s8 %v1856
    %v1858 = vlaneseq
    %v1859 = vshrl.u32 %v1858, 7
    %v1860 = vsub.s32 %v1857, %v1859
    %v1861 = vrot.slane %v1845, %v1860
    %v1863 = vunpack.c.l.s4 1966171168
    %v1864 = vunpack.c.0.s8 %v1863
    %v1865 = vlaneseq
    %v1866 = vshrl.u32 %v1865, 7
    %v1867 = vsub.s32 %v1864, %v1866
    %v1868 = vrot.slane %v1846, %v1867
    %v1870 = vunpack.c.l.s4 1966171168
    %v1871 = vunpack.c.0.s8 %v1870
    %v1872 = vlaneseq
    %v1873 = vshrl.u32 %v1872, 7
    %v1874 = vsub.s32 %v1871, %v1873
    %v1875 = vrot.slane %v1847, %v1874
    %v1876 = vcombine.high %v1854, %v1854
    %v1877 = vcombine.high %v1861, %v1861
    %v1878 = vcombine.high %v1868, %v1868
    %v1879 = vcombine.high %v1875, %v1875
    %v1888 = vrot.slane %v193, 2
    %v1889 = vrot.slane %v196, 2
    %v1890 = vrot.slane %v198, 2
    %v1891 = vrot.slane %v200, 2
    %v1892 = vrot.slane %v202, 2
    %v1893 = vrot.slane %v204, 2
    %v1894 = vrot.slane %v206, 2
    %v1895 = vrot.slane %v208, 2
    %v1904 = vmax.f32 %v245, %v1888
    %v1905 = vmax.f32 %v246, %v1889
    %v1906 = vmax.f32 %v247, %v1890
    %v1907 = vmax.f32 %v248, %v1891
    %v1908 = vmax.f32 %v249, %v1892
    %v1909 = vmax.f32 %v250, %v1893
    %v1910 = vmax.f32 %v251, %v1894
    %v1911 = vmax.f32 %v252, %v1895
    %v1920 = vrot.slane %v1904, 6
    %v1921 = vrot.slane %v1905, 5
    %v1922 = vsel %vm286, %v1921, %v1920
    %v1923 = vrot.slane %v1906, 4
    %v1924 = vsel %vm289, %v1923, %v1922
    %v1925 = vrot.slane %v1907, 3
    %v1926 = vsel %vm292, %v1925, %v1924
    %v1927 = vrot.slane %v1908, 2
    %v1928 = vsel %vm295, %v1927, %v1926
    %v1929 = vrot.slane %v1909, 1
    %v1930 = vsel %vm298, %v1929, %v1928
    %v1931 = vsel %vm301, %v1910, %v1930
    %v1932 = vrot.slane %v1911, 7
    %v1933 = vsel %vm304, %v1932, %v1931
    %v1934 = vsel %vm306, %v1933, 0
    %1936 = vmatprep.subr.mxu0 0.0
    %1937 = vmatpush1.msra.mxu0 0.0
    %1938 = vmatprep.subr.mxu0 0.0
    %1939 = vmatpush1.msra.mxu0 0.0
    %1940 = vmatprep.subr.mxu0 0.0
    %1941 = vmatpush1.msra.mxu0 0.0
    %1942 = vmatprep.subr.mxu0 0.0
    %1943 = vmatpush1.msra.mxu0 0.0
    %1944 = vmatprep.subr.mxu0 0.0
    %1945 = vmatpush1.msra.mxu0 0.0
    %1946 = vmatprep.subr.mxu0 0.0
    %1947 = vmatpush1.msra.mxu0 0.0
    %1948 = vmatprep.subr.mxu0 0.0
    %1949 = vmatpush1.msra.mxu0 0.0
    %1950 = vmatprep.subr.mxu0 0.0
    %1951 = vmatpush1.msra.mxu0 0.0
    %1952 = vmatprep.subr.mxu0 0.0
    %1953 = vmatpush1.msra.mxu0 0.0
    %1954 = vmatprep.subr.mxu0 0.0
    %1955 = vmatpush1.msra.mxu0 0.0
    %1956 = vmatprep.subr.mxu0 0.0
    %1957 = vmatpush1.msra.mxu0 0.0
    %1958 = vmatprep.subr.mxu0 0.0
    %1959 = vmatpush1.msra.mxu0 0.0
    %1960 = vmatprep.subr.mxu0 0.0
    %1961 = vmatpush1.msra.mxu0 0.0
    %1962 = vmatprep.subr.mxu0 0.0
    %1963 = vmatpush1.msra.mxu0 0.0
    %1964 = vmatprep.subr.mxu0 0.0
    %v1965 = vand.u32 %v311, 4294901760
    %1966 = vmatpush1.msra.mxu0 %v1965
    %1967 = vmatprep.subr.mxu0 0.0
    %v1968 = vand.u32 %v219, 4294901760
    %1969 = vmatpush1.msra.mxu0 %v1968
    %1970 = vmatprep.subr.mxu0 0.0
    %1971 = vmatpush2.msra.mxu0 0.0
    %1972 = vmatprep.subr.mxu0 0.0
    %1973 = vmatpush2.msra.mxu0 0.0
    %1974 = vmatprep.subr.mxu0 0.0
    %1975 = vmatpush2.msra.mxu0 0.0
    %1976 = vmatprep.subr.mxu0 0.0
    %1977 = vmatpush2.msra.mxu0 0.0
    %1978 = vmatprep.subr.mxu0 0.0
    %1979 = vmatpush2.msra.mxu0 0.0
    %1980 = vmatprep.subr.mxu0 0.0
    %1981 = vmatpush2.msra.mxu0 0.0
    %1982 = vmatprep.subr.mxu0 0.0
    %1983 = vmatpush2.msra.mxu0 0.0
    %1984 = vmatprep.subr.mxu0 0.0
    %1985 = vmatpush2.msra.mxu0 0.0
    %1986 = vmatprep.subr.mxu0 0.0
    %1987 = vmatpush2.msra.mxu0 0.0
    %1988 = vmatprep.subr.mxu0 0.0
    %1989 = vmatpush2.msra.mxu0 0.0
    %1990 = vmatprep.subr.mxu0 0.0
    %1991 = vmatpush2.msra.mxu0 0.0
    %1992 = vmatprep.subr.mxu0 0.0
    %1993 = vmatpush2.msra.mxu0 0.0
    %1994 = vmatprep.subr.mxu0 0.0
    %1995 = vmatpush2.msra.mxu0 0.0
    %1996 = vmatprep.subr.mxu0 0.0
    %1997 = vmatpush2.msra.mxu0 0.0
    %1998 = vmatprep.subr.mxu0 0.0
    %1999 = vmatpush2.msra.mxu0 0.0
    %2000 = vmatprep.subr.mxu0 0.0
    %2001 = vmatpush2.msra.mxu0 0.0
    %2002 = vmatprep.mubr.f32.mxu0 0.0
    %v2003 = vand.u32 %v1934, 4294901760
    %v2004 = vsub.f32 %v1934, %v2003
    %v2005 = vand.u32 %v2004, 4294901760
    %v2006 = vsub.f32 %v2004, %v2005
    %v2007 = vand.u32 %v2006, 4294901760
    %2008 = vmatmul.mubr.f32.gmra.mxu0 %v2007
    %v2009 = vpop.f32.mrf.mxu0
    %v2010 = vadd.f32 0.0, %v2009
    %v2011 = vpop.f32.mrf.mxu0
    %2012 = vdwg.mxu0
    %2013 = vmatprep.subr.mxu0 0.0
    %2014 = vmatpush1.msra.mxu0 0.0
    %2015 = vmatprep.subr.mxu0 0.0
    %2016 = vmatpush1.msra.mxu0 0.0
    %2017 = vmatprep.subr.mxu0 0.0
    %2018 = vmatpush1.msra.mxu0 0.0
    %2019 = vmatprep.subr.mxu0 0.0
    %2020 = vmatpush1.msra.mxu0 0.0
    %2021 = vmatprep.subr.mxu0 0.0
    %2022 = vmatpush1.msra.mxu0 0.0
    %2023 = vmatprep.subr.mxu0 0.0
    %2024 = vmatpush1.msra.mxu0 0.0
    %2025 = vmatprep.subr.mxu0 0.0
    %2026 = vmatpush1.msra.mxu0 0.0
    %2027 = vmatprep.subr.mxu0 0.0
    %2028 = vmatpush1.msra.mxu0 0.0
    %2029 = vmatprep.subr.mxu0 0.0
    %2030 = vmatpush1.msra.mxu0 0.0
    %2031 = vmatprep.subr.mxu0 0.0
    %2032 = vmatpush1.msra.mxu0 0.0
    %2033 = vmatprep.subr.mxu0 0.0
    %2034 = vmatpush1.msra.mxu0 0.0
    %2035 = vmatprep.subr.mxu0 0.0
    %2036 = vmatpush1.msra.mxu0 0.0
    %2037 = vmatprep.subr.mxu0 0.0
    %2038 = vmatpush1.msra.mxu0 0.0
    %2039 = vmatprep.subr.mxu0 0.0
    %2040 = vmatpush1.msra.mxu0 0.0
    %2041 = vmatprep.subr.mxu0 0.0
    %v2042 = vand.u32 %v311, 4294901760
    %v2043 = vsub.f32 %v311, %v2042
    %v2044 = vand.u32 %v2043, 4294901760
    %v2045 = vsub.f32 %v2043, %v2044
    %v2046 = vand.u32 %v2045, 4294901760
    %2047 = vmatpush1.msra.mxu0 %v2046
    %2048 = vmatprep.subr.mxu0 0.0
    %v2049 = vand.u32 %v219, 4294901760
    %v2050 = vsub.f32 %v219, %v2049
    %v2051 = vand.u32 %v2050, 4294901760
    %v2052 = vsub.f32 %v2050, %v2051
    %v2053 = vand.u32 %v2052, 4294901760
    %2054 = vmatpush1.msra.mxu0 %v2053
    %2055 = vmatprep.subr.mxu0 0.0
    %2056 = vmatpush2.msra.mxu0 0.0
    %2057 = vmatprep.subr.mxu0 0.0
    %2058 = vmatpush2.msra.mxu0 0.0
    %2059 = vmatprep.subr.mxu0 0.0
    %2060 = vmatpush2.msra.mxu0 0.0
    %2061 = vmatprep.subr.mxu0 0.0
    %2062 = vmatpush2.msra.mxu0 0.0
    %2063 = vmatprep.subr.mxu0 0.0
    %2064 = vmatpush2.msra.mxu0 0.0
    %2065 = vmatprep.subr.mxu0 0.0
    %2066 = vmatpush2.msra.mxu0 0.0
    %2067 = vmatprep.subr.mxu0 0.0
    %2068 = vmatpush2.msra.mxu0 0.0
    %2069 = vmatprep.subr.mxu0 0.0
    %2070 = vmatpush2.msra.mxu0 0.0
    %2071 = vmatprep.subr.mxu0 0.0
    %2072 = vmatpush2.msra.mxu0 0.0
    %2073 = vmatprep.subr.mxu0 0.0
    %2074 = vmatpush2.msra.mxu0 0.0
    %2075 = vmatprep.subr.mxu0 0.0
    %2076 = vmatpush2.msra.mxu0 0.0
    %2077 = vmatprep.subr.mxu0 0.0
    %2078 = vmatpush2.msra.mxu0 0.0
    %2079 = vmatprep.subr.mxu0 0.0
    %2080 = vmatpush2.msra.mxu0 0.0
    %2081 = vmatprep.subr.mxu0 0.0
    %2082 = vmatpush2.msra.mxu0 0.0
    %2083 = vmatprep.subr.mxu0 0.0
    %2084 = vmatpush2.msra.mxu0 0.0
    %2085 = vmatprep.subr.mxu0 0.0
    %2086 = vmatpush2.msra.mxu0 0.0
    %2087 = vmatprep.mubr.f32.mxu0 0.0
    %v2088 = vand.u32 %v1934, 4294901760
    %2089 = vmatmul.mubr.f32.gmra.mxu0 %v2088
    %v2090 = vpop.f32.mrf.mxu0
    %v2091 = vadd.f32 %v2010, %v2090
    %v2092 = vpop.f32.mrf.mxu0
    %2093 = vdwg.mxu0
    %2094 = vmatprep.subr.mxu0 0.0
    %2095 = vmatpush1.msra.mxu0 0.0
    %2096 = vmatprep.subr.mxu0 0.0
    %2097 = vmatpush1.msra.mxu0 0.0
    %2098 = vmatprep.subr.mxu0 0.0
    %2099 = vmatpush1.msra.mxu0 0.0
    %2100 = vmatprep.subr.mxu0 0.0
    %2101 = vmatpush1.msra.mxu0 0.0
    %2102 = vmatprep.subr.mxu0 0.0
    %2103 = vmatpush1.msra.mxu0 0.0
    %2104 = vmatprep.subr.mxu0 0.0
    %2105 = vmatpush1.msra.mxu0 0.0
    %2106 = vmatprep.subr.mxu0 0.0
    %2107 = vmatpush1.msra.mxu0 0.0
    %2108 = vmatprep.subr.mxu0 0.0
    %2109 = vmatpush1.msra.mxu0 0.0
    %2110 = vmatprep.subr.mxu0 0.0
    %2111 = vmatpush1.msra.mxu0 0.0
    %2112 = vmatprep.subr.mxu0 0.0
    %2113 = vmatpush1.msra.mxu0 0.0
    %2114 = vmatprep.subr.mxu0 0.0
    %2115 = vmatpush1.msra.mxu0 0.0
    %2116 = vmatprep.subr.mxu0 0.0
    %2117 = vmatpush1.msra.mxu0 0.0
    %2118 = vmatprep.subr.mxu0 0.0
    %2119 = vmatpush1.msra.mxu0 0.0
    %2120 = vmatprep.subr.mxu0 0.0
    %2121 = vmatpush1.msra.mxu0 0.0
    %2122 = vmatprep.subr.mxu0 0.0
    %v2123 = vand.u32 %v311, 4294901760
    %v2124 = vsub.f32 %v311, %v2123
    %2125 = vmatpush1.msra.mxu0 %v2124
    %2126 = vmatprep.subr.mxu0 0.0
    %v2127 = vand.u32 %v219, 4294901760
    %v2128 = vsub.f32 %v219, %v2127
    %2129 = vmatpush1.msra.mxu0 %v2128
    %2130 = vmatprep.subr.mxu0 0.0
    %2131 = vmatpush2.msra.mxu0 0.0
    %2132 = vmatprep.subr.mxu0 0.0
    %2133 = vmatpush2.msra.mxu0 0.0
    %2134 = vmatprep.subr.mxu0 0.0
    %2135 = vmatpush2.msra.mxu0 0.0
    %2136 = vmatprep.subr.mxu0 0.0
    %2137 = vmatpush2.msra.mxu0 0.0
    %2138 = vmatprep.subr.mxu0 0.0
    %2139 = vmatpush2.msra.mxu0 0.0
    %2140 = vmatprep.subr.mxu0 0.0
    %2141 = vmatpush2.msra.mxu0 0.0
    %2142 = vmatprep.subr.mxu0 0.0
    %2143 = vmatpush2.msra.mxu0 0.0
    %2144 = vmatprep.subr.mxu0 0.0
    %2145 = vmatpush2.msra.mxu0 0.0
    %2146 = vmatprep.subr.mxu0 0.0
    %2147 = vmatpush2.msra.mxu0 0.0
    %2148 = vmatprep.subr.mxu0 0.0
    %2149 = vmatpush2.msra.mxu0 0.0
    %2150 = vmatprep.subr.mxu0 0.0
    %2151 = vmatpush2.msra.mxu0 0.0
    %2152 = vmatprep.subr.mxu0 0.0
    %2153 = vmatpush2.msra.mxu0 0.0
    %2154 = vmatprep.subr.mxu0 0.0
    %2155 = vmatpush2.msra.mxu0 0.0
    %2156 = vmatprep.subr.mxu0 0.0
    %2157 = vmatpush2.msra.mxu0 0.0
    %2158 = vmatprep.subr.mxu0 0.0
    %2159 = vmatpush2.msra.mxu0 0.0
    %2160 = vmatprep.subr.mxu0 0.0
    %2161 = vmatpush2.msra.mxu0 0.0
    %2162 = vmatprep.mubr.f32.mxu0 0.0
    %v2163 = vand.u32 %v1934, 4294901760
    %v2164 = vsub.f32 %v1934, %v2163
    %2165 = vmatmul.mubr.f32.gmra.mxu0 %v2164
    %v2166 = vpop.f32.mrf.mxu0
    %v2167 = vadd.f32 %v2091, %v2166
    %v2168 = vpop.f32.mrf.mxu0
    %2169 = vdwg.mxu0
    %2170 = vmatprep.subr.mxu0 0.0
    %2171 = vmatpush1.msra.mxu0 0.0
    %2172 = vmatprep.subr.mxu0 0.0
    %2173 = vmatpush1.msra.mxu0 0.0
    %2174 = vmatprep.subr.mxu0 0.0
    %2175 = vmatpush1.msra.mxu0 0.0
    %2176 = vmatprep.subr.mxu0 0.0
    %2177 = vmatpush1.msra.mxu0 0.0
    %2178 = vmatprep.subr.mxu0 0.0
    %2179 = vmatpush1.msra.mxu0 0.0
    %2180 = vmatprep.subr.mxu0 0.0
    %2181 = vmatpush1.msra.mxu0 0.0
    %2182 = vmatprep.subr.mxu0 0.0
    %2183 = vmatpush1.msra.mxu0 0.0
    %2184 = vmatprep.subr.mxu0 0.0
    %2185 = vmatpush1.msra.mxu0 0.0
    %2186 = vmatprep.subr.mxu0 0.0
    %2187 = vmatpush1.msra.mxu0 0.0
    %2188 = vmatprep.subr.mxu0 0.0
    %2189 = vmatpush1.msra.mxu0 0.0
    %2190 = vmatprep.subr.mxu0 0.0
    %2191 = vmatpush1.msra.mxu0 0.0
    %2192 = vmatprep.subr.mxu0 0.0
    %2193 = vmatpush1.msra.mxu0 0.0
    %2194 = vmatprep.subr.mxu0 0.0
    %2195 = vmatpush1.msra.mxu0 0.0
    %2196 = vmatprep.subr.mxu0 0.0
    %2197 = vmatpush1.msra.mxu0 0.0
    %2198 = vmatprep.subr.mxu0 0.0
    %v2199 = vand.u32 %v311, 4294901760
    %2200 = vmatpush1.msra.mxu0 %v2199
    %2201 = vmatprep.subr.mxu0 0.0
    %v2202 = vand.u32 %v219, 4294901760
    %2203 = vmatpush1.msra.mxu0 %v2202
    %2204 = vmatprep.subr.mxu0 0.0
    %2205 = vmatpush2.msra.mxu0 0.0
    %2206 = vmatprep.subr.mxu0 0.0
    %2207 = vmatpush2.msra.mxu0 0.0
    %2208 = vmatprep.subr.mxu0 0.0
    %2209 = vmatpush2.msra.mxu0 0.0
    %2210 = vmatprep.subr.mxu0 0.0
    %2211 = vmatpush2.msra.mxu0 0.0
    %2212 = vmatprep.subr.mxu0 0.0
    %2213 = vmatpush2.msra.mxu0 0.0
    %2214 = vmatprep.subr.mxu0 0.0
    %2215 = vmatpush2.msra.mxu0 0.0
    %2216 = vmatprep.subr.mxu0 0.0
    %2217 = vmatpush2.msra.mxu0 0.0
    %2218 = vmatprep.subr.mxu0 0.0
    %2219 = vmatpush2.msra.mxu0 0.0
    %2220 = vmatprep.subr.mxu0 0.0
    %2221 = vmatpush2.msra.mxu0 0.0
    %2222 = vmatprep.subr.mxu0 0.0
    %2223 = vmatpush2.msra.mxu0 0.0
    %2224 = vmatprep.subr.mxu0 0.0
    %2225 = vmatpush2.msra.mxu0 0.0
    %2226 = vmatprep.subr.mxu0 0.0
    %2227 = vmatpush2.msra.mxu0 0.0
    %2228 = vmatprep.subr.mxu0 0.0
    %2229 = vmatpush2.msra.mxu0 0.0
    %2230 = vmatprep.subr.mxu0 0.0
    %2231 = vmatpush2.msra.mxu0 0.0
    %2232 = vmatprep.subr.mxu0 0.0
    %2233 = vmatpush2.msra.mxu0 0.0
    %2234 = vmatprep.subr.mxu0 0.0
    %2235 = vmatpush2.msra.mxu0 0.0
    %2236 = vmatprep.mubr.f32.mxu0 0.0
    %v2237 = vand.u32 %v1934, 4294901760
    %v2238 = vsub.f32 %v1934, %v2237
    %v2239 = vand.u32 %v2238, 4294901760
    %2240 = vmatmul.mubr.f32.gmra.mxu0 %v2239
    %v2241 = vpop.f32.mrf.mxu0
    %v2242 = vadd.f32 %v2167, %v2241
    %v2243 = vpop.f32.mrf.mxu0
    %2244 = vdwg.mxu0
    %2245 = vmatprep.subr.mxu0 0.0
    %2246 = vmatpush1.msra.mxu0 0.0
    %2247 = vmatprep.subr.mxu0 0.0
    %2248 = vmatpush1.msra.mxu0 0.0
    %2249 = vmatprep.subr.mxu0 0.0
    %2250 = vmatpush1.msra.mxu0 0.0
    %2251 = vmatprep.subr.mxu0 0.0
    %2252 = vmatpush1.msra.mxu0 0.0
    %2253 = vmatprep.subr.mxu0 0.0
    %2254 = vmatpush1.msra.mxu0 0.0
    %2255 = vmatprep.subr.mxu0 0.0
    %2256 = vmatpush1.msra.mxu0 0.0
    %2257 = vmatprep.subr.mxu0 0.0
    %2258 = vmatpush1.msra.mxu0 0.0
    %2259 = vmatprep.subr.mxu0 0.0
    %2260 = vmatpush1.msra.mxu0 0.0
    %2261 = vmatprep.subr.mxu0 0.0
    %2262 = vmatpush1.msra.mxu0 0.0
    %2263 = vmatprep.subr.mxu0 0.0
    %2264 = vmatpush1.msra.mxu0 0.0
    %2265 = vmatprep.subr.mxu0 0.0
    %2266 = vmatpush1.msra.mxu0 0.0
    %2267 = vmatprep.subr.mxu0 0.0
    %2268 = vmatpush1.msra.mxu0 0.0
    %2269 = vmatprep.subr.mxu0 0.0
    %2270 = vmatpush1.msra.mxu0 0.0
    %2271 = vmatprep.subr.mxu0 0.0
    %2272 = vmatpush1.msra.mxu0 0.0
    %2273 = vmatprep.subr.mxu0 0.0
    %v2274 = vand.u32 %v311, 4294901760
    %v2275 = vsub.f32 %v311, %v2274
    %v2276 = vand.u32 %v2275, 4294901760
    %2277 = vmatpush1.msra.mxu0 %v2276
    %2278 = vmatprep.subr.mxu0 0.0
    %v2279 = vand.u32 %v219, 4294901760
    %v2280 = vsub.f32 %v219, %v2279
    %v2281 = vand.u32 %v2280, 4294901760
    %2282 = vmatpush1.msra.mxu0 %v2281
    %2283 = vmatprep.subr.mxu0 0.0
    %2284 = vmatpush2.msra.mxu0 0.0
    %2285 = vmatprep.subr.mxu0 0.0
    %2286 = vmatpush2.msra.mxu0 0.0
    %2287 = vmatprep.subr.mxu0 0.0
    %2288 = vmatpush2.msra.mxu0 0.0
    %2289 = vmatprep.subr.mxu0 0.0
    %2290 = vmatpush2.msra.mxu0 0.0
    %2291 = vmatprep.subr.mxu0 0.0
    %2292 = vmatpush2.msra.mxu0 0.0
    %2293 = vmatprep.subr.mxu0 0.0
    %2294 = vmatpush2.msra.mxu0 0.0
    %2295 = vmatprep.subr.mxu0 0.0
    %2296 = vmatpush2.msra.mxu0 0.0
    %2297 = vmatprep.subr.mxu0 0.0
    %2298 = vmatpush2.msra.mxu0 0.0
    %2299 = vmatprep.subr.mxu0 0.0
    %2300 = vmatpush2.msra.mxu0 0.0
    %2301 = vmatprep.subr.mxu0 0.0
    %2302 = vmatpush2.msra.mxu0 0.0
    %2303 = vmatprep.subr.mxu0 0.0
    %2304 = vmatpush2.msra.mxu0 0.0
    %2305 = vmatprep.subr.mxu0 0.0
    %2306 = vmatpush2.msra.mxu0 0.0
    %2307 = vmatprep.subr.mxu0 0.0
    %2308 = vmatpush2.msra.mxu0 0.0
    %2309 = vmatprep.subr.mxu0 0.0
    %2310 = vmatpush2.msra.mxu0 0.0
    %2311 = vmatprep.subr.mxu0 0.0
    %2312 = vmatpush2.msra.mxu0 0.0
    %2313 = vmatprep.subr.mxu0 0.0
    %2314 = vmatpush2.msra.mxu0 0.0
    %2315 = vmatprep.mubr.f32.mxu0 0.0
    %v2316 = vand.u32 %v1934, 4294901760
    %2317 = vmatmul.mubr.f32.gmra.mxu0 %v2316
    %v2318 = vpop.f32.mrf.mxu0
    %v2319 = vadd.f32 %v2242, %v2318
    %v2320 = vpop.f32.mrf.mxu0
    %2321 = vdwg.mxu0
    %2322 = vmatprep.subr.mxu0 0.0
    %2323 = vmatpush1.msra.mxu0 0.0
    %2324 = vmatprep.subr.mxu0 0.0
    %2325 = vmatpush1.msra.mxu0 0.0
    %2326 = vmatprep.subr.mxu0 0.0
    %2327 = vmatpush1.msra.mxu0 0.0
    %2328 = vmatprep.subr.mxu0 0.0
    %2329 = vmatpush1.msra.mxu0 0.0
    %2330 = vmatprep.subr.mxu0 0.0
    %2331 = vmatpush1.msra.mxu0 0.0
    %2332 = vmatprep.subr.mxu0 0.0
    %2333 = vmatpush1.msra.mxu0 0.0
    %2334 = vmatprep.subr.mxu0 0.0
    %2335 = vmatpush1.msra.mxu0 0.0
    %2336 = vmatprep.subr.mxu0 0.0
    %2337 = vmatpush1.msra.mxu0 0.0
    %2338 = vmatprep.subr.mxu0 0.0
    %2339 = vmatpush1.msra.mxu0 0.0
    %2340 = vmatprep.subr.mxu0 0.0
    %2341 = vmatpush1.msra.mxu0 0.0
    %2342 = vmatprep.subr.mxu0 0.0
    %2343 = vmatpush1.msra.mxu0 0.0
    %2344 = vmatprep.subr.mxu0 0.0
    %2345 = vmatpush1.msra.mxu0 0.0
    %2346 = vmatprep.subr.mxu0 0.0
    %2347 = vmatpush1.msra.mxu0 0.0
    %2348 = vmatprep.subr.mxu0 0.0
    %2349 = vmatpush1.msra.mxu0 0.0
    %2350 = vmatprep.subr.mxu0 0.0
    %v2351 = vand.u32 %v311, 4294901760
    %2352 = vmatpush1.msra.mxu0 %v2351
    %2353 = vmatprep.subr.mxu0 0.0
    %v2354 = vand.u32 %v219, 4294901760
    %2355 = vmatpush1.msra.mxu0 %v2354
    %2356 = vmatprep.subr.mxu0 0.0
    %2357 = vmatpush2.msra.mxu0 0.0
    %2358 = vmatprep.subr.mxu0 0.0
    %2359 = vmatpush2.msra.mxu0 0.0
    %2360 = vmatprep.subr.mxu0 0.0
    %2361 = vmatpush2.msra.mxu0 0.0
    %2362 = vmatprep.subr.mxu0 0.0
    %2363 = vmatpush2.msra.mxu0 0.0
    %2364 = vmatprep.subr.mxu0 0.0
    %2365 = vmatpush2.msra.mxu0 0.0
    %2366 = vmatprep.subr.mxu0 0.0
    %2367 = vmatpush2.msra.mxu0 0.0
    %2368 = vmatprep.subr.mxu0 0.0
    %2369 = vmatpush2.msra.mxu0 0.0
    %2370 = vmatprep.subr.mxu0 0.0
    %2371 = vmatpush2.msra.mxu0 0.0
    %2372 = vmatprep.subr.mxu0 0.0
    %2373 = vmatpush2.msra.mxu0 0.0
    %2374 = vmatprep.subr.mxu0 0.0
    %2375 = vmatpush2.msra.mxu0 0.0
    %2376 = vmatprep.subr.mxu0 0.0
    %2377 = vmatpush2.msra.mxu0 0.0
    %2378 = vmatprep.subr.mxu0 0.0
    %2379 = vmatpush2.msra.mxu0 0.0
    %2380 = vmatprep.subr.mxu0 0.0
    %2381 = vmatpush2.msra.mxu0 0.0
    %2382 = vmatprep.subr.mxu0 0.0
    %2383 = vmatpush2.msra.mxu0 0.0
    %2384 = vmatprep.subr.mxu0 0.0
    %2385 = vmatpush2.msra.mxu0 0.0
    %2386 = vmatprep.subr.mxu0 0.0
    %2387 = vmatpush2.msra.mxu0 0.0
    %2388 = vmatprep.mubr.f32.mxu0 0.0
    %v2389 = vand.u32 %v1934, 4294901760
    %2390 = vmatmul.mubr.f32.gmra.mxu0 %v2389
    %v2391 = vpop.f32.mrf.mxu0
    %v2392 = vadd.f32 %v2319, %v2391
    %v2393 = vpop.f32.mrf.mxu0
    %2394 = vdwg.mxu0
    %v2396 = vcombine.high %v2392, %v2392
    %v2398 = vunpack.c.l.s4 1966171168
    %v2399 = vunpack.c.0.s8 %v2398
    %v2400 = vlaneseq
    %v2401 = vshrl.u32 %v2400, 7
    %v2402 = vsub.s32 %v2399, %v2401
    %v2403 = vrot.slane %v2392, %v2402
    %v2405 = vunpack.c.l.s4 1966171168
    %v2406 = vunpack.c.0.s8 %v2405
    %v2407 = vlaneseq
    %v2408 = vshrl.u32 %v2407, 7
    %v2409 = vsub.s32 %v2406, %v2408
    %v2410 = vrot.slane %v2396, %v2409
    %v2411 = vcombine.high %v2403, %v2403
    %v2412 = vcombine.high %v2410, %v2410
    %v2414 = vunpack.c.l.s4 1966171168
    %v2415 = vunpack.c.0.s8 %v2414
    %v2416 = vlaneseq
    %v2417 = vshrl.u32 %v2416, 7
    %v2418 = vsub.s32 %v2415, %v2417
    %v2419 = vrot.slane %v2403, %v2418
    %v2421 = vunpack.c.l.s4 1966171168
    %v2422 = vunpack.c.0.s8 %v2421
    %v2423 = vlaneseq
    %v2424 = vshrl.u32 %v2423, 7
    %v2425 = vsub.s32 %v2422, %v2424
    %v2426 = vrot.slane %v2410, %v2425
    %v2428 = vunpack.c.l.s4 1966171168
    %v2429 = vunpack.c.0.s8 %v2428
    %v2430 = vlaneseq
    %v2431 = vshrl.u32 %v2430, 7
    %v2432 = vsub.s32 %v2429, %v2431
    %v2433 = vrot.slane %v2411, %v2432
    %v2435 = vunpack.c.l.s4 1966171168
    %v2436 = vunpack.c.0.s8 %v2435
    %v2437 = vlaneseq
    %v2438 = vshrl.u32 %v2437, 7
    %v2439 = vsub.s32 %v2436, %v2438
    %v2440 = vrot.slane %v2412, %v2439
    %v2441 = vcombine.high %v2419, %v2419
    %v2442 = vcombine.high %v2426, %v2426
    %v2443 = vcombine.high %v2433, %v2433
    %v2444 = vcombine.high %v2440, %v2440
    %v2445 = vrot.slane %v193, 1
    %v2446 = vrot.slane %v196, 1
    %v2447 = vrot.slane %v198, 1
    %v2448 = vrot.slane %v200, 1
    %v2449 = vrot.slane %v202, 1
    %v2450 = vrot.slane %v204, 1
    %v2451 = vrot.slane %v206, 1
    %v2452 = vrot.slane %v208, 1
    %v2461 = vmax.f32 %v193, %v2445
    %v2462 = vmax.f32 %v196, %v2446
    %v2463 = vmax.f32 %v198, %v2447
    %v2464 = vmax.f32 %v200, %v2448
    %v2465 = vmax.f32 %v202, %v2449
    %v2466 = vmax.f32 %v204, %v2450
    %v2467 = vmax.f32 %v206, %v2451
    %v2468 = vmax.f32 %v208, %v2452
    %v2469 = vmax.f32 %v2461, %v1888
    %v2470 = vmax.f32 %v2462, %v1889
    %v2471 = vmax.f32 %v2463, %v1890
    %v2472 = vmax.f32 %v2464, %v1891
    %v2473 = vmax.f32 %v2465, %v1892
    %v2474 = vmax.f32 %v2466, %v1893
    %v2475 = vmax.f32 %v2467, %v1894
    %v2476 = vmax.f32 %v2468, %v1895
    %v2485 = vrot.slane %v2470, 7
    %v2486 = vsel %vm286, %v2485, %v2469
    %v2487 = vrot.slane %v2471, 6
    %v2488 = vsel %vm289, %v2487, %v2486
    %v2489 = vrot.slane %v2472, 5
    %v2490 = vsel %vm292, %v2489, %v2488
    %v2491 = vrot.slane %v2473, 4
    %v2492 = vsel %vm295, %v2491, %v2490
    %v2493 = vrot.slane %v2474, 3
    %v2494 = vsel %vm298, %v2493, %v2492
    %v2495 = vrot.slane %v2475, 2
    %v2496 = vsel %vm301, %v2495, %v2494
    %v2497 = vrot.slane %v2476, 1
    %v2498 = vsel %vm304, %v2497, %v2496
    %v2499 = vsel %vm306, %v2498, 0
    %2501 = vmatprep.subr.mxu0 0.0
    %2502 = vmatpush1.msra.mxu0 0.0
    %2503 = vmatprep.subr.mxu0 0.0
    %2504 = vmatpush1.msra.mxu0 0.0
    %2505 = vmatprep.subr.mxu0 0.0
    %2506 = vmatpush1.msra.mxu0 0.0
    %2507 = vmatprep.subr.mxu0 0.0
    %2508 = vmatpush1.msra.mxu0 0.0
    %2509 = vmatprep.subr.mxu0 0.0
    %2510 = vmatpush1.msra.mxu0 0.0
    %2511 = vmatprep.subr.mxu0 0.0
    %2512 = vmatpush1.msra.mxu0 0.0
    %2513 = vmatprep.subr.mxu0 0.0
    %2514 = vmatpush1.msra.mxu0 0.0
    %2515 = vmatprep.subr.mxu0 0.0
    %2516 = vmatpush1.msra.mxu0 0.0
    %2517 = vmatprep.subr.mxu0 0.0
    %2518 = vmatpush1.msra.mxu0 0.0
    %2519 = vmatprep.subr.mxu0 0.0
    %2520 = vmatpush1.msra.mxu0 0.0
    %2521 = vmatprep.subr.mxu0 0.0
    %2522 = vmatpush1.msra.mxu0 0.0
    %2523 = vmatprep.subr.mxu0 0.0
    %2524 = vmatpush1.msra.mxu0 0.0
    %2525 = vmatprep.subr.mxu0 0.0
    %2526 = vmatpush1.msra.mxu0 0.0
    %2527 = vmatprep.subr.mxu0 0.0
    %2528 = vmatpush1.msra.mxu0 0.0
    %2529 = vmatprep.subr.mxu0 0.0
    %v2530 = vand.u32 %v311, 4294901760
    %2531 = vmatpush1.msra.mxu0 %v2530
    %2532 = vmatprep.subr.mxu0 0.0
    %v2533 = vand.u32 %v219, 4294901760
    %2534 = vmatpush1.msra.mxu0 %v2533
    %2535 = vmatprep.subr.mxu0 0.0
    %2536 = vmatpush2.msra.mxu0 0.0
    %2537 = vmatprep.subr.mxu0 0.0
    %2538 = vmatpush2.msra.mxu0 0.0
    %2539 = vmatprep.subr.mxu0 0.0
    %2540 = vmatpush2.msra.mxu0 0.0
    %2541 = vmatprep.subr.mxu0 0.0
    %2542 = vmatpush2.msra.mxu0 0.0
    %2543 = vmatprep.subr.mxu0 0.0
    %2544 = vmatpush2.msra.mxu0 0.0
    %2545 = vmatprep.subr.mxu0 0.0
    %2546 = vmatpush2.msra.mxu0 0.0
    %2547 = vmatprep.subr.mxu0 0.0
    %2548 = vmatpush2.msra.mxu0 0.0
    %2549 = vmatprep.subr.mxu0 0.0
    %2550 = vmatpush2.msra.mxu0 0.0
    %2551 = vmatprep.subr.mxu0 0.0
    %2552 = vmatpush2.msra.mxu0 0.0
    %2553 = vmatprep.subr.mxu0 0.0
    %2554 = vmatpush2.msra.mxu0 0.0
    %2555 = vmatprep.subr.mxu0 0.0
    %2556 = vmatpush2.msra.mxu0 0.0
    %2557 = vmatprep.subr.mxu0 0.0
    %2558 = vmatpush2.msra.mxu0 0.0
    %2559 = vmatprep.subr.mxu0 0.0
    %2560 = vmatpush2.msra.mxu0 0.0
    %2561 = vmatprep.subr.mxu0 0.0
    %2562 = vmatpush2.msra.mxu0 0.0
    %2563 = vmatprep.subr.mxu0 0.0
    %2564 = vmatpush2.msra.mxu0 0.0
    %2565 = vmatprep.subr.mxu0 0.0
    %2566 = vmatpush2.msra.mxu0 0.0
    %2567 = vmatprep.mubr.f32.mxu0 0.0
    %v2568 = vand.u32 %v2499, 4294901760
    %v2569 = vsub.f32 %v2499, %v2568
    %v2570 = vand.u32 %v2569, 4294901760
    %v2571 = vsub.f32 %v2569, %v2570
    %v2572 = vand.u32 %v2571, 4294901760
    %2573 = vmatmul.mubr.f32.gmra.mxu0 %v2572
    %v2574 = vpop.f32.mrf.mxu0
    %v2575 = vadd.f32 0.0, %v2574
    %v2576 = vpop.f32.mrf.mxu0
    %2577 = vdwg.mxu0
    %2578 = vmatprep.subr.mxu0 0.0
    %2579 = vmatpush1.msra.mxu0 0.0
    %2580 = vmatprep.subr.mxu0 0.0
    %2581 = vmatpush1.msra.mxu0 0.0
    %2582 = vmatprep.subr.mxu0 0.0
    %2583 = vmatpush1.msra.mxu0 0.0
    %2584 = vmatprep.subr.mxu0 0.0
    %2585 = vmatpush1.msra.mxu0 0.0
    %2586 = vmatprep.subr.mxu0 0.0
    %2587 = vmatpush1.msra.mxu0 0.0
    %2588 = vmatprep.subr.mxu0 0.0
    %2589 = vmatpush1.msra.mxu0 0.0
    %2590 = vmatprep.subr.mxu0 0.0
    %2591 = vmatpush1.msra.mxu0 0.0
    %2592 = vmatprep.subr.mxu0 0.0
    %2593 = vmatpush1.msra.mxu0 0.0
    %2594 = vmatprep.subr.mxu0 0.0
    %2595 = vmatpush1.msra.mxu0 0.0
    %2596 = vmatprep.subr.mxu0 0.0
    %2597 = vmatpush1.msra.mxu0 0.0
    %2598 = vmatprep.subr.mxu0 0.0
    %2599 = vmatpush1.msra.mxu0 0.0
    %2600 = vmatprep.subr.mxu0 0.0
    %2601 = vmatpush1.msra.mxu0 0.0
    %2602 = vmatprep.subr.mxu0 0.0
    %2603 = vmatpush1.msra.mxu0 0.0
    %2604 = vmatprep.subr.mxu0 0.0
    %2605 = vmatpush1.msra.mxu0 0.0
    %2606 = vmatprep.subr.mxu0 0.0
    %v2607 = vand.u32 %v311, 4294901760
    %v2608 = vsub.f32 %v311, %v2607
    %v2609 = vand.u32 %v2608, 4294901760
    %v2610 = vsub.f32 %v2608, %v2609
    %v2611 = vand.u32 %v2610, 4294901760
    %2612 = vmatpush1.msra.mxu0 %v2611
    %2613 = vmatprep.subr.mxu0 0.0
    %v2614 = vand.u32 %v219, 4294901760
    %v2615 = vsub.f32 %v219, %v2614
    %v2616 = vand.u32 %v2615, 4294901760
    %v2617 = vsub.f32 %v2615, %v2616
    %v2618 = vand.u32 %v2617, 4294901760
    %2619 = vmatpush1.msra.mxu0 %v2618
    %2620 = vmatprep.subr.mxu0 0.0
    %2621 = vmatpush2.msra.mxu0 0.0
    %2622 = vmatprep.subr.mxu0 0.0
    %2623 = vmatpush2.msra.mxu0 0.0
    %2624 = vmatprep.subr.mxu0 0.0
    %2625 = vmatpush2.msra.mxu0 0.0
    %2626 = vmatprep.subr.mxu0 0.0
    %2627 = vmatpush2.msra.mxu0 0.0
    %2628 = vmatprep.subr.mxu0 0.0
    %2629 = vmatpush2.msra.mxu0 0.0
    %2630 = vmatprep.subr.mxu0 0.0
    %2631 = vmatpush2.msra.mxu0 0.0
    %2632 = vmatprep.subr.mxu0 0.0
    %2633 = vmatpush2.msra.mxu0 0.0
    %2634 = vmatprep.subr.mxu0 0.0
    %2635 = vmatpush2.msra.mxu0 0.0
    %2636 = vmatprep.subr.mxu0 0.0
    %2637 = vmatpush2.msra.mxu0 0.0
    %2638 = vmatprep.subr.mxu0 0.0
    %2639 = vmatpush2.msra.mxu0 0.0
    %2640 = vmatprep.subr.mxu0 0.0
    %2641 = vmatpush2.msra.mxu0 0.0
    %2642 = vmatprep.subr.mxu0 0.0
    %2643 = vmatpush2.msra.mxu0 0.0
    %2644 = vmatprep.subr.mxu0 0.0
    %2645 = vmatpush2.msra.mxu0 0.0
    %2646 = vmatprep.subr.mxu0 0.0
    %2647 = vmatpush2.msra.mxu0 0.0
    %2648 = vmatprep.subr.mxu0 0.0
    %2649 = vmatpush2.msra.mxu0 0.0
    %2650 = vmatprep.subr.mxu0 0.0
    %2651 = vmatpush2.msra.mxu0 0.0
    %2652 = vmatprep.mubr.f32.mxu0 0.0
    %v2653 = vand.u32 %v2499, 4294901760
    %2654 = vmatmul.mubr.f32.gmra.mxu0 %v2653
    %v2655 = vpop.f32.mrf.mxu0
    %v2656 = vadd.f32 %v2575, %v2655
    %v2657 = vpop.f32.mrf.mxu0
    %2658 = vdwg.mxu0
    %2659 = vmatprep.subr.mxu0 0.0
    %2660 = vmatpush1.msra.mxu0 0.0
    %2661 = vmatprep.subr.mxu0 0.0
    %2662 = vmatpush1.msra.mxu0 0.0
    %2663 = vmatprep.subr.mxu0 0.0
    %2664 = vmatpush1.msra.mxu0 0.0
    %2665 = vmatprep.subr.mxu0 0.0
    %2666 = vmatpush1.msra.mxu0 0.0
    %2667 = vmatprep.subr.mxu0 0.0
    %2668 = vmatpush1.msra.mxu0 0.0
    %2669 = vmatprep.subr.mxu0 0.0
    %2670 = vmatpush1.msra.mxu0 0.0
    %2671 = vmatprep.subr.mxu0 0.0
    %2672 = vmatpush1.msra.mxu0 0.0
    %2673 = vmatprep.subr.mxu0 0.0
    %2674 = vmatpush1.msra.mxu0 0.0
    %2675 = vmatprep.subr.mxu0 0.0
    %2676 = vmatpush1.msra.mxu0 0.0
    %2677 = vmatprep.subr.mxu0 0.0
    %2678 = vmatpush1.msra.mxu0 0.0
    %2679 = vmatprep.subr.mxu0 0.0
    %2680 = vmatpush1.msra.mxu0 0.0
    %2681 = vmatprep.subr.mxu0 0.0
    %2682 = vmatpush1.msra.mxu0 0.0
    %2683 = vmatprep.subr.mxu0 0.0
    %2684 = vmatpush1.msra.mxu0 0.0
    %2685 = vmatprep.subr.mxu0 0.0
    %2686 = vmatpush1.msra.mxu0 0.0
    %2687 = vmatprep.subr.mxu0 0.0
    %v2688 = vand.u32 %v311, 4294901760
    %v2689 = vsub.f32 %v311, %v2688
    %2690 = vmatpush1.msra.mxu0 %v2689
    %2691 = vmatprep.subr.mxu0 0.0
    %v2692 = vand.u32 %v219, 4294901760
    %v2693 = vsub.f32 %v219, %v2692
    %2694 = vmatpush1.msra.mxu0 %v2693
    %2695 = vmatprep.subr.mxu0 0.0
    %2696 = vmatpush2.msra.mxu0 0.0
    %2697 = vmatprep.subr.mxu0 0.0
    %2698 = vmatpush2.msra.mxu0 0.0
    %2699 = vmatprep.subr.mxu0 0.0
    %2700 = vmatpush2.msra.mxu0 0.0
    %2701 = vmatprep.subr.mxu0 0.0
    %2702 = vmatpush2.msra.mxu0 0.0
    %2703 = vmatprep.subr.mxu0 0.0
    %2704 = vmatpush2.msra.mxu0 0.0
    %2705 = vmatprep.subr.mxu0 0.0
    %2706 = vmatpush2.msra.mxu0 0.0
    %2707 = vmatprep.subr.mxu0 0.0
    %2708 = vmatpush2.msra.mxu0 0.0
    %2709 = vmatprep.subr.mxu0 0.0
    %2710 = vmatpush2.msra.mxu0 0.0
    %2711 = vmatprep.subr.mxu0 0.0
    %2712 = vmatpush2.msra.mxu0 0.0
    %2713 = vmatprep.subr.mxu0 0.0
    %2714 = vmatpush2.msra.mxu0 0.0
    %2715 = vmatprep.subr.mxu0 0.0
    %2716 = vmatpush2.msra.mxu0 0.0
    %2717 = vmatprep.subr.mxu0 0.0
    %2718 = vmatpush2.msra.mxu0 0.0
    %2719 = vmatprep.subr.mxu0 0.0
    %2720 = vmatpush2.msra.mxu0 0.0
    %2721 = vmatprep.subr.mxu0 0.0
    %2722 = vmatpush2.msra.mxu0 0.0
    %2723 = vmatprep.subr.mxu0 0.0
    %2724 = vmatpush2.msra.mxu0 0.0
    %2725 = vmatprep.subr.mxu0 0.0
    %2726 = vmatpush2.msra.mxu0 0.0
    %2727 = vmatprep.mubr.f32.mxu0 0.0
    %v2728 = vand.u32 %v2499, 4294901760
    %v2729 = vsub.f32 %v2499, %v2728
    %2730 = vmatmul.mubr.f32.gmra.mxu0 %v2729
    %v2731 = vpop.f32.mrf.mxu0
    %v2732 = vadd.f32 %v2656, %v2731
    %v2733 = vpop.f32.mrf.mxu0
    %2734 = vdwg.mxu0
    %2735 = vmatprep.subr.mxu0 0.0
    %2736 = vmatpush1.msra.mxu0 0.0
    %2737 = vmatprep.subr.mxu0 0.0
    %2738 = vmatpush1.msra.mxu0 0.0
    %2739 = vmatprep.subr.mxu0 0.0
    %2740 = vmatpush1.msra.mxu0 0.0
    %2741 = vmatprep.subr.mxu0 0.0
    %2742 = vmatpush1.msra.mxu0 0.0
    %2743 = vmatprep.subr.mxu0 0.0
    %2744 = vmatpush1.msra.mxu0 0.0
    %2745 = vmatprep.subr.mxu0 0.0
    %2746 = vmatpush1.msra.mxu0 0.0
    %2747 = vmatprep.subr.mxu0 0.0
    %2748 = vmatpush1.msra.mxu0 0.0
    %2749 = vmatprep.subr.mxu0 0.0
    %2750 = vmatpush1.msra.mxu0 0.0
    %2751 = vmatprep.subr.mxu0 0.0
    %2752 = vmatpush1.msra.mxu0 0.0
    %2753 = vmatprep.subr.mxu0 0.0
    %2754 = vmatpush1.msra.mxu0 0.0
    %2755 = vmatprep.subr.mxu0 0.0
    %2756 = vmatpush1.msra.mxu0 0.0
    %2757 = vmatprep.subr.mxu0 0.0
    %2758 = vmatpush1.msra.mxu0 0.0
    %2759 = vmatprep.subr.mxu0 0.0
    %2760 = vmatpush1.msra.mxu0 0.0
    %2761 = vmatprep.subr.mxu0 0.0
    %2762 = vmatpush1.msra.mxu0 0.0
    %2763 = vmatprep.subr.mxu0 0.0
    %v2764 = vand.u32 %v311, 4294901760
    %2765 = vmatpush1.msra.mxu0 %v2764
    %2766 = vmatprep.subr.mxu0 0.0
    %v2767 = vand.u32 %v219, 4294901760
    %2768 = vmatpush1.msra.mxu0 %v2767
    %2769 = vmatprep.subr.mxu0 0.0
    %2770 = vmatpush2.msra.mxu0 0.0
    %2771 = vmatprep.subr.mxu0 0.0
    %2772 = vmatpush2.msra.mxu0 0.0
    %2773 = vmatprep.subr.mxu0 0.0
    %2774 = vmatpush2.msra.mxu0 0.0
    %2775 = vmatprep.subr.mxu0 0.0
    %2776 = vmatpush2.msra.mxu0 0.0
    %2777 = vmatprep.subr.mxu0 0.0
    %2778 = vmatpush2.msra.mxu0 0.0
    %2779 = vmatprep.subr.mxu0 0.0
    %2780 = vmatpush2.msra.mxu0 0.0
    %2781 = vmatprep.subr.mxu0 0.0
    %2782 = vmatpush2.msra.mxu0 0.0
    %2783 = vmatprep.subr.mxu0 0.0
    %2784 = vmatpush2.msra.mxu0 0.0
    %2785 = vmatprep.subr.mxu0 0.0
    %2786 = vmatpush2.msra.mxu0 0.0
    %2787 = vmatprep.subr.mxu0 0.0
    %2788 = vmatpush2.msra.mxu0 0.0
    %2789 = vmatprep.subr.mxu0 0.0
    %2790 = vmatpush2.msra.mxu0 0.0
    %2791 = vmatprep.subr.mxu0 0.0
    %2792 = vmatpush2.msra.mxu0 0.0
    %2793 = vmatprep.subr.mxu0 0.0
    %2794 = vmatpush2.msra.mxu0 0.0
    %2795 = vmatprep.subr.mxu0 0.0
    %2796 = vmatpush2.msra.mxu0 0.0
    %2797 = vmatprep.subr.mxu0 0.0
    %2798 = vmatpush2.msra.mxu0 0.0
    %2799 = vmatprep.subr.mxu0 0.0
    %2800 = vmatpush2.msra.mxu0 0.0
    %2801 = vmatprep.mubr.f32.mxu0 0.0
    %v2802 = vand.u32 %v2499, 4294901760
    %v2803 = vsub.f32 %v2499, %v2802
    %v2804 = vand.u32 %v2803, 4294901760
    %2805 = vmatmul.mubr.f32.gmra.mxu0 %v2804
    %v2806 = vpop.f32.mrf.mxu0
    %v2807 = vadd.f32 %v2732, %v2806
    %v2808 = vpop.f32.mrf.mxu0
    %2809 = vdwg.mxu0
    %2810 = vmatprep.subr.mxu0 0.0
    %2811 = vmatpush1.msra.mxu0 0.0
    %2812 = vmatprep.subr.mxu0 0.0
    %2813 = vmatpush1.msra.mxu0 0.0
    %2814 = vmatprep.subr.mxu0 0.0
    %2815 = vmatpush1.msra.mxu0 0.0
    %2816 = vmatprep.subr.mxu0 0.0
    %2817 = vmatpush1.msra.mxu0 0.0
    %2818 = vmatprep.subr.mxu0 0.0
    %2819 = vmatpush1.msra.mxu0 0.0
    %2820 = vmatprep.subr.mxu0 0.0
    %2821 = vmatpush1.msra.mxu0 0.0
    %2822 = vmatprep.subr.mxu0 0.0
    %2823 = vmatpush1.msra.mxu0 0.0
    %2824 = vmatprep.subr.mxu0 0.0
    %2825 = vmatpush1.msra.mxu0 0.0
    %2826 = vmatprep.subr.mxu0 0.0
    %2827 = vmatpush1.msra.mxu0 0.0
    %2828 = vmatprep.subr.mxu0 0.0
    %2829 = vmatpush1.msra.mxu0 0.0
    %2830 = vmatprep.subr.mxu0 0.0
    %2831 = vmatpush1.msra.mxu0 0.0
    %2832 = vmatprep.subr.mxu0 0.0
    %2833 = vmatpush1.msra.mxu0 0.0
    %2834 = vmatprep.subr.mxu0 0.0
    %2835 = vmatpush1.msra.mxu0 0.0
    %2836 = vmatprep.subr.mxu0 0.0
    %2837 = vmatpush1.msra.mxu0 0.0
    %2838 = vmatprep.subr.mxu0 0.0
    %v2839 = vand.u32 %v311, 4294901760
    %v2840 = vsub.f32 %v311, %v2839
    %v2841 = vand.u32 %v2840, 4294901760
    %2842 = vmatpush1.msra.mxu0 %v2841
    %2843 = vmatprep.subr.mxu0 0.0
    %v2844 = vand.u32 %v219, 4294901760
    %v2845 = vsub.f32 %v219, %v2844
    %v2846 = vand.u32 %v2845, 4294901760
    %2847 = vmatpush1.msra.mxu0 %v2846
    %2848 = vmatprep.subr.mxu0 0.0
    %2849 = vmatpush2.msra.mxu0 0.0
    %2850 = vmatprep.subr.mxu0 0.0
    %2851 = vmatpush2.msra.mxu0 0.0
    %2852 = vmatprep.subr.mxu0 0.0
    %2853 = vmatpush2.msra.mxu0 0.0
    %2854 = vmatprep.subr.mxu0 0.0
    %2855 = vmatpush2.msra.mxu0 0.0
    %2856 = vmatprep.subr.mxu0 0.0
    %2857 = vmatpush2.msra.mxu0 0.0
    %2858 = vmatprep.subr.mxu0 0.0
    %2859 = vmatpush2.msra.mxu0 0.0
    %2860 = vmatprep.subr.mxu0 0.0
    %2861 = vmatpush2.msra.mxu0 0.0
    %2862 = vmatprep.subr.mxu0 0.0
    %2863 = vmatpush2.msra.mxu0 0.0
    %2864 = vmatprep.subr.mxu0 0.0
    %2865 = vmatpush2.msra.mxu0 0.0
    %2866 = vmatprep.subr.mxu0 0.0
    %2867 = vmatpush2.msra.mxu0 0.0
    %2868 = vmatprep.subr.mxu0 0.0
    %2869 = vmatpush2.msra.mxu0 0.0
    %2870 = vmatprep.subr.mxu0 0.0
    %2871 = vmatpush2.msra.mxu0 0.0
    %2872 = vmatprep.subr.mxu0 0.0
    %2873 = vmatpush2.msra.mxu0 0.0
    %2874 = vmatprep.subr.mxu0 0.0
    %2875 = vmatpush2.msra.mxu0 0.0
    %2876 = vmatprep.subr.mxu0 0.0
    %2877 = vmatpush2.msra.mxu0 0.0
    %2878 = vmatprep.subr.mxu0 0.0
    %2879 = vmatpush2.msra.mxu0 0.0
    %2880 = vmatprep.mubr.f32.mxu0 0.0
    %v2881 = vand.u32 %v2499, 4294901760
    %2882 = vmatmul.mubr.f32.gmra.mxu0 %v2881
    %v2883 = vpop.f32.mrf.mxu0
    %v2884 = vadd.f32 %v2807, %v2883
    %v2885 = vpop.f32.mrf.mxu0
    %2886 = vdwg.mxu0
    %2887 = vmatprep.subr.mxu0 0.0
    %2888 = vmatpush1.msra.mxu0 0.0
    %2889 = vmatprep.subr.mxu0 0.0
    %2890 = vmatpush1.msra.mxu0 0.0
    %2891 = vmatprep.subr.mxu0 0.0
    %2892 = vmatpush1.msra.mxu0 0.0
    %2893 = vmatprep.subr.mxu0 0.0
    %2894 = vmatpush1.msra.mxu0 0.0
    %2895 = vmatprep.subr.mxu0 0.0
    %2896 = vmatpush1.msra.mxu0 0.0
    %2897 = vmatprep.subr.mxu0 0.0
    %2898 = vmatpush1.msra.mxu0 0.0
    %2899 = vmatprep.subr.mxu0 0.0
    %2900 = vmatpush1.msra.mxu0 0.0
    %2901 = vmatprep.subr.mxu0 0.0
    %2902 = vmatpush1.msra.mxu0 0.0
    %2903 = vmatprep.subr.mxu0 0.0
    %2904 = vmatpush1.msra.mxu0 0.0
    %2905 = vmatprep.subr.mxu0 0.0
    %2906 = vmatpush1.msra.mxu0 0.0
    %2907 = vmatprep.subr.mxu0 0.0
    %2908 = vmatpush1.msra.mxu0 0.0
    %2909 = vmatprep.subr.mxu0 0.0
    %2910 = vmatpush1.msra.mxu0 0.0
    %2911 = vmatprep.subr.mxu0 0.0
    %2912 = vmatpush1.msra.mxu0 0.0
    %2913 = vmatprep.subr.mxu0 0.0
    %2914 = vmatpush1.msra.mxu0 0.0
    %2915 = vmatprep.subr.mxu0 0.0
    %v2916 = vand.u32 %v311, 4294901760
    %2917 = vmatpush1.msra.mxu0 %v2916
    %2918 = vmatprep.subr.mxu0 0.0
    %v2919 = vand.u32 %v219, 4294901760
    %2920 = vmatpush1.msra.mxu0 %v2919
    %2921 = vmatprep.subr.mxu0 0.0
    %2922 = vmatpush2.msra.mxu0 0.0
    %2923 = vmatprep.subr.mxu0 0.0
    %2924 = vmatpush2.msra.mxu0 0.0
    %2925 = vmatprep.subr.mxu0 0.0
    %2926 = vmatpush2.msra.mxu0 0.0
    %2927 = vmatprep.subr.mxu0 0.0
    %2928 = vmatpush2.msra.mxu0 0.0
    %2929 = vmatprep.subr.mxu0 0.0
    %2930 = vmatpush2.msra.mxu0 0.0
    %2931 = vmatprep.subr.mxu0 0.0
    %2932 = vmatpush2.msra.mxu0 0.0
    %2933 = vmatprep.subr.mxu0 0.0
    %2934 = vmatpush2.msra.mxu0 0.0
    %2935 = vmatprep.subr.mxu0 0.0
    %2936 = vmatpush2.msra.mxu0 0.0
    %2937 = vmatprep.subr.mxu0 0.0
    %2938 = vmatpush2.msra.mxu0 0.0
    %2939 = vmatprep.subr.mxu0 0.0
    %2940 = vmatpush2.msra.mxu0 0.0
    %2941 = vmatprep.subr.mxu0 0.0
    %2942 = vmatpush2.msra.mxu0 0.0
    %2943 = vmatprep.subr.mxu0 0.0
    %2944 = vmatpush2.msra.mxu0 0.0
    %2945 = vmatprep.subr.mxu0 0.0
    %2946 = vmatpush2.msra.mxu0 0.0
    %2947 = vmatprep.subr.mxu0 0.0
    %2948 = vmatpush2.msra.mxu0 0.0
    %2949 = vmatprep.subr.mxu0 0.0
    %2950 = vmatpush2.msra.mxu0 0.0
    %2951 = vmatprep.subr.mxu0 0.0
    %2952 = vmatpush2.msra.mxu0 0.0
    %2953 = vmatprep.mubr.f32.mxu0 0.0
    %v2954 = vand.u32 %v2499, 4294901760
    %2955 = vmatmul.mubr.f32.gmra.mxu0 %v2954
    %v2956 = vpop.f32.mrf.mxu0
    %v2957 = vadd.f32 %v2884, %v2956
    %v2958 = vpop.f32.mrf.mxu0
    %2959 = vdwg.mxu0
    %v2961 = vcombine.high %v2957, %v2957
    %v2963 = vunpack.c.l.s4 1966171168
    %v2964 = vunpack.c.0.s8 %v2963
    %v2965 = vlaneseq
    %v2966 = vshrl.u32 %v2965, 7
    %v2967 = vsub.s32 %v2964, %v2966
    %v2968 = vrot.slane %v2957, %v2967
    %v2970 = vunpack.c.l.s4 1966171168
    %v2971 = vunpack.c.0.s8 %v2970
    %v2972 = vlaneseq
    %v2973 = vshrl.u32 %v2972, 7
    %v2974 = vsub.s32 %v2971, %v2973
    %v2975 = vrot.slane %v2961, %v2974
    %v2976 = vcombine.high %v2968, %v2968
    %v2977 = vcombine.high %v2975, %v2975
    %v2979 = vunpack.c.l.s4 1966171168
    %v2980 = vunpack.c.0.s8 %v2979
    %v2981 = vlaneseq
    %v2982 = vshrl.u32 %v2981, 7
    %v2983 = vsub.s32 %v2980, %v2982
    %v2984 = vrot.slane %v2968, %v2983
    %v2986 = vunpack.c.l.s4 1966171168
    %v2987 = vunpack.c.0.s8 %v2986
    %v2988 = vlaneseq
    %v2989 = vshrl.u32 %v2988, 7
    %v2990 = vsub.s32 %v2987, %v2989
    %v2991 = vrot.slane %v2975, %v2990
    %v2993 = vunpack.c.l.s4 1966171168
    %v2994 = vunpack.c.0.s8 %v2993
    %v2995 = vlaneseq
    %v2996 = vshrl.u32 %v2995, 7
    %v2997 = vsub.s32 %v2994, %v2996
    %v2998 = vrot.slane %v2976, %v2997
    %v3000 = vunpack.c.l.s4 1966171168
    %v3001 = vunpack.c.0.s8 %v3000
    %v3002 = vlaneseq
    %v3003 = vshrl.u32 %v3002, 7
    %v3004 = vsub.s32 %v3001, %v3003
    %v3005 = vrot.slane %v2977, %v3004
    %v3006 = vcombine.high %v2984, %v2984
    %v3007 = vcombine.high %v2991, %v2991
    %v3008 = vcombine.high %v2998, %v2998
    %v3009 = vcombine.high %v3005, %v3005
    %v3010 = vrot.slane %v2469, 2
    %v3011 = vrot.slane %v2470, 1
    %v3012 = vsel %vm286, %v3011, %v3010
    %v3013 = vsel %vm289, %v2471, %v3012
    %v3014 = vrot.slane %v2472, 7
    %v3015 = vsel %vm292, %v3014, %v3013
    %v3016 = vrot.slane %v2473, 6
    %v3017 = vsel %vm295, %v3016, %v3015
    %v3018 = vrot.slane %v2474, 5
    %v3019 = vsel %vm298, %v3018, %v3017
    %v3020 = vrot.slane %v2475, 4
    %v3021 = vsel %vm301, %v3020, %v3019
    %v3022 = vrot.slane %v2476, 3
    %v3023 = vsel %vm304, %v3022, %v3021
    %v3024 = vsel %vm306, %v3023, 0
    %3026 = vmatprep.subr.mxu0 0.0
    %3027 = vmatpush1.msra.mxu0 0.0
    %3028 = vmatprep.subr.mxu0 0.0
    %3029 = vmatpush1.msra.mxu0 0.0
    %3030 = vmatprep.subr.mxu0 0.0
    %3031 = vmatpush1.msra.mxu0 0.0
    %3032 = vmatprep.subr.mxu0 0.0
    %3033 = vmatpush1.msra.mxu0 0.0
    %3034 = vmatprep.subr.mxu0 0.0
    %3035 = vmatpush1.msra.mxu0 0.0
    %3036 = vmatprep.subr.mxu0 0.0
    %3037 = vmatpush1.msra.mxu0 0.0
    %3038 = vmatprep.subr.mxu0 0.0
    %3039 = vmatpush1.msra.mxu0 0.0
    %3040 = vmatprep.subr.mxu0 0.0
    %3041 = vmatpush1.msra.mxu0 0.0
    %3042 = vmatprep.subr.mxu0 0.0
    %3043 = vmatpush1.msra.mxu0 0.0
    %3044 = vmatprep.subr.mxu0 0.0
    %3045 = vmatpush1.msra.mxu0 0.0
    %3046 = vmatprep.subr.mxu0 0.0
    %3047 = vmatpush1.msra.mxu0 0.0
    %3048 = vmatprep.subr.mxu0 0.0
    %3049 = vmatpush1.msra.mxu0 0.0
    %3050 = vmatprep.subr.mxu0 0.0
    %3051 = vmatpush1.msra.mxu0 0.0
    %3052 = vmatprep.subr.mxu0 0.0
    %3053 = vmatpush1.msra.mxu0 0.0
    %3054 = vmatprep.subr.mxu0 0.0
    %v3055 = vand.u32 %v311, 4294901760
    %3056 = vmatpush1.msra.mxu0 %v3055
    %3057 = vmatprep.subr.mxu0 0.0
    %v3058 = vand.u32 %v219, 4294901760
    %3059 = vmatpush1.msra.mxu0 %v3058
    %3060 = vmatprep.subr.mxu0 0.0
    %3061 = vmatpush2.msra.mxu0 0.0
    %3062 = vmatprep.subr.mxu0 0.0
    %3063 = vmatpush2.msra.mxu0 0.0
    %3064 = vmatprep.subr.mxu0 0.0
    %3065 = vmatpush2.msra.mxu0 0.0
    %3066 = vmatprep.subr.mxu0 0.0
    %3067 = vmatpush2.msra.mxu0 0.0
    %3068 = vmatprep.subr.mxu0 0.0
    %3069 = vmatpush2.msra.mxu0 0.0
    %3070 = vmatprep.subr.mxu0 0.0
    %3071 = vmatpush2.msra.mxu0 0.0
    %3072 = vmatprep.subr.mxu0 0.0
    %3073 = vmatpush2.msra.mxu0 0.0
    %3074 = vmatprep.subr.mxu0 0.0
    %3075 = vmatpush2.msra.mxu0 0.0
    %3076 = vmatprep.subr.mxu0 0.0
    %3077 = vmatpush2.msra.mxu0 0.0
    %3078 = vmatprep.subr.mxu0 0.0
    %3079 = vmatpush2.msra.mxu0 0.0
    %3080 = vmatprep.subr.mxu0 0.0
    %3081 = vmatpush2.msra.mxu0 0.0
    %3082 = vmatprep.subr.mxu0 0.0
    %3083 = vmatpush2.msra.mxu0 0.0
    %3084 = vmatprep.subr.mxu0 0.0
    %3085 = vmatpush2.msra.mxu0 0.0
    %3086 = vmatprep.subr.mxu0 0.0
    %3087 = vmatpush2.msra.mxu0 0.0
    %3088 = vmatprep.subr.mxu0 0.0
    %3089 = vmatpush2.msra.mxu0 0.0
    %3090 = vmatprep.subr.mxu0 0.0
    %3091 = vmatpush2.msra.mxu0 0.0
    %3092 = vmatprep.mubr.f32.mxu0 0.0
    %v3093 = vand.u32 %v3024, 4294901760
    %v3094 = vsub.f32 %v3024, %v3093
    %v3095 = vand.u32 %v3094, 4294901760
    %v3096 = vsub.f32 %v3094, %v3095
    %v3097 = vand.u32 %v3096, 4294901760
    %3098 = vmatmul.mubr.f32.gmra.mxu0 %v3097
    %v3099 = vpop.f32.mrf.mxu0
    %v3100 = vadd.f32 0.0, %v3099
    %v3101 = vpop.f32.mrf.mxu0
    %3102 = vdwg.mxu0
    %3103 = vmatprep.subr.mxu0 0.0
    %3104 = vmatpush1.msra.mxu0 0.0
    %3105 = vmatprep.subr.mxu0 0.0
    %3106 = vmatpush1.msra.mxu0 0.0
    %3107 = vmatprep.subr.mxu0 0.0
    %3108 = vmatpush1.msra.mxu0 0.0
    %3109 = vmatprep.subr.mxu0 0.0
    %3110 = vmatpush1.msra.mxu0 0.0
    %3111 = vmatprep.subr.mxu0 0.0
    %3112 = vmatpush1.msra.mxu0 0.0
    %3113 = vmatprep.subr.mxu0 0.0
    %3114 = vmatpush1.msra.mxu0 0.0
    %3115 = vmatprep.subr.mxu0 0.0
    %3116 = vmatpush1.msra.mxu0 0.0
    %3117 = vmatprep.subr.mxu0 0.0
    %3118 = vmatpush1.msra.mxu0 0.0
    %3119 = vmatprep.subr.mxu0 0.0
    %3120 = vmatpush1.msra.mxu0 0.0
    %3121 = vmatprep.subr.mxu0 0.0
    %3122 = vmatpush1.msra.mxu0 0.0
    %3123 = vmatprep.subr.mxu0 0.0
    %3124 = vmatpush1.msra.mxu0 0.0
    %3125 = vmatprep.subr.mxu0 0.0
    %3126 = vmatpush1.msra.mxu0 0.0
    %3127 = vmatprep.subr.mxu0 0.0
    %3128 = vmatpush1.msra.mxu0 0.0
    %3129 = vmatprep.subr.mxu0 0.0
    %3130 = vmatpush1.msra.mxu0 0.0
    %3131 = vmatprep.subr.mxu0 0.0
    %v3132 = vand.u32 %v311, 4294901760
    %v3133 = vsub.f32 %v311, %v3132
    %v3134 = vand.u32 %v3133, 4294901760
    %v3135 = vsub.f32 %v3133, %v3134
    %v3136 = vand.u32 %v3135, 4294901760
    %3137 = vmatpush1.msra.mxu0 %v3136
    %3138 = vmatprep.subr.mxu0 0.0
    %v3139 = vand.u32 %v219, 4294901760
    %v3140 = vsub.f32 %v219, %v3139
    %v3141 = vand.u32 %v3140, 4294901760
    %v3142 = vsub.f32 %v3140, %v3141
    %v3143 = vand.u32 %v3142, 4294901760
    %3144 = vmatpush1.msra.mxu0 %v3143
    %3145 = vmatprep.subr.mxu0 0.0
    %3146 = vmatpush2.msra.mxu0 0.0
    %3147 = vmatprep.subr.mxu0 0.0
    %3148 = vmatpush2.msra.mxu0 0.0
    %3149 = vmatprep.subr.mxu0 0.0
    %3150 = vmatpush2.msra.mxu0 0.0
    %3151 = vmatprep.subr.mxu0 0.0
    %3152 = vmatpush2.msra.mxu0 0.0
    %3153 = vmatprep.subr.mxu0 0.0
    %3154 = vmatpush2.msra.mxu0 0.0
    %3155 = vmatprep.subr.mxu0 0.0
    %3156 = vmatpush2.msra.mxu0 0.0
    %3157 = vmatprep.subr.mxu0 0.0
    %3158 = vmatpush2.msra.mxu0 0.0
    %3159 = vmatprep.subr.mxu0 0.0
    %3160 = vmatpush2.msra.mxu0 0.0
    %3161 = vmatprep.subr.mxu0 0.0
    %3162 = vmatpush2.msra.mxu0 0.0
    %3163 = vmatprep.subr.mxu0 0.0
    %3164 = vmatpush2.msra.mxu0 0.0
    %3165 = vmatprep.subr.mxu0 0.0
    %3166 = vmatpush2.msra.mxu0 0.0
    %3167 = vmatprep.subr.mxu0 0.0
    %3168 = vmatpush2.msra.mxu0 0.0
    %3169 = vmatprep.subr.mxu0 0.0
    %3170 = vmatpush2.msra.mxu0 0.0
    %3171 = vmatprep.subr.mxu0 0.0
    %3172 = vmatpush2.msra.mxu0 0.0
    %3173 = vmatprep.subr.mxu0 0.0
    %3174 = vmatpush2.msra.mxu0 0.0
    %3175 = vmatprep.subr.mxu0 0.0
    %3176 = vmatpush2.msra.mxu0 0.0
    %3177 = vmatprep.mubr.f32.mxu0 0.0
    %v3178 = vand.u32 %v3024, 4294901760
    %3179 = vmatmul.mubr.f32.gmra.mxu0 %v3178
    %v3180 = vpop.f32.mrf.mxu0
    %v3181 = vadd.f32 %v3100, %v3180
    %v3182 = vpop.f32.mrf.mxu0
    %3183 = vdwg.mxu0
    %3184 = vmatprep.subr.mxu0 0.0
    %3185 = vmatpush1.msra.mxu0 0.0
    %3186 = vmatprep.subr.mxu0 0.0
    %3187 = vmatpush1.msra.mxu0 0.0
    %3188 = vmatprep.subr.mxu0 0.0
    %3189 = vmatpush1.msra.mxu0 0.0
    %3190 = vmatprep.subr.mxu0 0.0
    %3191 = vmatpush1.msra.mxu0 0.0
    %3192 = vmatprep.subr.mxu0 0.0
    %3193 = vmatpush1.msra.mxu0 0.0
    %3194 = vmatprep.subr.mxu0 0.0
    %3195 = vmatpush1.msra.mxu0 0.0
    %3196 = vmatprep.subr.mxu0 0.0
    %3197 = vmatpush1.msra.mxu0 0.0
    %3198 = vmatprep.subr.mxu0 0.0
    %3199 = vmatpush1.msra.mxu0 0.0
    %3200 = vmatprep.subr.mxu0 0.0
    %3201 = vmatpush1.msra.mxu0 0.0
    %3202 = vmatprep.subr.mxu0 0.0
    %3203 = vmatpush1.msra.mxu0 0.0
    %3204 = vmatprep.subr.mxu0 0.0
    %3205 = vmatpush1.msra.mxu0 0.0
    %3206 = vmatprep.subr.mxu0 0.0
    %3207 = vmatpush1.msra.mxu0 0.0
    %3208 = vmatprep.subr.mxu0 0.0
    %3209 = vmatpush1.msra.mxu0 0.0
    %3210 = vmatprep.subr.mxu0 0.0
    %3211 = vmatpush1.msra.mxu0 0.0
    %3212 = vmatprep.subr.mxu0 0.0
    %v3213 = vand.u32 %v311, 4294901760
    %v3214 = vsub.f32 %v311, %v3213
    %3215 = vmatpush1.msra.mxu0 %v3214
    %3216 = vmatprep.subr.mxu0 0.0
    %v3217 = vand.u32 %v219, 4294901760
    %v3218 = vsub.f32 %v219, %v3217
    %3219 = vmatpush1.msra.mxu0 %v3218
    %3220 = vmatprep.subr.mxu0 0.0
    %3221 = vmatpush2.msra.mxu0 0.0
    %3222 = vmatprep.subr.mxu0 0.0
    %3223 = vmatpush2.msra.mxu0 0.0
    %3224 = vmatprep.subr.mxu0 0.0
    %3225 = vmatpush2.msra.mxu0 0.0
    %3226 = vmatprep.subr.mxu0 0.0
    %3227 = vmatpush2.msra.mxu0 0.0
    %3228 = vmatprep.subr.mxu0 0.0
    %3229 = vmatpush2.msra.mxu0 0.0
    %3230 = vmatprep.subr.mxu0 0.0
    %3231 = vmatpush2.msra.mxu0 0.0
    %3232 = vmatprep.subr.mxu0 0.0
    %3233 = vmatpush2.msra.mxu0 0.0
    %3234 = vmatprep.subr.mxu0 0.0
    %3235 = vmatpush2.msra.mxu0 0.0
    %3236 = vmatprep.subr.mxu0 0.0
    %3237 = vmatpush2.msra.mxu0 0.0
    %3238 = vmatprep.subr.mxu0 0.0
    %3239 = vmatpush2.msra.mxu0 0.0
    %3240 = vmatprep.subr.mxu0 0.0
    %3241 = vmatpush2.msra.mxu0 0.0
    %3242 = vmatprep.subr.mxu0 0.0
    %3243 = vmatpush2.msra.mxu0 0.0
    %3244 = vmatprep.subr.mxu0 0.0
    %3245 = vmatpush2.msra.mxu0 0.0
    %3246 = vmatprep.subr.mxu0 0.0
    %3247 = vmatpush2.msra.mxu0 0.0
    %3248 = vmatprep.subr.mxu0 0.0
    %3249 = vmatpush2.msra.mxu0 0.0
    %3250 = vmatprep.subr.mxu0 0.0
    %3251 = vmatpush2.msra.mxu0 0.0
    %3252 = vmatprep.mubr.f32.mxu0 0.0
    %v3253 = vand.u32 %v3024, 4294901760
    %v3254 = vsub.f32 %v3024, %v3253
    %3255 = vmatmul.mubr.f32.gmra.mxu0 %v3254
    %v3256 = vpop.f32.mrf.mxu0
    %v3257 = vadd.f32 %v3181, %v3256
    %v3258 = vpop.f32.mrf.mxu0
    %3259 = vdwg.mxu0
    %3260 = vmatprep.subr.mxu0 0.0
    %3261 = vmatpush1.msra.mxu0 0.0
    %3262 = vmatprep.subr.mxu0 0.0
    %3263 = vmatpush1.msra.mxu0 0.0
    %3264 = vmatprep.subr.mxu0 0.0
    %3265 = vmatpush1.msra.mxu0 0.0
    %3266 = vmatprep.subr.mxu0 0.0
    %3267 = vmatpush1.msra.mxu0 0.0
    %3268 = vmatprep.subr.mxu0 0.0
    %3269 = vmatpush1.msra.mxu0 0.0
    %3270 = vmatprep.subr.mxu0 0.0
    %3271 = vmatpush1.msra.mxu0 0.0
    %3272 = vmatprep.subr.mxu0 0.0
    %3273 = vmatpush1.msra.mxu0 0.0
    %3274 = vmatprep.subr.mxu0 0.0
    %3275 = vmatpush1.msra.mxu0 0.0
    %3276 = vmatprep.subr.mxu0 0.0
    %3277 = vmatpush1.msra.mxu0 0.0
    %3278 = vmatprep.subr.mxu0 0.0
    %3279 = vmatpush1.msra.mxu0 0.0
    %3280 = vmatprep.subr.mxu0 0.0
    %3281 = vmatpush1.msra.mxu0 0.0
    %3282 = vmatprep.subr.mxu0 0.0
    %3283 = vmatpush1.msra.mxu0 0.0
    %3284 = vmatprep.subr.mxu0 0.0
    %3285 = vmatpush1.msra.mxu0 0.0
    %3286 = vmatprep.subr.mxu0 0.0
    %3287 = vmatpush1.msra.mxu0 0.0
    %3288 = vmatprep.subr.mxu0 0.0
    %v3289 = vand.u32 %v311, 4294901760
    %3290 = vmatpush1.msra.mxu0 %v3289
    %3291 = vmatprep.subr.mxu0 0.0
    %v3292 = vand.u32 %v219, 4294901760
    %3293 = vmatpush1.msra.mxu0 %v3292
    %3294 = vmatprep.subr.mxu0 0.0
    %3295 = vmatpush2.msra.mxu0 0.0
    %3296 = vmatprep.subr.mxu0 0.0
    %3297 = vmatpush2.msra.mxu0 0.0
    %3298 = vmatprep.subr.mxu0 0.0
    %3299 = vmatpush2.msra.mxu0 0.0
    %3300 = vmatprep.subr.mxu0 0.0
    %3301 = vmatpush2.msra.mxu0 0.0
    %3302 = vmatprep.subr.mxu0 0.0
    %3303 = vmatpush2.msra.mxu0 0.0
    %3304 = vmatprep.subr.mxu0 0.0
    %3305 = vmatpush2.msra.mxu0 0.0
    %3306 = vmatprep.subr.mxu0 0.0
    %3307 = vmatpush2.msra.mxu0 0.0
    %3308 = vmatprep.subr.mxu0 0.0
    %3309 = vmatpush2.msra.mxu0 0.0
    %3310 = vmatprep.subr.mxu0 0.0
    %3311 = vmatpush2.msra.mxu0 0.0
    %3312 = vmatprep.subr.mxu0 0.0
    %3313 = vmatpush2.msra.mxu0 0.0
    %3314 = vmatprep.subr.mxu0 0.0
    %3315 = vmatpush2.msra.mxu0 0.0
    %3316 = vmatprep.subr.mxu0 0.0
    %3317 = vmatpush2.msra.mxu0 0.0
    %3318 = vmatprep.subr.mxu0 0.0
    %3319 = vmatpush2.msra.mxu0 0.0
    %3320 = vmatprep.subr.mxu0 0.0
    %3321 = vmatpush2.msra.mxu0 0.0
    %3322 = vmatprep.subr.mxu0 0.0
    %3323 = vmatpush2.msra.mxu0 0.0
    %3324 = vmatprep.subr.mxu0 0.0
    %3325 = vmatpush2.msra.mxu0 0.0
    %3326 = vmatprep.mubr.f32.mxu0 0.0
    %v3327 = vand.u32 %v3024, 4294901760
    %v3328 = vsub.f32 %v3024, %v3327
    %v3329 = vand.u32 %v3328, 4294901760
    %3330 = vmatmul.mubr.f32.gmra.mxu0 %v3329
    %v3331 = vpop.f32.mrf.mxu0
    %v3332 = vadd.f32 %v3257, %v3331
    %v3333 = vpop.f32.mrf.mxu0
    %3334 = vdwg.mxu0
    %3335 = vmatprep.subr.mxu0 0.0
    %3336 = vmatpush1.msra.mxu0 0.0
    %3337 = vmatprep.subr.mxu0 0.0
    %3338 = vmatpush1.msra.mxu0 0.0
    %3339 = vmatprep.subr.mxu0 0.0
    %3340 = vmatpush1.msra.mxu0 0.0
    %3341 = vmatprep.subr.mxu0 0.0
    %3342 = vmatpush1.msra.mxu0 0.0
    %3343 = vmatprep.subr.mxu0 0.0
    %3344 = vmatpush1.msra.mxu0 0.0
    %3345 = vmatprep.subr.mxu0 0.0
    %3346 = vmatpush1.msra.mxu0 0.0
    %3347 = vmatprep.subr.mxu0 0.0
    %3348 = vmatpush1.msra.mxu0 0.0
    %3349 = vmatprep.subr.mxu0 0.0
    %3350 = vmatpush1.msra.mxu0 0.0
    %3351 = vmatprep.subr.mxu0 0.0
    %3352 = vmatpush1.msra.mxu0 0.0
    %3353 = vmatprep.subr.mxu0 0.0
    %3354 = vmatpush1.msra.mxu0 0.0
    %3355 = vmatprep.subr.mxu0 0.0
    %3356 = vmatpush1.msra.mxu0 0.0
    %3357 = vmatprep.subr.mxu0 0.0
    %3358 = vmatpush1.msra.mxu0 0.0
    %3359 = vmatprep.subr.mxu0 0.0
    %3360 = vmatpush1.msra.mxu0 0.0
    %3361 = vmatprep.subr.mxu0 0.0
    %3362 = vmatpush1.msra.mxu0 0.0
    %3363 = vmatprep.subr.mxu0 0.0
    %v3364 = vand.u32 %v311, 4294901760
    %v3365 = vsub.f32 %v311, %v3364
    %v3366 = vand.u32 %v3365, 4294901760
    %3367 = vmatpush1.msra.mxu0 %v3366
    %3368 = vmatprep.subr.mxu0 0.0
    %v3369 = vand.u32 %v219, 4294901760
    %v3370 = vsub.f32 %v219, %v3369
    %v3371 = vand.u32 %v3370, 4294901760
    %3372 = vmatpush1.msra.mxu0 %v3371
    %3373 = vmatprep.subr.mxu0 0.0
    %3374 = vmatpush2.msra.mxu0 0.0
    %3375 = vmatprep.subr.mxu0 0.0
    %3376 = vmatpush2.msra.mxu0 0.0
    %3377 = vmatprep.subr.mxu0 0.0
    %3378 = vmatpush2.msra.mxu0 0.0
    %3379 = vmatprep.subr.mxu0 0.0
    %3380 = vmatpush2.msra.mxu0 0.0
    %3381 = vmatprep.subr.mxu0 0.0
    %3382 = vmatpush2.msra.mxu0 0.0
    %3383 = vmatprep.subr.mxu0 0.0
    %3384 = vmatpush2.msra.mxu0 0.0
    %3385 = vmatprep.subr.mxu0 0.0
    %3386 = vmatpush2.msra.mxu0 0.0
    %3387 = vmatprep.subr.mxu0 0.0
    %3388 = vmatpush2.msra.mxu0 0.0
    %3389 = vmatprep.subr.mxu0 0.0
    %3390 = vmatpush2.msra.mxu0 0.0
    %3391 = vmatprep.subr.mxu0 0.0
    %3392 = vmatpush2.msra.mxu0 0.0
    %3393 = vmatprep.subr.mxu0 0.0
    %3394 = vmatpush2.msra.mxu0 0.0
    %3395 = vmatprep.subr.mxu0 0.0
    %3396 = vmatpush2.msra.mxu0 0.0
    %3397 = vmatprep.subr.mxu0 0.0
    %3398 = vmatpush2.msra.mxu0 0.0
    %3399 = vmatprep.subr.mxu0 0.0
    %3400 = vmatpush2.msra.mxu0 0.0
    %3401 = vmatprep.subr.mxu0 0.0
    %3402 = vmatpush2.msra.mxu0 0.0
    %3403 = vmatprep.subr.mxu0 0.0
    %3404 = vmatpush2.msra.mxu0 0.0
    %3405 = vmatprep.mubr.f32.mxu0 0.0
    %v3406 = vand.u32 %v3024, 4294901760
    %3407 = vmatmul.mubr.f32.gmra.mxu0 %v3406
    %v3408 = vpop.f32.mrf.mxu0
    %v3409 = vadd.f32 %v3332, %v3408
    %v3410 = vpop.f32.mrf.mxu0
    %3411 = vdwg.mxu0
    %3412 = vmatprep.subr.mxu0 0.0
    %3413 = vmatpush1.msra.mxu0 0.0
    %3414 = vmatprep.subr.mxu0 0.0
    %3415 = vmatpush1.msra.mxu0 0.0
    %3416 = vmatprep.subr.mxu0 0.0
    %3417 = vmatpush1.msra.mxu0 0.0
    %3418 = vmatprep.subr.mxu0 0.0
    %3419 = vmatpush1.msra.mxu0 0.0
    %3420 = vmatprep.subr.mxu0 0.0
    %3421 = vmatpush1.msra.mxu0 0.0
    %3422 = vmatprep.subr.mxu0 0.0
    %3423 = vmatpush1.msra.mxu0 0.0
    %3424 = vmatprep.subr.mxu0 0.0
    %3425 = vmatpush1.msra.mxu0 0.0
    %3426 = vmatprep.subr.mxu0 0.0
    %3427 = vmatpush1.msra.mxu0 0.0
    %3428 = vmatprep.subr.mxu0 0.0
    %3429 = vmatpush1.msra.mxu0 0.0
    %3430 = vmatprep.subr.mxu0 0.0
    %3431 = vmatpush1.msra.mxu0 0.0
    %3432 = vmatprep.subr.mxu0 0.0
    %3433 = vmatpush1.msra.mxu0 0.0
    %3434 = vmatprep.subr.mxu0 0.0
    %3435 = vmatpush1.msra.mxu0 0.0
    %3436 = vmatprep.subr.mxu0 0.0
    %3437 = vmatpush1.msra.mxu0 0.0
    %3438 = vmatprep.subr.mxu0 0.0
    %3439 = vmatpush1.msra.mxu0 0.0
    %3440 = vmatprep.subr.mxu0 0.0
    %v3441 = vand.u32 %v311, 4294901760
    %3442 = vmatpush1.msra.mxu0 %v3441
    %3443 = vmatprep.subr.mxu0 0.0
    %v3444 = vand.u32 %v219, 4294901760
    %3445 = vmatpush1.msra.mxu0 %v3444
    %3446 = vmatprep.subr.mxu0 0.0
    %3447 = vmatpush2.msra.mxu0 0.0
    %3448 = vmatprep.subr.mxu0 0.0
    %3449 = vmatpush2.msra.mxu0 0.0
    %3450 = vmatprep.subr.mxu0 0.0
    %3451 = vmatpush2.msra.mxu0 0.0
    %3452 = vmatprep.subr.mxu0 0.0
    %3453 = vmatpush2.msra.mxu0 0.0
    %3454 = vmatprep.subr.mxu0 0.0
    %3455 = vmatpush2.msra.mxu0 0.0
    %3456 = vmatprep.subr.mxu0 0.0
    %3457 = vmatpush2.msra.mxu0 0.0
    %3458 = vmatprep.subr.mxu0 0.0
    %3459 = vmatpush2.msra.mxu0 0.0
    %3460 = vmatprep.subr.mxu0 0.0
    %3461 = vmatpush2.msra.mxu0 0.0
    %3462 = vmatprep.subr.mxu0 0.0
    %3463 = vmatpush2.msra.mxu0 0.0
    %3464 = vmatprep.subr.mxu0 0.0
    %3465 = vmatpush2.msra.mxu0 0.0
    %3466 = vmatprep.subr.mxu0 0.0
    %3467 = vmatpush2.msra.mxu0 0.0
    %3468 = vmatprep.subr.mxu0 0.0
    %3469 = vmatpush2.msra.mxu0 0.0
    %3470 = vmatprep.subr.mxu0 0.0
    %3471 = vmatpush2.msra.mxu0 0.0
    %3472 = vmatprep.subr.mxu0 0.0
    %3473 = vmatpush2.msra.mxu0 0.0
    %3474 = vmatprep.subr.mxu0 0.0
    %3475 = vmatpush2.msra.mxu0 0.0
    %3476 = vmatprep.subr.mxu0 0.0
    %3477 = vmatpush2.msra.mxu0 0.0
    %3478 = vmatprep.mubr.f32.mxu0 0.0
    %v3479 = vand.u32 %v3024, 4294901760
    %3480 = vmatmul.mubr.f32.gmra.mxu0 %v3479
    %v3481 = vpop.f32.mrf.mxu0
    %v3482 = vadd.f32 %v3409, %v3481
    %v3483 = vpop.f32.mrf.mxu0
    %3484 = vdwg.mxu0
    %v3486 = vcombine.high %v3482, %v3482
    %v3488 = vunpack.c.l.s4 1966171168
    %v3489 = vunpack.c.0.s8 %v3488
    %v3490 = vlaneseq
    %v3491 = vshrl.u32 %v3490, 7
    %v3492 = vsub.s32 %v3489, %v3491
    %v3493 = vrot.slane %v3482, %v3492
    %v3495 = vunpack.c.l.s4 1966171168
    %v3496 = vunpack.c.0.s8 %v3495
    %v3497 = vlaneseq
    %v3498 = vshrl.u32 %v3497, 7
    %v3499 = vsub.s32 %v3496, %v3498
    %v3500 = vrot.slane %v3486, %v3499
    %v3501 = vcombine.high %v3493, %v3493
    %v3502 = vcombine.high %v3500, %v3500
    %v3504 = vunpack.c.l.s4 1966171168
    %v3505 = vunpack.c.0.s8 %v3504
    %v3506 = vlaneseq
    %v3507 = vshrl.u32 %v3506, 7
    %v3508 = vsub.s32 %v3505, %v3507
    %v3509 = vrot.slane %v3493, %v3508
    %v3511 = vunpack.c.l.s4 1966171168
    %v3512 = vunpack.c.0.s8 %v3511
    %v3513 = vlaneseq
    %v3514 = vshrl.u32 %v3513, 7
    %v3515 = vsub.s32 %v3512, %v3514
    %v3516 = vrot.slane %v3500, %v3515
    %v3518 = vunpack.c.l.s4 1966171168
    %v3519 = vunpack.c.0.s8 %v3518
    %v3520 = vlaneseq
    %v3521 = vshrl.u32 %v3520, 7
    %v3522 = vsub.s32 %v3519, %v3521
    %v3523 = vrot.slane %v3501, %v3522
    %v3525 = vunpack.c.l.s4 1966171168
    %v3526 = vunpack.c.0.s8 %v3525
    %v3527 = vlaneseq
    %v3528 = vshrl.u32 %v3527, 7
    %v3529 = vsub.s32 %v3526, %v3528
    %v3530 = vrot.slane %v3502, %v3529
    %v3531 = vcombine.high %v3509, %v3509
    %v3532 = vcombine.high %v3516, %v3516
    %v3533 = vcombine.high %v3523, %v3523
    %v3534 = vcombine.high %v3530, %v3530
    %v3535 = vrot.slane %v2469, 4
    %v3536 = vrot.slane %v2470, 3
    %v3537 = vsel %vm286, %v3536, %v3535
    %v3538 = vrot.slane %v2471, 2
    %v3539 = vsel %vm289, %v3538, %v3537
    %v3540 = vrot.slane %v2472, 1
    %v3541 = vsel %vm292, %v3540, %v3539
    %v3542 = vsel %vm295, %v2473, %v3541
    %v3543 = vrot.slane %v2474, 7
    %v3544 = vsel %vm298, %v3543, %v3542
    %v3545 = vrot.slane %v2475, 6
    %v3546 = vsel %vm301, %v3545, %v3544
    %v3547 = vrot.slane %v2476, 5
    %v3548 = vsel %vm304, %v3547, %v3546
    %v3549 = vsel %vm306, %v3548, 0
    %3551 = vmatprep.subr.mxu0 0.0
    %3552 = vmatpush1.msra.mxu0 0.0
    %3553 = vmatprep.subr.mxu0 0.0
    %3554 = vmatpush1.msra.mxu0 0.0
    %3555 = vmatprep.subr.mxu0 0.0
    %3556 = vmatpush1.msra.mxu0 0.0
    %3557 = vmatprep.subr.mxu0 0.0
    %3558 = vmatpush1.msra.mxu0 0.0
    %3559 = vmatprep.subr.mxu0 0.0
    %3560 = vmatpush1.msra.mxu0 0.0
    %3561 = vmatprep.subr.mxu0 0.0
    %3562 = vmatpush1.msra.mxu0 0.0
    %3563 = vmatprep.subr.mxu0 0.0
    %3564 = vmatpush1.msra.mxu0 0.0
    %3565 = vmatprep.subr.mxu0 0.0
    %3566 = vmatpush1.msra.mxu0 0.0
    %3567 = vmatprep.subr.mxu0 0.0
    %3568 = vmatpush1.msra.mxu0 0.0
    %3569 = vmatprep.subr.mxu0 0.0
    %3570 = vmatpush1.msra.mxu0 0.0
    %3571 = vmatprep.subr.mxu0 0.0
    %3572 = vmatpush1.msra.mxu0 0.0
    %3573 = vmatprep.subr.mxu0 0.0
    %3574 = vmatpush1.msra.mxu0 0.0
    %3575 = vmatprep.subr.mxu0 0.0
    %3576 = vmatpush1.msra.mxu0 0.0
    %3577 = vmatprep.subr.mxu0 0.0
    %3578 = vmatpush1.msra.mxu0 0.0
    %3579 = vmatprep.subr.mxu0 0.0
    %v3580 = vand.u32 %v311, 4294901760
    %3581 = vmatpush1.msra.mxu0 %v3580
    %3582 = vmatprep.subr.mxu0 0.0
    %v3583 = vand.u32 %v219, 4294901760
    %3584 = vmatpush1.msra.mxu0 %v3583
    %3585 = vmatprep.subr.mxu0 0.0
    %3586 = vmatpush2.msra.mxu0 0.0
    %3587 = vmatprep.subr.mxu0 0.0
    %3588 = vmatpush2.msra.mxu0 0.0
    %3589 = vmatprep.subr.mxu0 0.0
    %3590 = vmatpush2.msra.mxu0 0.0
    %3591 = vmatprep.subr.mxu0 0.0
    %3592 = vmatpush2.msra.mxu0 0.0
    %3593 = vmatprep.subr.mxu0 0.0
    %3594 = vmatpush2.msra.mxu0 0.0
    %3595 = vmatprep.subr.mxu0 0.0
    %3596 = vmatpush2.msra.mxu0 0.0
    %3597 = vmatprep.subr.mxu0 0.0
    %3598 = vmatpush2.msra.mxu0 0.0
    %3599 = vmatprep.subr.mxu0 0.0
    %3600 = vmatpush2.msra.mxu0 0.0
    %3601 = vmatprep.subr.mxu0 0.0
    %3602 = vmatpush2.msra.mxu0 0.0
    %3603 = vmatprep.subr.mxu0 0.0
    %3604 = vmatpush2.msra.mxu0 0.0
    %3605 = vmatprep.subr.mxu0 0.0
    %3606 = vmatpush2.msra.mxu0 0.0
    %3607 = vmatprep.subr.mxu0 0.0
    %3608 = vmatpush2.msra.mxu0 0.0
    %3609 = vmatprep.subr.mxu0 0.0
    %3610 = vmatpush2.msra.mxu0 0.0
    %3611 = vmatprep.subr.mxu0 0.0
    %3612 = vmatpush2.msra.mxu0 0.0
    %3613 = vmatprep.subr.mxu0 0.0
    %3614 = vmatpush2.msra.mxu0 0.0
    %3615 = vmatprep.subr.mxu0 0.0
    %3616 = vmatpush2.msra.mxu0 0.0
    %3617 = vmatprep.mubr.f32.mxu0 0.0
    %v3618 = vand.u32 %v3549, 4294901760
    %v3619 = vsub.f32 %v3549, %v3618
    %v3620 = vand.u32 %v3619, 4294901760
    %v3621 = vsub.f32 %v3619, %v3620
    %v3622 = vand.u32 %v3621, 4294901760
    %3623 = vmatmul.mubr.f32.gmra.mxu0 %v3622
    %v3624 = vpop.f32.mrf.mxu0
    %v3625 = vadd.f32 0.0, %v3624
    %v3626 = vpop.f32.mrf.mxu0
    %3627 = vdwg.mxu0
    %3628 = vmatprep.subr.mxu0 0.0
    %3629 = vmatpush1.msra.mxu0 0.0
    %3630 = vmatprep.subr.mxu0 0.0
    %3631 = vmatpush1.msra.mxu0 0.0
    %3632 = vmatprep.subr.mxu0 0.0
    %3633 = vmatpush1.msra.mxu0 0.0
    %3634 = vmatprep.subr.mxu0 0.0
    %3635 = vmatpush1.msra.mxu0 0.0
    %3636 = vmatprep.subr.mxu0 0.0
    %3637 = vmatpush1.msra.mxu0 0.0
    %3638 = vmatprep.subr.mxu0 0.0
    %3639 = vmatpush1.msra.mxu0 0.0
    %3640 = vmatprep.subr.mxu0 0.0
    %3641 = vmatpush1.msra.mxu0 0.0
    %3642 = vmatprep.subr.mxu0 0.0
    %3643 = vmatpush1.msra.mxu0 0.0
    %3644 = vmatprep.subr.mxu0 0.0
    %3645 = vmatpush1.msra.mxu0 0.0
    %3646 = vmatprep.subr.mxu0 0.0
    %3647 = vmatpush1.msra.mxu0 0.0
    %3648 = vmatprep.subr.mxu0 0.0
    %3649 = vmatpush1.msra.mxu0 0.0
    %3650 = vmatprep.subr.mxu0 0.0
    %3651 = vmatpush1.msra.mxu0 0.0
    %3652 = vmatprep.subr.mxu0 0.0
    %3653 = vmatpush1.msra.mxu0 0.0
    %3654 = vmatprep.subr.mxu0 0.0
    %3655 = vmatpush1.msra.mxu0 0.0
    %3656 = vmatprep.subr.mxu0 0.0
    %v3657 = vand.u32 %v311, 4294901760
    %v3658 = vsub.f32 %v311, %v3657
    %v3659 = vand.u32 %v3658, 4294901760
    %v3660 = vsub.f32 %v3658, %v3659
    %v3661 = vand.u32 %v3660, 4294901760
    %3662 = vmatpush1.msra.mxu0 %v3661
    %3663 = vmatprep.subr.mxu0 0.0
    %v3664 = vand.u32 %v219, 4294901760
    %v3665 = vsub.f32 %v219, %v3664
    %v3666 = vand.u32 %v3665, 4294901760
    %v3667 = vsub.f32 %v3665, %v3666
    %v3668 = vand.u32 %v3667, 4294901760
    %3669 = vmatpush1.msra.mxu0 %v3668
    %3670 = vmatprep.subr.mxu0 0.0
    %3671 = vmatpush2.msra.mxu0 0.0
    %3672 = vmatprep.subr.mxu0 0.0
    %3673 = vmatpush2.msra.mxu0 0.0
    %3674 = vmatprep.subr.mxu0 0.0
    %3675 = vmatpush2.msra.mxu0 0.0
    %3676 = vmatprep.subr.mxu0 0.0
    %3677 = vmatpush2.msra.mxu0 0.0
    %3678 = vmatprep.subr.mxu0 0.0
    %3679 = vmatpush2.msra.mxu0 0.0
    %3680 = vmatprep.subr.mxu0 0.0
    %3681 = vmatpush2.msra.mxu0 0.0
    %3682 = vmatprep.subr.mxu0 0.0
    %3683 = vmatpush2.msra.mxu0 0.0
    %3684 = vmatprep.subr.mxu0 0.0
    %3685 = vmatpush2.msra.mxu0 0.0
    %3686 = vmatprep.subr.mxu0 0.0
    %3687 = vmatpush2.msra.mxu0 0.0
    %3688 = vmatprep.subr.mxu0 0.0
    %3689 = vmatpush2.msra.mxu0 0.0
    %3690 = vmatprep.subr.mxu0 0.0
    %3691 = vmatpush2.msra.mxu0 0.0
    %3692 = vmatprep.subr.mxu0 0.0
    %3693 = vmatpush2.msra.mxu0 0.0
    %3694 = vmatprep.subr.mxu0 0.0
    %3695 = vmatpush2.msra.mxu0 0.0
    %3696 = vmatprep.subr.mxu0 0.0
    %3697 = vmatpush2.msra.mxu0 0.0
    %3698 = vmatprep.subr.mxu0 0.0
    %3699 = vmatpush2.msra.mxu0 0.0
    %3700 = vmatprep.subr.mxu0 0.0
    %3701 = vmatpush2.msra.mxu0 0.0
    %3702 = vmatprep.mubr.f32.mxu0 0.0
    %v3703 = vand.u32 %v3549, 4294901760
    %3704 = vmatmul.mubr.f32.gmra.mxu0 %v3703
    %v3705 = vpop.f32.mrf.mxu0
    %v3706 = vadd.f32 %v3625, %v3705
    %v3707 = vpop.f32.mrf.mxu0
    %3708 = vdwg.mxu0
    %3709 = vmatprep.subr.mxu0 0.0
    %3710 = vmatpush1.msra.mxu0 0.0
    %3711 = vmatprep.subr.mxu0 0.0
    %3712 = vmatpush1.msra.mxu0 0.0
    %3713 = vmatprep.subr.mxu0 0.0
    %3714 = vmatpush1.msra.mxu0 0.0
    %3715 = vmatprep.subr.mxu0 0.0
    %3716 = vmatpush1.msra.mxu0 0.0
    %3717 = vmatprep.subr.mxu0 0.0
    %3718 = vmatpush1.msra.mxu0 0.0
    %3719 = vmatprep.subr.mxu0 0.0
    %3720 = vmatpush1.msra.mxu0 0.0
    %3721 = vmatprep.subr.mxu0 0.0
    %3722 = vmatpush1.msra.mxu0 0.0
    %3723 = vmatprep.subr.mxu0 0.0
    %3724 = vmatpush1.msra.mxu0 0.0
    %3725 = vmatprep.subr.mxu0 0.0
    %3726 = vmatpush1.msra.mxu0 0.0
    %3727 = vmatprep.subr.mxu0 0.0
    %3728 = vmatpush1.msra.mxu0 0.0
    %3729 = vmatprep.subr.mxu0 0.0
    %3730 = vmatpush1.msra.mxu0 0.0
    %3731 = vmatprep.subr.mxu0 0.0
    %3732 = vmatpush1.msra.mxu0 0.0
    %3733 = vmatprep.subr.mxu0 0.0
    %3734 = vmatpush1.msra.mxu0 0.0
    %3735 = vmatprep.subr.mxu0 0.0
    %3736 = vmatpush1.msra.mxu0 0.0
    %3737 = vmatprep.subr.mxu0 0.0
    %v3738 = vand.u32 %v311, 4294901760
    %v3739 = vsub.f32 %v311, %v3738
    %3740 = vmatpush1.msra.mxu0 %v3739
    %3741 = vmatprep.subr.mxu0 0.0
    %v3742 = vand.u32 %v219, 4294901760
    %v3743 = vsub.f32 %v219, %v3742
    %3744 = vmatpush1.msra.mxu0 %v3743
    %3745 = vmatprep.subr.mxu0 0.0
    %3746 = vmatpush2.msra.mxu0 0.0
    %3747 = vmatprep.subr.mxu0 0.0
    %3748 = vmatpush2.msra.mxu0 0.0
    %3749 = vmatprep.subr.mxu0 0.0
    %3750 = vmatpush2.msra.mxu0 0.0
    %3751 = vmatprep.subr.mxu0 0.0
    %3752 = vmatpush2.msra.mxu0 0.0
    %3753 = vmatprep.subr.mxu0 0.0
    %3754 = vmatpush2.msra.mxu0 0.0
    %3755 = vmatprep.subr.mxu0 0.0
    %3756 = vmatpush2.msra.mxu0 0.0
    %3757 = vmatprep.subr.mxu0 0.0
    %3758 = vmatpush2.msra.mxu0 0.0
    %3759 = vmatprep.subr.mxu0 0.0
    %3760 = vmatpush2.msra.mxu0 0.0
    %3761 = vmatprep.subr.mxu0 0.0
    %3762 = vmatpush2.msra.mxu0 0.0
    %3763 = vmatprep.subr.mxu0 0.0
    %3764 = vmatpush2.msra.mxu0 0.0
    %3765 = vmatprep.subr.mxu0 0.0
    %3766 = vmatpush2.msra.mxu0 0.0
    %3767 = vmatprep.subr.mxu0 0.0
    %3768 = vmatpush2.msra.mxu0 0.0
    %3769 = vmatprep.subr.mxu0 0.0
    %3770 = vmatpush2.msra.mxu0 0.0
    %3771 = vmatprep.subr.mxu0 0.0
    %3772 = vmatpush2.msra.mxu0 0.0
    %3773 = vmatprep.subr.mxu0 0.0
    %3774 = vmatpush2.msra.mxu0 0.0
    %3775 = vmatprep.subr.mxu0 0.0
    %3776 = vmatpush2.msra.mxu0 0.0
    %3777 = vmatprep.mubr.f32.mxu0 0.0
    %v3778 = vand.u32 %v3549, 4294901760
    %v3779 = vsub.f32 %v3549, %v3778
    %3780 = vmatmul.mubr.f32.gmra.mxu0 %v3779
    %v3781 = vpop.f32.mrf.mxu0
    %v3782 = vadd.f32 %v3706, %v3781
    %v3783 = vpop.f32.mrf.mxu0
    %3784 = vdwg.mxu0
    %3785 = vmatprep.subr.mxu0 0.0
    %3786 = vmatpush1.msra.mxu0 0.0
    %3787 = vmatprep.subr.mxu0 0.0
    %3788 = vmatpush1.msra.mxu0 0.0
    %3789 = vmatprep.subr.mxu0 0.0
    %3790 = vmatpush1.msra.mxu0 0.0
    %3791 = vmatprep.subr.mxu0 0.0
    %3792 = vmatpush1.msra.mxu0 0.0
    %3793 = vmatprep.subr.mxu0 0.0
    %3794 = vmatpush1.msra.mxu0 0.0
    %3795 = vmatprep.subr.mxu0 0.0
    %3796 = vmatpush1.msra.mxu0 0.0
    %3797 = vmatprep.subr.mxu0 0.0
    %3798 = vmatpush1.msra.mxu0 0.0
    %3799 = vmatprep.subr.mxu0 0.0
    %3800 = vmatpush1.msra.mxu0 0.0
    %3801 = vmatprep.subr.mxu0 0.0
    %3802 = vmatpush1.msra.mxu0 0.0
    %3803 = vmatprep.subr.mxu0 0.0
    %3804 = vmatpush1.msra.mxu0 0.0
    %3805 = vmatprep.subr.mxu0 0.0
    %3806 = vmatpush1.msra.mxu0 0.0
    %3807 = vmatprep.subr.mxu0 0.0
    %3808 = vmatpush1.msra.mxu0 0.0
    %3809 = vmatprep.subr.mxu0 0.0
    %3810 = vmatpush1.msra.mxu0 0.0
    %3811 = vmatprep.subr.mxu0 0.0
    %3812 = vmatpush1.msra.mxu0 0.0
    %3813 = vmatprep.subr.mxu0 0.0
    %v3814 = vand.u32 %v311, 4294901760
    %3815 = vmatpush1.msra.mxu0 %v3814
    %3816 = vmatprep.subr.mxu0 0.0
    %v3817 = vand.u32 %v219, 4294901760
    %3818 = vmatpush1.msra.mxu0 %v3817
    %3819 = vmatprep.subr.mxu0 0.0
    %3820 = vmatpush2.msra.mxu0 0.0
    %3821 = vmatprep.subr.mxu0 0.0
    %3822 = vmatpush2.msra.mxu0 0.0
    %3823 = vmatprep.subr.mxu0 0.0
    %3824 = vmatpush2.msra.mxu0 0.0
    %3825 = vmatprep.subr.mxu0 0.0
    %3826 = vmatpush2.msra.mxu0 0.0
    %3827 = vmatprep.subr.mxu0 0.0
    %3828 = vmatpush2.msra.mxu0 0.0
    %3829 = vmatprep.subr.mxu0 0.0
    %3830 = vmatpush2.msra.mxu0 0.0
    %3831 = vmatprep.subr.mxu0 0.0
    %3832 = vmatpush2.msra.mxu0 0.0
    %3833 = vmatprep.subr.mxu0 0.0
    %3834 = vmatpush2.msra.mxu0 0.0
    %3835 = vmatprep.subr.mxu0 0.0
    %3836 = vmatpush2.msra.mxu0 0.0
    %3837 = vmatprep.subr.mxu0 0.0
    %3838 = vmatpush2.msra.mxu0 0.0
    %3839 = vmatprep.subr.mxu0 0.0
    %3840 = vmatpush2.msra.mxu0 0.0
    %3841 = vmatprep.subr.mxu0 0.0
    %3842 = vmatpush2.msra.mxu0 0.0
    %3843 = vmatprep.subr.mxu0 0.0
    %3844 = vmatpush2.msra.mxu0 0.0
    %3845 = vmatprep.subr.mxu0 0.0
    %3846 = vmatpush2.msra.mxu0 0.0
    %3847 = vmatprep.subr.mxu0 0.0
    %3848 = vmatpush2.msra.mxu0 0.0
    %3849 = vmatprep.subr.mxu0 0.0
    %3850 = vmatpush2.msra.mxu0 0.0
    %3851 = vmatprep.mubr.f32.mxu0 0.0
    %v3852 = vand.u32 %v3549, 4294901760
    %v3853 = vsub.f32 %v3549, %v3852
    %v3854 = vand.u32 %v3853, 4294901760
    %3855 = vmatmul.mubr.f32.gmra.mxu0 %v3854
    %v3856 = vpop.f32.mrf.mxu0
    %v3857 = vadd.f32 %v3782, %v3856
    %v3858 = vpop.f32.mrf.mxu0
    %3859 = vdwg.mxu0
    %3860 = vmatprep.subr.mxu0 0.0
    %3861 = vmatpush1.msra.mxu0 0.0
    %3862 = vmatprep.subr.mxu0 0.0
    %3863 = vmatpush1.msra.mxu0 0.0
    %3864 = vmatprep.subr.mxu0 0.0
    %3865 = vmatpush1.msra.mxu0 0.0
    %3866 = vmatprep.subr.mxu0 0.0
    %3867 = vmatpush1.msra.mxu0 0.0
    %3868 = vmatprep.subr.mxu0 0.0
    %3869 = vmatpush1.msra.mxu0 0.0
    %3870 = vmatprep.subr.mxu0 0.0
    %3871 = vmatpush1.msra.mxu0 0.0
    %3872 = vmatprep.subr.mxu0 0.0
    %3873 = vmatpush1.msra.mxu0 0.0
    %3874 = vmatprep.subr.mxu0 0.0
    %3875 = vmatpush1.msra.mxu0 0.0
    %3876 = vmatprep.subr.mxu0 0.0
    %3877 = vmatpush1.msra.mxu0 0.0
    %3878 = vmatprep.subr.mxu0 0.0
    %3879 = vmatpush1.msra.mxu0 0.0
    %3880 = vmatprep.subr.mxu0 0.0
    %3881 = vmatpush1.msra.mxu0 0.0
    %3882 = vmatprep.subr.mxu0 0.0
    %3883 = vmatpush1.msra.mxu0 0.0
    %3884 = vmatprep.subr.mxu0 0.0
    %3885 = vmatpush1.msra.mxu0 0.0
    %3886 = vmatprep.subr.mxu0 0.0
    %3887 = vmatpush1.msra.mxu0 0.0
    %3888 = vmatprep.subr.mxu0 0.0
    %v3889 = vand.u32 %v311, 4294901760
    %v3890 = vsub.f32 %v311, %v3889
    %v3891 = vand.u32 %v3890, 4294901760
    %3892 = vmatpush1.msra.mxu0 %v3891
    %3893 = vmatprep.subr.mxu0 0.0
    %v3894 = vand.u32 %v219, 4294901760
    %v3895 = vsub.f32 %v219, %v3894
    %v3896 = vand.u32 %v3895, 4294901760
    %3897 = vmatpush1.msra.mxu0 %v3896
    %3898 = vmatprep.subr.mxu0 0.0
    %3899 = vmatpush2.msra.mxu0 0.0
    %3900 = vmatprep.subr.mxu0 0.0
    %3901 = vmatpush2.msra.mxu0 0.0
    %3902 = vmatprep.subr.mxu0 0.0
    %3903 = vmatpush2.msra.mxu0 0.0
    %3904 = vmatprep.subr.mxu0 0.0
    %3905 = vmatpush2.msra.mxu0 0.0
    %3906 = vmatprep.subr.mxu0 0.0
    %3907 = vmatpush2.msra.mxu0 0.0
    %3908 = vmatprep.subr.mxu0 0.0
    %3909 = vmatpush2.msra.mxu0 0.0
    %3910 = vmatprep.subr.mxu0 0.0
    %3911 = vmatpush2.msra.mxu0 0.0
    %3912 = vmatprep.subr.mxu0 0.0
    %3913 = vmatpush2.msra.mxu0 0.0
    %3914 = vmatprep.subr.mxu0 0.0
    %3915 = vmatpush2.msra.mxu0 0.0
    %3916 = vmatprep.subr.mxu0 0.0
    %3917 = vmatpush2.msra.mxu0 0.0
    %3918 = vmatprep.subr.mxu0 0.0
    %3919 = vmatpush2.msra.mxu0 0.0
    %3920 = vmatprep.subr.mxu0 0.0
    %3921 = vmatpush2.msra.mxu0 0.0
    %3922 = vmatprep.subr.mxu0 0.0
    %3923 = vmatpush2.msra.mxu0 0.0
    %3924 = vmatprep.subr.mxu0 0.0
    %3925 = vmatpush2.msra.mxu0 0.0
    %3926 = vmatprep.subr.mxu0 0.0
    %3927 = vmatpush2.msra.mxu0 0.0
    %3928 = vmatprep.subr.mxu0 0.0
    %3929 = vmatpush2.msra.mxu0 0.0
    %3930 = vmatprep.mubr.f32.mxu0 0.0
    %v3931 = vand.u32 %v3549, 4294901760
    %3932 = vmatmul.mubr.f32.gmra.mxu0 %v3931
    %v3933 = vpop.f32.mrf.mxu0
    %v3934 = vadd.f32 %v3857, %v3933
    %v3935 = vpop.f32.mrf.mxu0
    %3936 = vdwg.mxu0
    %3937 = vmatprep.subr.mxu0 0.0
    %3938 = vmatpush1.msra.mxu0 0.0
    %3939 = vmatprep.subr.mxu0 0.0
    %3940 = vmatpush1.msra.mxu0 0.0
    %3941 = vmatprep.subr.mxu0 0.0
    %3942 = vmatpush1.msra.mxu0 0.0
    %3943 = vmatprep.subr.mxu0 0.0
    %3944 = vmatpush1.msra.mxu0 0.0
    %3945 = vmatprep.subr.mxu0 0.0
    %3946 = vmatpush1.msra.mxu0 0.0
    %3947 = vmatprep.subr.mxu0 0.0
    %3948 = vmatpush1.msra.mxu0 0.0
    %3949 = vmatprep.subr.mxu0 0.0
    %3950 = vmatpush1.msra.mxu0 0.0
    %3951 = vmatprep.subr.mxu0 0.0
    %3952 = vmatpush1.msra.mxu0 0.0
    %3953 = vmatprep.subr.mxu0 0.0
    %3954 = vmatpush1.msra.mxu0 0.0
    %3955 = vmatprep.subr.mxu0 0.0
    %3956 = vmatpush1.msra.mxu0 0.0
    %3957 = vmatprep.subr.mxu0 0.0
    %3958 = vmatpush1.msra.mxu0 0.0
    %3959 = vmatprep.subr.mxu0 0.0
    %3960 = vmatpush1.msra.mxu0 0.0
    %3961 = vmatprep.subr.mxu0 0.0
    %3962 = vmatpush1.msra.mxu0 0.0
    %3963 = vmatprep.subr.mxu0 0.0
    %3964 = vmatpush1.msra.mxu0 0.0
    %3965 = vmatprep.subr.mxu0 0.0
    %v3966 = vand.u32 %v311, 4294901760
    %3967 = vmatpush1.msra.mxu0 %v3966
    %3968 = vmatprep.subr.mxu0 0.0
    %v3969 = vand.u32 %v219, 4294901760
    %3970 = vmatpush1.msra.mxu0 %v3969
    %3971 = vmatprep.subr.mxu0 0.0
    %3972 = vmatpush2.msra.mxu0 0.0
    %3973 = vmatprep.subr.mxu0 0.0
    %3974 = vmatpush2.msra.mxu0 0.0
    %3975 = vmatprep.subr.mxu0 0.0
    %3976 = vmatpush2.msra.mxu0 0.0
    %3977 = vmatprep.subr.mxu0 0.0
    %3978 = vmatpush2.msra.mxu0 0.0
    %3979 = vmatprep.subr.mxu0 0.0
    %3980 = vmatpush2.msra.mxu0 0.0
    %3981 = vmatprep.subr.mxu0 0.0
    %3982 = vmatpush2.msra.mxu0 0.0
    %3983 = vmatprep.subr.mxu0 0.0
    %3984 = vmatpush2.msra.mxu0 0.0
    %3985 = vmatprep.subr.mxu0 0.0
    %3986 = vmatpush2.msra.mxu0 0.0
    %3987 = vmatprep.subr.mxu0 0.0
    %3988 = vmatpush2.msra.mxu0 0.0
    %3989 = vmatprep.subr.mxu0 0.0
    %3990 = vmatpush2.msra.mxu0 0.0
    %3991 = vmatprep.subr.mxu0 0.0
    %3992 = vmatpush2.msra.mxu0 0.0
    %3993 = vmatprep.subr.mxu0 0.0
    %3994 = vmatpush2.msra.mxu0 0.0
    %3995 = vmatprep.subr.mxu0 0.0
    %3996 = vmatpush2.msra.mxu0 0.0
    %3997 = vmatprep.subr.mxu0 0.0
    %3998 = vmatpush2.msra.mxu0 0.0
    %3999 = vmatprep.subr.mxu0 0.0
    %4000 = vmatpush2.msra.mxu0 0.0
    %4001 = vmatprep.subr.mxu0 0.0
    %4002 = vmatpush2.msra.mxu0 0.0
    %4003 = vmatprep.mubr.f32.mxu0 0.0
    %v4004 = vand.u32 %v3549, 4294901760
    %4005 = vmatmul.mubr.f32.gmra.mxu0 %v4004
    %v4006 = vpop.f32.mrf.mxu0
    %v4007 = vadd.f32 %v3934, %v4006
    %v4008 = vpop.f32.mrf.mxu0
    %4009 = vdwg.mxu0
    %v4011 = vcombine.high %v4007, %v4007
    %v4013 = vunpack.c.l.s4 1966171168
    %v4014 = vunpack.c.0.s8 %v4013
    %v4015 = vlaneseq
    %v4016 = vshrl.u32 %v4015, 7
    %v4017 = vsub.s32 %v4014, %v4016
    %v4018 = vrot.slane %v4007, %v4017
    %v4020 = vunpack.c.l.s4 1966171168
    %v4021 = vunpack.c.0.s8 %v4020
    %v4022 = vlaneseq
    %v4023 = vshrl.u32 %v4022, 7
    %v4024 = vsub.s32 %v4021, %v4023
    %v4025 = vrot.slane %v4011, %v4024
    %v4026 = vcombine.high %v4018, %v4018
    %v4027 = vcombine.high %v4025, %v4025
    %v4029 = vunpack.c.l.s4 1966171168
    %v4030 = vunpack.c.0.s8 %v4029
    %v4031 = vlaneseq
    %v4032 = vshrl.u32 %v4031, 7
    %v4033 = vsub.s32 %v4030, %v4032
    %v4034 = vrot.slane %v4018, %v4033
    %v4036 = vunpack.c.l.s4 1966171168
    %v4037 = vunpack.c.0.s8 %v4036
    %v4038 = vlaneseq
    %v4039 = vshrl.u32 %v4038, 7
    %v4040 = vsub.s32 %v4037, %v4039
    %v4041 = vrot.slane %v4025, %v4040
    %v4043 = vunpack.c.l.s4 1966171168
    %v4044 = vunpack.c.0.s8 %v4043
    %v4045 = vlaneseq
    %v4046 = vshrl.u32 %v4045, 7
    %v4047 = vsub.s32 %v4044, %v4046
    %v4048 = vrot.slane %v4026, %v4047
    %v4050 = vunpack.c.l.s4 1966171168
    %v4051 = vunpack.c.0.s8 %v4050
    %v4052 = vlaneseq
    %v4053 = vshrl.u32 %v4052, 7
    %v4054 = vsub.s32 %v4051, %v4053
    %v4055 = vrot.slane %v4027, %v4054
    %v4056 = vcombine.high %v4034, %v4034
    %v4057 = vcombine.high %v4041, %v4041
    %v4058 = vcombine.high %v4048, %v4048
    %v4059 = vcombine.high %v4055, %v4055
    %v4061 = vrot.slane %v194, 2
    %v4063 = vmax.f32 %v2461, %v4061
    %v4064 = vmax.f32 %v2462, %v4061
    %v4065 = vmax.f32 %v2463, %v4061
    %v4066 = vmax.f32 %v2464, %v4061
    %v4067 = vmax.f32 %v2465, %v4061
    %v4068 = vmax.f32 %v2466, %v4061
    %v4069 = vmax.f32 %v2467, %v4061
    %v4070 = vmax.f32 %v2468, %v4061
    %v4079 = vrot.slane %v4063, 6
    %v4080 = vrot.slane %v4064, 5
    %v4081 = vsel %vm286, %v4080, %v4079
    %v4082 = vrot.slane %v4065, 4
    %v4083 = vsel %vm289, %v4082, %v4081
    %v4084 = vrot.slane %v4066, 3
    %v4085 = vsel %vm292, %v4084, %v4083
    %v4086 = vrot.slane %v4067, 2
    %v4087 = vsel %vm295, %v4086, %v4085
    %v4088 = vrot.slane %v4068, 1
    %v4089 = vsel %vm298, %v4088, %v4087
    %v4090 = vsel %vm301, %v4069, %v4089
    %v4091 = vrot.slane %v4070, 7
    %v4092 = vsel %vm304, %v4091, %v4090
    %v4093 = vsel %vm306, %v4092, 0
    %4095 = vmatprep.subr.mxu0 0.0
    %4096 = vmatpush1.msra.mxu0 0.0
    %4097 = vmatprep.subr.mxu0 0.0
    %4098 = vmatpush1.msra.mxu0 0.0
    %4099 = vmatprep.subr.mxu0 0.0
    %4100 = vmatpush1.msra.mxu0 0.0
    %4101 = vmatprep.subr.mxu0 0.0
    %4102 = vmatpush1.msra.mxu0 0.0
    %4103 = vmatprep.subr.mxu0 0.0
    %4104 = vmatpush1.msra.mxu0 0.0
    %4105 = vmatprep.subr.mxu0 0.0
    %4106 = vmatpush1.msra.mxu0 0.0
    %4107 = vmatprep.subr.mxu0 0.0
    %4108 = vmatpush1.msra.mxu0 0.0
    %4109 = vmatprep.subr.mxu0 0.0
    %4110 = vmatpush1.msra.mxu0 0.0
    %4111 = vmatprep.subr.mxu0 0.0
    %4112 = vmatpush1.msra.mxu0 0.0
    %4113 = vmatprep.subr.mxu0 0.0
    %4114 = vmatpush1.msra.mxu0 0.0
    %4115 = vmatprep.subr.mxu0 0.0
    %4116 = vmatpush1.msra.mxu0 0.0
    %4117 = vmatprep.subr.mxu0 0.0
    %4118 = vmatpush1.msra.mxu0 0.0
    %4119 = vmatprep.subr.mxu0 0.0
    %4120 = vmatpush1.msra.mxu0 0.0
    %4121 = vmatprep.subr.mxu0 0.0
    %4122 = vmatpush1.msra.mxu0 0.0
    %4123 = vmatprep.subr.mxu0 0.0
    %v4124 = vand.u32 %v311, 4294901760
    %4125 = vmatpush1.msra.mxu0 %v4124
    %4126 = vmatprep.subr.mxu0 0.0
    %v4127 = vand.u32 %v219, 4294901760
    %4128 = vmatpush1.msra.mxu0 %v4127
    %4129 = vmatprep.subr.mxu0 0.0
    %4130 = vmatpush2.msra.mxu0 0.0
    %4131 = vmatprep.subr.mxu0 0.0
    %4132 = vmatpush2.msra.mxu0 0.0
    %4133 = vmatprep.subr.mxu0 0.0
    %4134 = vmatpush2.msra.mxu0 0.0
    %4135 = vmatprep.subr.mxu0 0.0
    %4136 = vmatpush2.msra.mxu0 0.0
    %4137 = vmatprep.subr.mxu0 0.0
    %4138 = vmatpush2.msra.mxu0 0.0
    %4139 = vmatprep.subr.mxu0 0.0
    %4140 = vmatpush2.msra.mxu0 0.0
    %4141 = vmatprep.subr.mxu0 0.0
    %4142 = vmatpush2.msra.mxu0 0.0
    %4143 = vmatprep.subr.mxu0 0.0
    %4144 = vmatpush2.msra.mxu0 0.0
    %4145 = vmatprep.subr.mxu0 0.0
    %4146 = vmatpush2.msra.mxu0 0.0
    %4147 = vmatprep.subr.mxu0 0.0
    %4148 = vmatpush2.msra.mxu0 0.0
    %4149 = vmatprep.subr.mxu0 0.0
    %4150 = vmatpush2.msra.mxu0 0.0
    %4151 = vmatprep.subr.mxu0 0.0
    %4152 = vmatpush2.msra.mxu0 0.0
    %4153 = vmatprep.subr.mxu0 0.0
    %4154 = vmatpush2.msra.mxu0 0.0
    %4155 = vmatprep.subr.mxu0 0.0
    %4156 = vmatpush2.msra.mxu0 0.0
    %4157 = vmatprep.subr.mxu0 0.0
    %4158 = vmatpush2.msra.mxu0 0.0
    %4159 = vmatprep.subr.mxu0 0.0
    %4160 = vmatpush2.msra.mxu0 0.0
    %4161 = vmatprep.mubr.f32.mxu0 0.0
    %v4162 = vand.u32 %v4093, 4294901760
    %v4163 = vsub.f32 %v4093, %v4162
    %v4164 = vand.u32 %v4163, 4294901760
    %v4165 = vsub.f32 %v4163, %v4164
    %v4166 = vand.u32 %v4165, 4294901760
    %4167 = vmatmul.mubr.f32.gmra.mxu0 %v4166
    %v4168 = vpop.f32.mrf.mxu0
    %v4169 = vadd.f32 0.0, %v4168
    %v4170 = vpop.f32.mrf.mxu0
    %4171 = vdwg.mxu0
    %4172 = vmatprep.subr.mxu0 0.0
    %4173 = vmatpush1.msra.mxu0 0.0
    %4174 = vmatprep.subr.mxu0 0.0
    %4175 = vmatpush1.msra.mxu0 0.0
    %4176 = vmatprep.subr.mxu0 0.0
    %4177 = vmatpush1.msra.mxu0 0.0
    %4178 = vmatprep.subr.mxu0 0.0
    %4179 = vmatpush1.msra.mxu0 0.0
    %4180 = vmatprep.subr.mxu0 0.0
    %4181 = vmatpush1.msra.mxu0 0.0
    %4182 = vmatprep.subr.mxu0 0.0
    %4183 = vmatpush1.msra.mxu0 0.0
    %4184 = vmatprep.subr.mxu0 0.0
    %4185 = vmatpush1.msra.mxu0 0.0
    %4186 = vmatprep.subr.mxu0 0.0
    %4187 = vmatpush1.msra.mxu0 0.0
    %4188 = vmatprep.subr.mxu0 0.0
    %4189 = vmatpush1.msra.mxu0 0.0
    %4190 = vmatprep.subr.mxu0 0.0
    %4191 = vmatpush1.msra.mxu0 0.0
    %4192 = vmatprep.subr.mxu0 0.0
    %4193 = vmatpush1.msra.mxu0 0.0
    %4194 = vmatprep.subr.mxu0 0.0
    %4195 = vmatpush1.msra.mxu0 0.0
    %4196 = vmatprep.subr.mxu0 0.0
    %4197 = vmatpush1.msra.mxu0 0.0
    %4198 = vmatprep.subr.mxu0 0.0
    %4199 = vmatpush1.msra.mxu0 0.0
    %4200 = vmatprep.subr.mxu0 0.0
    %v4201 = vand.u32 %v311, 4294901760
    %v4202 = vsub.f32 %v311, %v4201
    %v4203 = vand.u32 %v4202, 4294901760
    %v4204 = vsub.f32 %v4202, %v4203
    %v4205 = vand.u32 %v4204, 4294901760
    %4206 = vmatpush1.msra.mxu0 %v4205
    %4207 = vmatprep.subr.mxu0 0.0
    %v4208 = vand.u32 %v219, 4294901760
    %v4209 = vsub.f32 %v219, %v4208
    %v4210 = vand.u32 %v4209, 4294901760
    %v4211 = vsub.f32 %v4209, %v4210
    %v4212 = vand.u32 %v4211, 4294901760
    %4213 = vmatpush1.msra.mxu0 %v4212
    %4214 = vmatprep.subr.mxu0 0.0
    %4215 = vmatpush2.msra.mxu0 0.0
    %4216 = vmatprep.subr.mxu0 0.0
    %4217 = vmatpush2.msra.mxu0 0.0
    %4218 = vmatprep.subr.mxu0 0.0
    %4219 = vmatpush2.msra.mxu0 0.0
    %4220 = vmatprep.subr.mxu0 0.0
    %4221 = vmatpush2.msra.mxu0 0.0
    %4222 = vmatprep.subr.mxu0 0.0
    %4223 = vmatpush2.msra.mxu0 0.0
    %4224 = vmatprep.subr.mxu0 0.0
    %4225 = vmatpush2.msra.mxu0 0.0
    %4226 = vmatprep.subr.mxu0 0.0
    %4227 = vmatpush2.msra.mxu0 0.0
    %4228 = vmatprep.subr.mxu0 0.0
    %4229 = vmatpush2.msra.mxu0 0.0
    %4230 = vmatprep.subr.mxu0 0.0
    %4231 = vmatpush2.msra.mxu0 0.0
    %4232 = vmatprep.subr.mxu0 0.0
    %4233 = vmatpush2.msra.mxu0 0.0
    %4234 = vmatprep.subr.mxu0 0.0
    %4235 = vmatpush2.msra.mxu0 0.0
    %4236 = vmatprep.subr.mxu0 0.0
    %4237 = vmatpush2.msra.mxu0 0.0
    %4238 = vmatprep.subr.mxu0 0.0
    %4239 = vmatpush2.msra.mxu0 0.0
    %4240 = vmatprep.subr.mxu0 0.0
    %4241 = vmatpush2.msra.mxu0 0.0
    %4242 = vmatprep.subr.mxu0 0.0
    %4243 = vmatpush2.msra.mxu0 0.0
    %4244 = vmatprep.subr.mxu0 0.0
    %4245 = vmatpush2.msra.mxu0 0.0
    %4246 = vmatprep.mubr.f32.mxu0 0.0
    %v4247 = vand.u32 %v4093, 4294901760
    %4248 = vmatmul.mubr.f32.gmra.mxu0 %v4247
    %v4249 = vpop.f32.mrf.mxu0
    %v4250 = vadd.f32 %v4169, %v4249
    %v4251 = vpop.f32.mrf.mxu0
    %4252 = vdwg.mxu0
    %4253 = vmatprep.subr.mxu0 0.0
    %4254 = vmatpush1.msra.mxu0 0.0
    %4255 = vmatprep.subr.mxu0 0.0
    %4256 = vmatpush1.msra.mxu0 0.0
    %4257 = vmatprep.subr.mxu0 0.0
    %4258 = vmatpush1.msra.mxu0 0.0
    %4259 = vmatprep.subr.mxu0 0.0
    %4260 = vmatpush1.msra.mxu0 0.0
    %4261 = vmatprep.subr.mxu0 0.0
    %4262 = vmatpush1.msra.mxu0 0.0
    %4263 = vmatprep.subr.mxu0 0.0
    %4264 = vmatpush1.msra.mxu0 0.0
    %4265 = vmatprep.subr.mxu0 0.0
    %4266 = vmatpush1.msra.mxu0 0.0
    %4267 = vmatprep.subr.mxu0 0.0
    %4268 = vmatpush1.msra.mxu0 0.0
    %4269 = vmatprep.subr.mxu0 0.0
    %4270 = vmatpush1.msra.mxu0 0.0
    %4271 = vmatprep.subr.mxu0 0.0
    %4272 = vmatpush1.msra.mxu0 0.0
    %4273 = vmatprep.subr.mxu0 0.0
    %4274 = vmatpush1.msra.mxu0 0.0
    %4275 = vmatprep.subr.mxu0 0.0
    %4276 = vmatpush1.msra.mxu0 0.0
    %4277 = vmatprep.subr.mxu0 0.0
    %4278 = vmatpush1.msra.mxu0 0.0
    %4279 = vmatprep.subr.mxu0 0.0
    %4280 = vmatpush1.msra.mxu0 0.0
    %4281 = vmatprep.subr.mxu0 0.0
    %v4282 = vand.u32 %v311, 4294901760
    %v4283 = vsub.f32 %v311, %v4282
    %4284 = vmatpush1.msra.mxu0 %v4283
    %4285 = vmatprep.subr.mxu0 0.0
    %v4286 = vand.u32 %v219, 4294901760
    %v4287 = vsub.f32 %v219, %v4286
    %4288 = vmatpush1.msra.mxu0 %v4287
    %4289 = vmatprep.subr.mxu0 0.0
    %4290 = vmatpush2.msra.mxu0 0.0
    %4291 = vmatprep.subr.mxu0 0.0
    %4292 = vmatpush2.msra.mxu0 0.0
    %4293 = vmatprep.subr.mxu0 0.0
    %4294 = vmatpush2.msra.mxu0 0.0
    %4295 = vmatprep.subr.mxu0 0.0
    %4296 = vmatpush2.msra.mxu0 0.0
    %4297 = vmatprep.subr.mxu0 0.0
    %4298 = vmatpush2.msra.mxu0 0.0
    %4299 = vmatprep.subr.mxu0 0.0
    %4300 = vmatpush2.msra.mxu0 0.0
    %4301 = vmatprep.subr.mxu0 0.0
    %4302 = vmatpush2.msra.mxu0 0.0
    %4303 = vmatprep.subr.mxu0 0.0
    %4304 = vmatpush2.msra.mxu0 0.0
    %4305 = vmatprep.subr.mxu0 0.0
    %4306 = vmatpush2.msra.mxu0 0.0
    %4307 = vmatprep.subr.mxu0 0.0
    %4308 = vmatpush2.msra.mxu0 0.0
    %4309 = vmatprep.subr.mxu0 0.0
    %4310 = vmatpush2.msra.mxu0 0.0
    %4311 = vmatprep.subr.mxu0 0.0
    %4312 = vmatpush2.msra.mxu0 0.0
    %4313 = vmatprep.subr.mxu0 0.0
    %4314 = vmatpush2.msra.mxu0 0.0
    %4315 = vmatprep.subr.mxu0 0.0
    %4316 = vmatpush2.msra.mxu0 0.0
    %4317 = vmatprep.subr.mxu0 0.0
    %4318 = vmatpush2.msra.mxu0 0.0
    %4319 = vmatprep.subr.mxu0 0.0
    %4320 = vmatpush2.msra.mxu0 0.0
    %4321 = vmatprep.mubr.f32.mxu0 0.0
    %v4322 = vand.u32 %v4093, 4294901760
    %v4323 = vsub.f32 %v4093, %v4322
    %4324 = vmatmul.mubr.f32.gmra.mxu0 %v4323
    %v4325 = vpop.f32.mrf.mxu0
    %v4326 = vadd.f32 %v4250, %v4325
    %v4327 = vpop.f32.mrf.mxu0
    %4328 = vdwg.mxu0
    %4329 = vmatprep.subr.mxu0 0.0
    %4330 = vmatpush1.msra.mxu0 0.0
    %4331 = vmatprep.subr.mxu0 0.0
    %4332 = vmatpush1.msra.mxu0 0.0
    %4333 = vmatprep.subr.mxu0 0.0
    %4334 = vmatpush1.msra.mxu0 0.0
    %4335 = vmatprep.subr.mxu0 0.0
    %4336 = vmatpush1.msra.mxu0 0.0
    %4337 = vmatprep.subr.mxu0 0.0
    %4338 = vmatpush1.msra.mxu0 0.0
    %4339 = vmatprep.subr.mxu0 0.0
    %4340 = vmatpush1.msra.mxu0 0.0
    %4341 = vmatprep.subr.mxu0 0.0
    %4342 = vmatpush1.msra.mxu0 0.0
    %4343 = vmatprep.subr.mxu0 0.0
    %4344 = vmatpush1.msra.mxu0 0.0
    %4345 = vmatprep.subr.mxu0 0.0
    %4346 = vmatpush1.msra.mxu0 0.0
    %4347 = vmatprep.subr.mxu0 0.0
    %4348 = vmatpush1.msra.mxu0 0.0
    %4349 = vmatprep.subr.mxu0 0.0
    %4350 = vmatpush1.msra.mxu0 0.0
    %4351 = vmatprep.subr.mxu0 0.0
    %4352 = vmatpush1.msra.mxu0 0.0
    %4353 = vmatprep.subr.mxu0 0.0
    %4354 = vmatpush1.msra.mxu0 0.0
    %4355 = vmatprep.subr.mxu0 0.0
    %4356 = vmatpush1.msra.mxu0 0.0
    %4357 = vmatprep.subr.mxu0 0.0
    %v4358 = vand.u32 %v311, 4294901760
    %4359 = vmatpush1.msra.mxu0 %v4358
    %4360 = vmatprep.subr.mxu0 0.0
    %v4361 = vand.u32 %v219, 4294901760
    %4362 = vmatpush1.msra.mxu0 %v4361
    %4363 = vmatprep.subr.mxu0 0.0
    %4364 = vmatpush2.msra.mxu0 0.0
    %4365 = vmatprep.subr.mxu0 0.0
    %4366 = vmatpush2.msra.mxu0 0.0
    %4367 = vmatprep.subr.mxu0 0.0
    %4368 = vmatpush2.msra.mxu0 0.0
    %4369 = vmatprep.subr.mxu0 0.0
    %4370 = vmatpush2.msra.mxu0 0.0
    %4371 = vmatprep.subr.mxu0 0.0
    %4372 = vmatpush2.msra.mxu0 0.0
    %4373 = vmatprep.subr.mxu0 0.0
    %4374 = vmatpush2.msra.mxu0 0.0
    %4375 = vmatprep.subr.mxu0 0.0
    %4376 = vmatpush2.msra.mxu0 0.0
    %4377 = vmatprep.subr.mxu0 0.0
    %4378 = vmatpush2.msra.mxu0 0.0
    %4379 = vmatprep.subr.mxu0 0.0
    %4380 = vmatpush2.msra.mxu0 0.0
    %4381 = vmatprep.subr.mxu0 0.0
    %4382 = vmatpush2.msra.mxu0 0.0
    %4383 = vmatprep.subr.mxu0 0.0
    %4384 = vmatpush2.msra.mxu0 0.0
    %4385 = vmatprep.subr.mxu0 0.0
    %4386 = vmatpush2.msra.mxu0 0.0
    %4387 = vmatprep.subr.mxu0 0.0
    %4388 = vmatpush2.msra.mxu0 0.0
    %4389 = vmatprep.subr.mxu0 0.0
    %4390 = vmatpush2.msra.mxu0 0.0
    %4391 = vmatprep.subr.mxu0 0.0
    %4392 = vmatpush2.msra.mxu0 0.0
    %4393 = vmatprep.subr.mxu0 0.0
    %4394 = vmatpush2.msra.mxu0 0.0
    %4395 = vmatprep.mubr.f32.mxu0 0.0
    %v4396 = vand.u32 %v4093, 4294901760
    %v4397 = vsub.f32 %v4093, %v4396
    %v4398 = vand.u32 %v4397, 4294901760
    %4399 = vmatmul.mubr.f32.gmra.mxu0 %v4398
    %v4400 = vpop.f32.mrf.mxu0
    %v4401 = vadd.f32 %v4326, %v4400
    %v4402 = vpop.f32.mrf.mxu0
    %4403 = vdwg.mxu0
    %4404 = vmatprep.subr.mxu0 0.0
    %4405 = vmatpush1.msra.mxu0 0.0
    %4406 = vmatprep.subr.mxu0 0.0
    %4407 = vmatpush1.msra.mxu0 0.0
    %4408 = vmatprep.subr.mxu0 0.0
    %4409 = vmatpush1.msra.mxu0 0.0
    %4410 = vmatprep.subr.mxu0 0.0
    %4411 = vmatpush1.msra.mxu0 0.0
    %4412 = vmatprep.subr.mxu0 0.0
    %4413 = vmatpush1.msra.mxu0 0.0
    %4414 = vmatprep.subr.mxu0 0.0
    %4415 = vmatpush1.msra.mxu0 0.0
    %4416 = vmatprep.subr.mxu0 0.0
    %4417 = vmatpush1.msra.mxu0 0.0
    %4418 = vmatprep.subr.mxu0 0.0
    %4419 = vmatpush1.msra.mxu0 0.0
    %4420 = vmatprep.subr.mxu0 0.0
    %4421 = vmatpush1.msra.mxu0 0.0
    %4422 = vmatprep.subr.mxu0 0.0
    %4423 = vmatpush1.msra.mxu0 0.0
    %4424 = vmatprep.subr.mxu0 0.0
    %4425 = vmatpush1.msra.mxu0 0.0
    %4426 = vmatprep.subr.mxu0 0.0
    %4427 = vmatpush1.msra.mxu0 0.0
    %4428 = vmatprep.subr.mxu0 0.0
    %4429 = vmatpush1.msra.mxu0 0.0
    %4430 = vmatprep.subr.mxu0 0.0
    %4431 = vmatpush1.msra.mxu0 0.0
    %4432 = vmatprep.subr.mxu0 0.0
    %v4433 = vand.u32 %v311, 4294901760
    %v4434 = vsub.f32 %v311, %v4433
    %v4435 = vand.u32 %v4434, 4294901760
    %4436 = vmatpush1.msra.mxu0 %v4435
    %4437 = vmatprep.subr.mxu0 0.0
    %v4438 = vand.u32 %v219, 4294901760
    %v4439 = vsub.f32 %v219, %v4438
    %v4440 = vand.u32 %v4439, 4294901760
    %4441 = vmatpush1.msra.mxu0 %v4440
    %4442 = vmatprep.subr.mxu0 0.0
    %4443 = vmatpush2.msra.mxu0 0.0
    %4444 = vmatprep.subr.mxu0 0.0
    %4445 = vmatpush2.msra.mxu0 0.0
    %4446 = vmatprep.subr.mxu0 0.0
    %4447 = vmatpush2.msra.mxu0 0.0
    %4448 = vmatprep.subr.mxu0 0.0
    %4449 = vmatpush2.msra.mxu0 0.0
    %4450 = vmatprep.subr.mxu0 0.0
    %4451 = vmatpush2.msra.mxu0 0.0
    %4452 = vmatprep.subr.mxu0 0.0
    %4453 = vmatpush2.msra.mxu0 0.0
    %4454 = vmatprep.subr.mxu0 0.0
    %4455 = vmatpush2.msra.mxu0 0.0
    %4456 = vmatprep.subr.mxu0 0.0
    %4457 = vmatpush2.msra.mxu0 0.0
    %4458 = vmatprep.subr.mxu0 0.0
    %4459 = vmatpush2.msra.mxu0 0.0
    %4460 = vmatprep.subr.mxu0 0.0
    %4461 = vmatpush2.msra.mxu0 0.0
    %4462 = vmatprep.subr.mxu0 0.0
    %4463 = vmatpush2.msra.mxu0 0.0
    %4464 = vmatprep.subr.mxu0 0.0
    %4465 = vmatpush2.msra.mxu0 0.0
    %4466 = vmatprep.subr.mxu0 0.0
    %4467 = vmatpush2.msra.mxu0 0.0
    %4468 = vmatprep.subr.mxu0 0.0
    %4469 = vmatpush2.msra.mxu0 0.0
    %4470 = vmatprep.subr.mxu0 0.0
    %4471 = vmatpush2.msra.mxu0 0.0
    %4472 = vmatprep.subr.mxu0 0.0
    %4473 = vmatpush2.msra.mxu0 0.0
    %4474 = vmatprep.mubr.f32.mxu0 0.0
    %v4475 = vand.u32 %v4093, 4294901760
    %4476 = vmatmul.mubr.f32.gmra.mxu0 %v4475
    %v4477 = vpop.f32.mrf.mxu0
    %v4478 = vadd.f32 %v4401, %v4477
    %v4479 = vpop.f32.mrf.mxu0
    %4480 = vdwg.mxu0
    %4481 = vmatprep.subr.mxu0 0.0
    %4482 = vmatpush1.msra.mxu0 0.0
    %4483 = vmatprep.subr.mxu0 0.0
    %4484 = vmatpush1.msra.mxu0 0.0
    %4485 = vmatprep.subr.mxu0 0.0
    %4486 = vmatpush1.msra.mxu0 0.0
    %4487 = vmatprep.subr.mxu0 0.0
    %4488 = vmatpush1.msra.mxu0 0.0
    %4489 = vmatprep.subr.mxu0 0.0
    %4490 = vmatpush1.msra.mxu0 0.0
    %4491 = vmatprep.subr.mxu0 0.0
    %4492 = vmatpush1.msra.mxu0 0.0
    %4493 = vmatprep.subr.mxu0 0.0
    %4494 = vmatpush1.msra.mxu0 0.0
    %4495 = vmatprep.subr.mxu0 0.0
    %4496 = vmatpush1.msra.mxu0 0.0
    %4497 = vmatprep.subr.mxu0 0.0
    %4498 = vmatpush1.msra.mxu0 0.0
    %4499 = vmatprep.subr.mxu0 0.0
    %4500 = vmatpush1.msra.mxu0 0.0
    %4501 = vmatprep.subr.mxu0 0.0
    %4502 = vmatpush1.msra.mxu0 0.0
    %4503 = vmatprep.subr.mxu0 0.0
    %4504 = vmatpush1.msra.mxu0 0.0
    %4505 = vmatprep.subr.mxu0 0.0
    %4506 = vmatpush1.msra.mxu0 0.0
    %4507 = vmatprep.subr.mxu0 0.0
    %4508 = vmatpush1.msra.mxu0 0.0
    %4509 = vmatprep.subr.mxu0 0.0
    %v4510 = vand.u32 %v311, 4294901760
    %4511 = vmatpush1.msra.mxu0 %v4510
    %4512 = vmatprep.subr.mxu0 0.0
    %v4513 = vand.u32 %v219, 4294901760
    %4514 = vmatpush1.msra.mxu0 %v4513
    %4515 = vmatprep.subr.mxu0 0.0
    %4516 = vmatpush2.msra.mxu0 0.0
    %4517 = vmatprep.subr.mxu0 0.0
    %4518 = vmatpush2.msra.mxu0 0.0
    %4519 = vmatprep.subr.mxu0 0.0
    %4520 = vmatpush2.msra.mxu0 0.0
    %4521 = vmatprep.subr.mxu0 0.0
    %4522 = vmatpush2.msra.mxu0 0.0
    %4523 = vmatprep.subr.mxu0 0.0
    %4524 = vmatpush2.msra.mxu0 0.0
    %4525 = vmatprep.subr.mxu0 0.0
    %4526 = vmatpush2.msra.mxu0 0.0
    %4527 = vmatprep.subr.mxu0 0.0
    %4528 = vmatpush2.msra.mxu0 0.0
    %4529 = vmatprep.subr.mxu0 0.0
    %4530 = vmatpush2.msra.mxu0 0.0
    %4531 = vmatprep.subr.mxu0 0.0
    %4532 = vmatpush2.msra.mxu0 0.0
    %4533 = vmatprep.subr.mxu0 0.0
    %4534 = vmatpush2.msra.mxu0 0.0
    %4535 = vmatprep.subr.mxu0 0.0
    %4536 = vmatpush2.msra.mxu0 0.0
    %4537 = vmatprep.subr.mxu0 0.0
    %4538 = vmatpush2.msra.mxu0 0.0
    %4539 = vmatprep.subr.mxu0 0.0
    %4540 = vmatpush2.msra.mxu0 0.0
    %4541 = vmatprep.subr.mxu0 0.0
    %4542 = vmatpush2.msra.mxu0 0.0
    %4543 = vmatprep.subr.mxu0 0.0
    %4544 = vmatpush2.msra.mxu0 0.0
    %4545 = vmatprep.subr.mxu0 0.0
    %4546 = vmatpush2.msra.mxu0 0.0
    %4547 = vmatprep.mubr.f32.mxu0 0.0
    %v4548 = vand.u32 %v4093, 4294901760
    %4549 = vmatmul.mubr.f32.gmra.mxu0 %v4548
    %v4550 = vpop.f32.mrf.mxu0
    %v4551 = vadd.f32 %v4478, %v4550
    %v4552 = vpop.f32.mrf.mxu0
    %4553 = vdwg.mxu0
    %v4555 = vcombine.high %v4551, %v4551
    %v4557 = vunpack.c.l.s4 1966171168
    %v4558 = vunpack.c.0.s8 %v4557
    %v4559 = vlaneseq
    %v4560 = vshrl.u32 %v4559, 7
    %v4561 = vsub.s32 %v4558, %v4560
    %v4562 = vrot.slane %v4551, %v4561
    %v4564 = vunpack.c.l.s4 1966171168
    %v4565 = vunpack.c.0.s8 %v4564
    %v4566 = vlaneseq
    %v4567 = vshrl.u32 %v4566, 7
    %v4568 = vsub.s32 %v4565, %v4567
    %v4569 = vrot.slane %v4555, %v4568
    %v4570 = vcombine.high %v4562, %v4562
    %v4571 = vcombine.high %v4569, %v4569
    %v4573 = vunpack.c.l.s4 1966171168
    %v4574 = vunpack.c.0.s8 %v4573
    %v4575 = vlaneseq
    %v4576 = vshrl.u32 %v4575, 7
    %v4577 = vsub.s32 %v4574, %v4576
    %v4578 = vrot.slane %v4562, %v4577
    %v4580 = vunpack.c.l.s4 1966171168
    %v4581 = vunpack.c.0.s8 %v4580
    %v4582 = vlaneseq
    %v4583 = vshrl.u32 %v4582, 7
    %v4584 = vsub.s32 %v4581, %v4583
    %v4585 = vrot.slane %v4569, %v4584
    %v4587 = vunpack.c.l.s4 1966171168
    %v4588 = vunpack.c.0.s8 %v4587
    %v4589 = vlaneseq
    %v4590 = vshrl.u32 %v4589, 7
    %v4591 = vsub.s32 %v4588, %v4590
    %v4592 = vrot.slane %v4570, %v4591
    %v4594 = vunpack.c.l.s4 1966171168
    %v4595 = vunpack.c.0.s8 %v4594
    %v4596 = vlaneseq
    %v4597 = vshrl.u32 %v4596, 7
    %v4598 = vsub.s32 %v4595, %v4597
    %v4599 = vrot.slane %v4571, %v4598
    %v4600 = vcombine.high %v4578, %v4578
    %v4601 = vcombine.high %v4585, %v4585
    %v4602 = vcombine.high %v4592, %v4592
    %v4603 = vcombine.high %v4599, %v4599
    %v4604 = vlaneseq
    %v4605 = vshrl.u32 %v4604, 7
    %v4606 = vsub.s32 0, %v4605
    %v4607 = vrot.slane %v1329, %v4606
    %v4608 = vlaneseq
    %v4609 = vshrl.u32 %v4608, 7
    %v4610 = vsub.s32 0, %v4609
    %v4611 = vrot.slane %v1343, %v4610
    %v4612 = vlaneseq
    %v4613 = vshrl.u32 %v4612, 7
    %v4614 = vsub.s32 0, %v4613
    %v4615 = vrot.slane %v1351, %v4614
    %v4616 = vlaneseq
    %v4617 = vshrl.u32 %v4616, 7
    %v4618 = vsub.s32 0, %v4617
    %v4619 = vrot.slane %v1353, %v4618
    %v4620 = vlaneseq
    %v4621 = vshrl.u32 %v4620, 7
    %v4622 = vsub.s32 0, %v4621
    %v4623 = vrot.slane %v1336, %v4622
    %v4624 = vlaneseq
    %v4625 = vshrl.u32 %v4624, 7
    %v4626 = vsub.s32 0, %v4625
    %v4627 = vrot.slane %v1350, %v4626
    %v4628 = vlaneseq
    %v4629 = vshrl.u32 %v4628, 7
    %v4630 = vsub.s32 0, %v4629
    %v4631 = vrot.slane %v1352, %v4630
    %v4632 = vlaneseq
    %v4633 = vshrl.u32 %v4632, 7
    %v4634 = vsub.s32 0, %v4633
    %v4635 = vrot.slane %v1354, %v4634
    %v4644 = vlaneseq
    %v4645 = vshrl.u32 %v4644, 7
    %v4646 = vsub.s32 0, %v4645
    %v4647 = vrot.slane %v1854, %v4646
    %v4648 = vlaneseq
    %v4649 = vshrl.u32 %v4648, 7
    %v4650 = vsub.s32 0, %v4649
    %v4651 = vrot.slane %v1868, %v4650
    %v4652 = vlaneseq
    %v4653 = vshrl.u32 %v4652, 7
    %v4654 = vsub.s32 0, %v4653
    %v4655 = vrot.slane %v1876, %v4654
    %v4656 = vlaneseq
    %v4657 = vshrl.u32 %v4656, 7
    %v4658 = vsub.s32 0, %v4657
    %v4659 = vrot.slane %v1878, %v4658
    %v4660 = vlaneseq
    %v4661 = vshrl.u32 %v4660, 7
    %v4662 = vsub.s32 0, %v4661
    %v4663 = vrot.slane %v1861, %v4662
    %v4664 = vlaneseq
    %v4665 = vshrl.u32 %v4664, 7
    %v4666 = vsub.s32 0, %v4665
    %v4667 = vrot.slane %v1875, %v4666
    %v4668 = vlaneseq
    %v4669 = vshrl.u32 %v4668, 7
    %v4670 = vsub.s32 0, %v4669
    %v4671 = vrot.slane %v1877, %v4670
    %v4672 = vlaneseq
    %v4673 = vshrl.u32 %v4672, 7
    %v4674 = vsub.s32 0, %v4673
    %v4675 = vrot.slane %v1879, %v4674
    %v4684 = vlaneseq
    %v4685 = vshrl.u32 %v4684, 7
    %v4686 = vsub.s32 0, %v4685
    %v4687 = vrot.slane %v2419, %v4686
    %v4688 = vlaneseq
    %v4689 = vshrl.u32 %v4688, 7
    %v4690 = vsub.s32 0, %v4689
    %v4691 = vrot.slane %v2433, %v4690
    %v4692 = vlaneseq
    %v4693 = vshrl.u32 %v4692, 7
    %v4694 = vsub.s32 0, %v4693
    %v4695 = vrot.slane %v2441, %v4694
    %v4696 = vlaneseq
    %v4697 = vshrl.u32 %v4696, 7
    %v4698 = vsub.s32 0, %v4697
    %v4699 = vrot.slane %v2443, %v4698
    %v4700 = vlaneseq
    %v4701 = vshrl.u32 %v4700, 7
    %v4702 = vsub.s32 0, %v4701
    %v4703 = vrot.slane %v2426, %v4702
    %v4704 = vlaneseq
    %v4705 = vshrl.u32 %v4704, 7
    %v4706 = vsub.s32 0, %v4705
    %v4707 = vrot.slane %v2440, %v4706
    %v4708 = vlaneseq
    %v4709 = vshrl.u32 %v4708, 7
    %v4710 = vsub.s32 0, %v4709
    %v4711 = vrot.slane %v2442, %v4710
    %v4712 = vlaneseq
    %v4713 = vshrl.u32 %v4712, 7
    %v4714 = vsub.s32 0, %v4713
    %v4715 = vrot.slane %v2444, %v4714
    %v4724 = vlaneseq
    %v4725 = vshrl.u32 %v4724, 7
    %v4726 = vsub.s32 0, %v4725
    %v4727 = vrot.slane %v2984, %v4726
    %v4728 = vlaneseq
    %v4729 = vshrl.u32 %v4728, 7
    %v4730 = vsub.s32 0, %v4729
    %v4731 = vrot.slane %v2998, %v4730
    %v4732 = vlaneseq
    %v4733 = vshrl.u32 %v4732, 7
    %v4734 = vsub.s32 0, %v4733
    %v4735 = vrot.slane %v3006, %v4734
    %v4736 = vlaneseq
    %v4737 = vshrl.u32 %v4736, 7
    %v4738 = vsub.s32 0, %v4737
    %v4739 = vrot.slane %v3008, %v4738
    %v4740 = vlaneseq
    %v4741 = vshrl.u32 %v4740, 7
    %v4742 = vsub.s32 0, %v4741
    %v4743 = vrot.slane %v2991, %v4742
    %v4744 = vlaneseq
    %v4745 = vshrl.u32 %v4744, 7
    %v4746 = vsub.s32 0, %v4745
    %v4747 = vrot.slane %v3005, %v4746
    %v4748 = vlaneseq
    %v4749 = vshrl.u32 %v4748, 7
    %v4750 = vsub.s32 0, %v4749
    %v4751 = vrot.slane %v3007, %v4750
    %v4752 = vlaneseq
    %v4753 = vshrl.u32 %v4752, 7
    %v4754 = vsub.s32 0, %v4753
    %v4755 = vrot.slane %v3009, %v4754
    %v4764 = vlaneseq
    %v4765 = vshrl.u32 %v4764, 7
    %v4766 = vsub.s32 0, %v4765
    %v4767 = vrot.slane %v3509, %v4766
    %v4768 = vlaneseq
    %v4769 = vshrl.u32 %v4768, 7
    %v4770 = vsub.s32 0, %v4769
    %v4771 = vrot.slane %v3523, %v4770
    %v4772 = vlaneseq
    %v4773 = vshrl.u32 %v4772, 7
    %v4774 = vsub.s32 0, %v4773
    %v4775 = vrot.slane %v3531, %v4774
    %v4776 = vlaneseq
    %v4777 = vshrl.u32 %v4776, 7
    %v4778 = vsub.s32 0, %v4777
    %v4779 = vrot.slane %v3533, %v4778
    %v4780 = vlaneseq
    %v4781 = vshrl.u32 %v4780, 7
    %v4782 = vsub.s32 0, %v4781
    %v4783 = vrot.slane %v3516, %v4782
    %v4784 = vlaneseq
    %v4785 = vshrl.u32 %v4784, 7
    %v4786 = vsub.s32 0, %v4785
    %v4787 = vrot.slane %v3530, %v4786
    %v4788 = vlaneseq
    %v4789 = vshrl.u32 %v4788, 7
    %v4790 = vsub.s32 0, %v4789
    %v4791 = vrot.slane %v3532, %v4790
    %v4792 = vlaneseq
    %v4793 = vshrl.u32 %v4792, 7
    %v4794 = vsub.s32 0, %v4793
    %v4795 = vrot.slane %v3534, %v4794
    %v4804 = vlaneseq
    %v4805 = vshrl.u32 %v4804, 7
    %v4806 = vsub.s32 0, %v4805
    %v4807 = vrot.slane %v4034, %v4806
    %v4808 = vlaneseq
    %v4809 = vshrl.u32 %v4808, 7
    %v4810 = vsub.s32 0, %v4809
    %v4811 = vrot.slane %v4048, %v4810
    %v4812 = vlaneseq
    %v4813 = vshrl.u32 %v4812, 7
    %v4814 = vsub.s32 0, %v4813
    %v4815 = vrot.slane %v4056, %v4814
    %v4816 = vlaneseq
    %v4817 = vshrl.u32 %v4816, 7
    %v4818 = vsub.s32 0, %v4817
    %v4819 = vrot.slane %v4058, %v4818
    %v4820 = vlaneseq
    %v4821 = vshrl.u32 %v4820, 7
    %v4822 = vsub.s32 0, %v4821
    %v4823 = vrot.slane %v4041, %v4822
    %v4824 = vlaneseq
    %v4825 = vshrl.u32 %v4824, 7
    %v4826 = vsub.s32 0, %v4825
    %v4827 = vrot.slane %v4055, %v4826
    %v4828 = vlaneseq
    %v4829 = vshrl.u32 %v4828, 7
    %v4830 = vsub.s32 0, %v4829
    %v4831 = vrot.slane %v4057, %v4830
    %v4832 = vlaneseq
    %v4833 = vshrl.u32 %v4832, 7
    %v4834 = vsub.s32 0, %v4833
    %v4835 = vrot.slane %v4059, %v4834
    %v4844 = vlaneseq
    %v4845 = vshrl.u32 %v4844, 7
    %v4846 = vsub.s32 0, %v4845
    %v4847 = vrot.slane %v4578, %v4846
    %v4848 = vlaneseq
    %v4849 = vshrl.u32 %v4848, 7
    %v4850 = vsub.s32 0, %v4849
    %v4851 = vrot.slane %v4592, %v4850
    %v4852 = vlaneseq
    %v4853 = vshrl.u32 %v4852, 7
    %v4854 = vsub.s32 0, %v4853
    %v4855 = vrot.slane %v4600, %v4854
    %v4856 = vlaneseq
    %v4857 = vshrl.u32 %v4856, 7
    %v4858 = vsub.s32 0, %v4857
    %v4859 = vrot.slane %v4602, %v4858
    %v4860 = vlaneseq
    %v4861 = vshrl.u32 %v4860, 7
    %v4862 = vsub.s32 0, %v4861
    %v4863 = vrot.slane %v4585, %v4862
    %v4864 = vlaneseq
    %v4865 = vshrl.u32 %v4864, 7
    %v4866 = vsub.s32 0, %v4865
    %v4867 = vrot.slane %v4599, %v4866
    %v4868 = vlaneseq
    %v4869 = vshrl.u32 %v4868, 7
    %v4870 = vsub.s32 0, %v4869
    %v4871 = vrot.slane %v4601, %v4870
    %v4872 = vlaneseq
    %v4873 = vshrl.u32 %v4872, 7
    %v4874 = vsub.s32 0, %v4873
    %v4875 = vrot.slane %v4603, %v4874
    %vm4884 = vcmask 1040384
    %v4885 = vsel %vm4884, %v796, %v4607
    %v4886 = vsel %vm4884, %v810, %v4611
    %v4887 = vsel %vm4884, %v818, %v4615
    %v4888 = vsel %vm4884, %v820, %v4619
    %v4889 = vsel %vm4884, %v803, %v4623
    %v4890 = vsel %vm4884, %v817, %v4627
    %v4891 = vsel %vm4884, %v819, %v4631
    %v4892 = vsel %vm4884, %v821, %v4635
    %vm4893 = vcmask 1041408
    %v4894 = vsel %vm4893, %v4885, %v4647
    %v4895 = vsel %vm4893, %v4886, %v4651
    %v4896 = vsel %vm4893, %v4887, %v4655
    %v4897 = vsel %vm4893, %v4888, %v4659
    %v4898 = vsel %vm4893, %v4889, %v4663
    %v4899 = vsel %vm4893, %v4890, %v4667
    %v4900 = vsel %vm4893, %v4891, %v4671
    %v4901 = vsel %vm4893, %v4892, %v4675
    %vm4902 = vcmask 1042432
    %v4903 = vsel %vm4902, %v4894, %v4687
    %v4904 = vsel %vm4902, %v4895, %v4691
    %v4905 = vsel %vm4902, %v4896, %v4695
    %v4906 = vsel %vm4902, %v4897, %v4699
    %v4907 = vsel %vm4902, %v4898, %v4703
    %v4908 = vsel %vm4902, %v4899, %v4707
    %v4909 = vsel %vm4902, %v4900, %v4711
    %v4910 = vsel %vm4902, %v4901, %v4715
    %vm4911 = vcmask 1043456
    %v4912 = vsel %vm4911, %v4903, %v4727
    %v4913 = vsel %vm4911, %v4904, %v4731
    %v4914 = vsel %vm4911, %v4905, %v4735
    %v4915 = vsel %vm4911, %v4906, %v4739
    %v4916 = vsel %vm4911, %v4907, %v4743
    %v4917 = vsel %vm4911, %v4908, %v4747
    %v4918 = vsel %vm4911, %v4909, %v4751
    %v4919 = vsel %vm4911, %v4910, %v4755
    %vm4920 = vcmask 1044480
    %v4921 = vsel %vm4920, %v4912, %v4767
    %v4922 = vsel %vm4920, %v4913, %v4771
    %v4923 = vsel %vm4920, %v4914, %v4775
    %v4924 = vsel %vm4920, %v4915, %v4779
    %v4925 = vsel %vm4920, %v4916, %v4783
    %v4926 = vsel %vm4920, %v4917, %v4787
    %v4927 = vsel %vm4920, %v4918, %v4791
    %v4928 = vsel %vm4920, %v4919, %v4795
    %vm4929 = vcmask 1045504
    %v4930 = vsel %vm4929, %v4921, %v4807
    %v4931 = vsel %vm4929, %v4922, %v4811
    %v4932 = vsel %vm4929, %v4923, %v4815
    %v4933 = vsel %vm4929, %v4924, %v4819
    %v4934 = vsel %vm4929, %v4925, %v4823
    %v4935 = vsel %vm4929, %v4926, %v4827
    %v4936 = vsel %vm4929, %v4927, %v4831
    %v4937 = vsel %vm4929, %v4928, %v4835
    %v4938 = vsel %vm309, %v4930, %v4847
    %v4939 = vsel %vm309, %v4931, %v4851
    %v4940 = vsel %vm309, %v4932, %v4855
    %v4941 = vsel %vm309, %v4933, %v4859
    %v4942 = vsel %vm309, %v4934, %v4863
    %v4943 = vsel %vm309, %v4935, %v4867
    %v4944 = vsel %vm309, %v4936, %v4871
    %v4945 = vsel %vm309, %v4937, %v4875
    %vm4946 = vcmask 64512
    %4947 = vst.msk [vmem:[#allocation5] sm:$0xff] %vm4946, %v4938
    %4948 = vst.msk [vmem:[#allocation5 + $0x8] sm:$0xff] %vm4946, %v4939
    %4949 = vst.msk [vmem:[#allocation5 + $0x10] sm:$0xff] %vm4946, %v4940
    %4950 = vst.msk [vmem:[#allocation5 + $0x18] sm:$0xff] %vm4946, %v4941
    %4951 = vst.msk [vmem:[#allocation5 + $0x20] sm:$0xff] %vm4946, %v4942
    %4952 = vst.msk [vmem:[#allocation5 + $0x28] sm:$0xff] %vm4946, %v4943
    %4953 = vst.msk [vmem:[#allocation5 + $0x30] sm:$0xff] %vm4946, %v4944
    %4954 = vst.msk [vmem:[#allocation5 + $0x38] sm:$0xff] %vm4946, %v4945
    // Predicated region
    $region10: #{tpu_custom_call.1} parent=1 // pred_check
      _
    $region11: #{tpu_custom_call.1} parent=1 // pred_check_branch
      %4956 = sbr.rel (0) target = $region13
    $region12: #{tpu_custom_call.1} parent=1 // pred_region
      %s4958 = ssub.s32 1024, 1024
      %4959 = vsyncadd [#allocation4], %s4958
      %s4960 = sshll.u32 [#allocation5], 4
      %s4961 = int_to_ptr.vmem [resolvable:$true] %s4960
      %4966 = dma.vmem_to_hbm [thread:$0]  %s4961, 1024, %s1, [#allocation4], 128, 128, 8
    $region13: #{tpu_custom_call.1} parent=1 // pred_fallthru
      _
    // Predicated region
    $region14: #{tpu_custom_call.1} parent=1 // pred_check
      _
    $region15: #{tpu_custom_call.1} parent=1 // pred_check_branch
      %4968 = sbr.rel (0) target = $region17
    $region16: #{tpu_custom_call.1} parent=1 // pred_region
      %4969 = dma.done [#allocation4], 1024
    $region17: #{tpu_custom_call.1} parent=1 // pred_fallthru
      _
    %4970 = vsyncpa [#allocation3], 1
    %4971 = vsyncpa [#allocation4], 1

</llo_original>
